<compile_context>
chip_gen: v6e
topology: v6e:2x2x1
jax: 0.10.0
libtpu: 0.0.40
codegen_flags: <defaults>
</compile_context>

<pallas_src>
import numpy as np
import jax
import jax.numpy as jnp
from jax import lax
from jax.experimental import pallas as pl
from jax.experimental.pallas import tpu as pltpu

IMAGE_EMBED_DIM = 512
CONV_IN = 5
CONV_OUT = 64
KSIZE = 3
POOL_OUT = 16
FEAT = CONV_OUT * POOL_OUT          # 1024 == 2 * IMAGE_EMBED_DIM
BN_EPS = 1e-5


def _round_up(x, m):
    return ((x + m - 1) // m) * m


# ---------------------------------------------------------------- kernel ----
def _fused_kernel(x_ref, pb_ref, wb_ref, cb_ref, g_ref, beta_ref,
                  w1_ref, b1_ref, w2_ref, b2_ref, o_ref, feat_ref):
    """Grid: (B // Bt,) batch tiles, 'arbitrary' (scratch carried across steps).

    x_ref   : (Bt, K1p)    flattened, zero-padded conv input for this tile
    pb_ref  : (K1p, K2p)   block-diagonal pool matrix (pool folded before conv)
    wb_ref  : (K2p, 1024)  conv weights expanded so feat comes out pre-flattened
    cb_ref  : (1, 1024)    conv bias broadcast over the 16 pooled positions
    g/beta  : (1, 1024)    BatchNorm affine parameters
    w1/b1   : (1024, 512) / (1, 512)   Linear 1 (weights possibly bf16)
    w2/b2   : (512, 512)  / (1, 512)   Linear 2 (weights possibly bf16)
    o_ref   : (B, 512)     output, written once on the last grid step
    feat_ref: (B, 1024)    VMEM scratch with the flattened pooled features
    """
    b = pl.program_id(0)
    bt = x_ref.shape[0]

    # --- Conv1d(5,64,k=3,pad=1) + AdaptiveAvgPool1d(16), reassociated --------
    s = jnp.dot(x_ref[...], pb_ref[...],
                preferred_element_type=jnp.float32)            # (Bt, K2p)
    feat = jnp.dot(s, wb_ref[...],
                   preferred_element_type=jnp.float32)         # (Bt, 1024)
    feat_ref[pl.ds(b * bt, bt), :] = feat + cb_ref[...]

    # --- BN(train) + ReLU + Linear + ReLU + Linear on the full batch ---------
    @pl.when(b == pl.num_programs(0) - 1)
    def _():
        f = feat_ref[...]                                      # (B, 1024) f32
        mean = jnp.mean(f, axis=0, keepdims=True)
        var = jnp.mean((f - mean) * (f - mean), axis=0, keepdims=True)
        h = (f - mean) * lax.rsqrt(var + BN_EPS)               # biased stats
        h = h * g_ref[...] + beta_ref[...]
        h = jnp.maximum(h, 0.0)
        h = jnp.dot(h.astype(w1_ref.dtype), w1_ref[...],
                    preferred_element_type=jnp.float32) + b1_ref[...]
        h = jnp.maximum(h, 0.0)
        h = jnp.dot(h.astype(w2_ref.dtype), w2_ref[...],
                    preferred_element_type=jnp.float32) + b2_ref[...]
        o_ref[...] = h.astype(o_ref.dtype)


# ------------------------------------------------------- host-side folding --
def _adaptive_pool_matrix(L, out_size):
    """Exact AdaptiveAvgPool1d: output i averages input[floor(iL/o):ceil((i+1)L/o)]."""
    P = np.zeros((L, out_size), dtype=np.float32)
    for i in range(out_size):
        start = (i * L) // out_size
        end = -((-(i + 1) * L) // out_size)
        P[start:end, i] = 1.0 / (end - start)
    return P


def _fold_conv_pool_operands(L, conv_w, conv_b):
    """Fold Conv1d + AdaptiveAvgPool1d so that
         feat(B,1024) = x_flat @ P_block @ W_big + cb_flat,
       with x_flat = pad(x,(1,1)).reshape(B, 5*(L+2)) and feat laid out exactly
       like torch's pooled.reshape(B, 1024) (index = c_out*16 + pool_pos).
       K dims are zero-padded up to multiples of 128 for lane-aligned loads."""
    Lp = L + 2
    K1, K2 = CONV_IN * Lp, CONV_IN * KSIZE * POOL_OUT          # 5*(L+2), 240
    K1p, K2p = _round_up(K1, 128), _round_up(K2, 128)

    P = _adaptive_pool_matrix(L, POOL_OUT)                     # (L, 16)
    # P_big[t, k*16+q] = P[t-k, q]: pooling applied to the k-shifted input.
    P_big = np.zeros((Lp, KSIZE * POOL_OUT), np.float32)
    for k in range(KSIZE):
        P_big[k:k + L, k * POOL_OUT:(k + 1) * POOL_OUT] = P
    # Block-diagonal over input channels -> stage-1 column index is (c, k, q).
    P_block = np.zeros((K1p, K2p), np.float32)
    for c in range(CONV_IN):
        P_block[c * Lp:(c + 1) * Lp,
                c * KSIZE * POOL_OUT:(c + 1) * KSIZE * POOL_OUT] = P_big

    # W_big[(c,k,q), (o,q')] = conv_w[o,c,k] * delta(q,q')  (jnp => jit-safe).
    eye = jnp.eye(POOL_OUT, dtype=jnp.float32)
    w_small = jnp.einsum("ock,pq->ckpoq", conv_w.astype(jnp.float32), eye)
    w_small = w_small.reshape(K2, FEAT)
    W_big = jnp.zeros((K2p, FEAT), jnp.float32).at[:K2].set(w_small)

    # Every pool window's weights sum to 1 => conv bias commutes through pooling.
    cb_flat = jnp.repeat(conv_b.astype(jnp.float32), POOL_OUT).reshape(1, FEAT)
    return jnp.asarray(P_block), W_big, cb_flat


def _flatten_padded_input(concat):
    B, C, L = concat.shape
    Lp = L + 2
    xp = jnp.pad(concat, ((0, 0), (0, 0), (1, 1)))             # Conv1d padding=1
    x_flat = xp.reshape(B, C * Lp)
    K1p = _round_up(C * Lp, 128)
    if K1p != C * Lp:
        x_flat = jnp.pad(x_flat, ((0, 0), (0, K1p - C * Lp)))
    return x_flat


def _pick_batch_tile(B):
    # Largest sublane-aligned divisor of B so every tile is full; small batches
    # run as a single grid step.
    for cand in (32, 16, 8):
        if B % cand == 0:
            return cand
    return B


# ---------------------------------------------------------------- wrapper ---
def conv_mapping_forward(x_list, params, mlp_weight_dtype=jnp.bfloat16):
    concat = jnp.concatenate(x_list[1:], axis=1)               # (B, 5, L), NCW
    B, C, L = concat.shape
    assert C == CONV_IN
    x_flat = _flatten_padded_input(concat)                     # (B, K1p)
    P_block, W_big, cb_flat = _fold_conv_pool_operands(
        L, params["conv_w"], params["conv_b"])
    K1p, K2p = P_block.shape

    bt = _pick_batch_tile(B)
    nb = B // bt

    w1 = params["w1"].T.astype(mlp_weight_dtype)               # (1024, 512)
    w2 = params["w2"].T.astype(mlp_weight_dtype)               # (512, 512)
    b1 = params["b1"].reshape(1, IMAGE_EMBED_DIM).astype(jnp.float32)
    b2 = params["b2"].reshape(1, IMAGE_EMBED_DIM).astype(jnp.float32)
    gamma = params["bn_gamma"].reshape(1, FEAT).astype(jnp.float32)
    beta = params["bn_beta"].reshape(1, FEAT).astype(jnp.float32)

    full = lambda b: (0, 0)   # constant block index => weights stay resident
    return pl.pallas_call(
        _fused_kernel,
        out_shape=jax.ShapeDtypeStruct((B, IMAGE_EMBED_DIM), jnp.float32),
        grid=(nb,),
        in_specs=[
            pl.BlockSpec((bt, K1p), lambda b: (b, 0)),         # x_flat tile
            pl.BlockSpec((K1p, K2p), full),                    # P_block
            pl.BlockSpec((K2p, FEAT), full),                   # W_big
            pl.BlockSpec((1, FEAT), full),                     # conv bias (flat)
            pl.BlockSpec((1, FEAT), full),                     # bn gamma
            pl.BlockSpec((1, FEAT), full),                     # bn beta
            pl.BlockSpec((FEAT, IMAGE_EMBED_DIM), full),       # w1
            pl.BlockSpec((1, IMAGE_EMBED_DIM), full),          # b1
            pl.BlockSpec((IMAGE_EMBED_DIM, IMAGE_EMBED_DIM), full),  # w2
            pl.BlockSpec((1, IMAGE_EMBED_DIM), full),          # b2
        ],
        # Whole-batch, lane-dense output block; written once on the last step.
        out_specs=pl.BlockSpec((B, IMAGE_EMBED_DIM), full),
        scratch_shapes=[pltpu.VMEM((B, FEAT), jnp.float32)],
        # Must be 'arbitrary': the feature scratch carries across grid steps and
        # BatchNorm couples the full batch at the last step.
        compiler_params=pltpu.CompilerParams(
            dimension_semantics=("arbitrary",)),
    )(x_flat, P_block, W_big, cb_flat, gamma, beta, w1, b1, w2, b2)


# --------------------------------------------------------------- reference --
def conv_mapping_reference(x_list, params, mlp_weight_dtype=jnp.bfloat16):
    """Independent conv -> pool -> BN -> MLP path in plain jnp/XLA.  It mirrors
    the kernel's documented weight-dtype policy (bf16 weights, f32 accumulation)
    so the comparison is apples-to-apples; pass jnp.float32 for pure-f32."""
    concat = jnp.concatenate(x_list[1:], axis=1)
    y = lax.conv_general_dilated(concat, params["conv_w"], window_strides=(1,),
                                 padding=((1, 1),),
                                 dimension_numbers=("NCH", "OIH", "NCH"),
                                 precision=lax.Precision.HIGHEST)
    y = y + params["conv_b"][None, :, None]
    P = jnp.asarray(_adaptive_pool_matrix(concat.shape[2], POOL_OUT))
    y = jnp.einsum("bcl,lp->bcp", y, P, precision=lax.Precision.HIGHEST)
    f = y.reshape(y.shape[0], FEAT)
    mean = jnp.mean(f, axis=0, keepdims=True)
    var = jnp.mean((f - mean) ** 2, axis=0, keepdims=True)
    h = (f - mean) / jnp.sqrt(var + BN_EPS)
    h = h * params["bn_gamma"][None, :] + params["bn_beta"][None, :]
    h = jnp.maximum(h, 0.0)
    w1 = params["w1"].T.astype(mlp_weight_dtype)
    w2 = params["w2"].T.astype(mlp_weight_dtype)
    h = jnp.dot(h.astype(mlp_weight_dtype), w1,
                preferred_element_type=jnp.float32,
                precision=lax.Precision.HIGHEST) + params["b1"][None, :]
    h = jnp.maximum(h, 0.0)
    return jnp.dot(h.astype(mlp_weight_dtype), w2,
                   preferred_element_type=jnp.float32,
                   precision=lax.Precision.HIGHEST) + params["b2"][None, :]


def init_params(key):
    ks = jax.random.split(key, 6)
    return {
        "conv_w": jax.random.normal(ks[0], (CONV_OUT, CONV_IN, KSIZE), jnp.float32) * 0.1,
        "conv_b": jax.random.normal(ks[1], (CONV_OUT,), jnp.float32) * 0.1,
        "bn_gamma": jnp.ones((FEAT,), jnp.float32),            # PyTorch BN default
        "bn_beta": jnp.zeros((FEAT,), jnp.float32),
        "w1": jax.random.normal(ks[2], (IMAGE_EMBED_DIM, FEAT), jnp.float32)
              * (1.0 / np.sqrt(FEAT)),
        "b1": jax.random.normal(ks[3], (IMAGE_EMBED_DIM,), jnp.float32) * 0.1,
        "w2": jax.random.normal(ks[4], (IMAGE_EMBED_DIM, IMAGE_EMBED_DIM), jnp.float32)
              * (1.0 / np.sqrt(IMAGE_EMBED_DIM)),
        "b2": jax.random.normal(ks[5], (IMAGE_EMBED_DIM,), jnp.float32) * 0.1,
    }


if __name__ == "__main__":
    key = jax.random.PRNGKey(0)
    kx, kp = jax.random.split(key)
    B, L = 4, 32
    k0, k1, k2 = jax.random.split(kx, 3)
    # x is a list; only x[1:] (concatenated to 5 channels along dim 1) is used.
    x0 = jax.random.normal(k0, (B, IMAGE_EMBED_DIM), jnp.float32)   # unused (x[0])
    x1 = jax.random.normal(k1, (B, 2, L), jnp.float32)
    x2 = jax.random.normal(k2, (B, 3, L), jnp.float32)
    params = init_params(kp)
    x_list = [x0, x1, x2]

    # Tolerances absorb TPU default matmul precision + the documented bf16
    # MLP-weight policy; real structural bugs produce O(0.1+) errors.
    out = jax.block_until_ready(conv_mapping_forward(x_list, params))
    ref = jax.block_until_ready(conv_mapping_reference(x_list, params))
    assert out.shape == (B, IMAGE_EMBED_DIM), out.shape
    assert np.allclose(np.asarray(out), np.asarray(ref), atol=2e-2, rtol=2e-2)

    # Pure-f32 weight path against the plain f32 reference (module's numerics).
    out32 = jax.block_until_ready(
        conv_mapping_forward(x_list, params, mlp_weight_dtype=jnp.float32))
    ref32 = jax.block_until_ready(
        conv_mapping_reference(x_list, params, mlp_weight_dtype=jnp.float32))
    assert np.allclose(np.asarray(out32), np.asarray(ref32), atol=2e-2, rtol=2e-2)

    print("KERNEL_OK")
</pallas_src>

<mosaic_0001>
module attributes {stable_mosaic.version = 11 : i64} {
  func.func @_fused_kernel(%arg0: i32, %arg1: memref<4x256xf32, #tpu.memory_space<vmem>>, %arg2: memref<256x256xf32, #tpu.memory_space<vmem>>, %arg3: memref<256x1024xf32, #tpu.memory_space<vmem>>, %arg4: memref<1x1024xf32, #tpu.memory_space<vmem>>, %arg5: memref<1x1024xf32, #tpu.memory_space<vmem>>, %arg6: memref<1x1024xf32, #tpu.memory_space<vmem>>, %arg7: memref<1024x512xbf16, #tpu.memory_space<vmem>>, %arg8: memref<1x512xf32, #tpu.memory_space<vmem>>, %arg9: memref<512x512xbf16, #tpu.memory_space<vmem>>, %arg10: memref<1x512xf32, #tpu.memory_space<vmem>>, %arg11: memref<4x512xf32, #tpu.memory_space<vmem>>, %arg12: memref<4x1024xf32, #tpu.memory_space<vmem>>) attributes {dimension_semantics = [#tpu.dimension_semantics<arbitrary>], iteration_bounds = array<i64: 1>, scalar_prefetch = 0 : i64, scratch_operands = 1 : i64, tpu.core_type = #tpu.core_type<tc>, window_params = [{transform_indices = @transform_0, window_bounds = array<i64: 4, 256>}, {pipeline_mode = #tpu.pipeline_mode<synchronous>, transform_indices = @transform_1, window_bounds = array<i64: 256, 256>}, {pipeline_mode = #tpu.pipeline_mode<synchronous>, transform_indices = @transform_2, window_bounds = array<i64: 256, 1024>}, {pipeline_mode = #tpu.pipeline_mode<synchronous>, transform_indices = @transform_3, window_bounds = array<i64: 1, 1024>}, {pipeline_mode = #tpu.pipeline_mode<synchronous>, transform_indices = @transform_4, window_bounds = array<i64: 1, 1024>}, {pipeline_mode = #tpu.pipeline_mode<synchronous>, transform_indices = @transform_5, window_bounds = array<i64: 1, 1024>}, {pipeline_mode = #tpu.pipeline_mode<synchronous>, transform_indices = @transform_6, window_bounds = array<i64: 1024, 512>}, {pipeline_mode = #tpu.pipeline_mode<synchronous>, transform_indices = @transform_7, window_bounds = array<i64: 1, 512>}, {pipeline_mode = #tpu.pipeline_mode<synchronous>, transform_indices = @transform_8, window_bounds = array<i64: 512, 512>}, {pipeline_mode = #tpu.pipeline_mode<synchronous>, transform_indices = @transform_9, window_bounds = array<i64: 1, 512>}, {pipeline_mode = #tpu.pipeline_mode<synchronous>, transform_indices = @transform_10, window_bounds = array<i64: 4, 512>}]} {
    %c0 = arith.constant 0 : index
    %c0_0 = arith.constant 0 : index
    %0 = vector.load %arg1[%c0, %c0_0] : memref<4x256xf32, #tpu.memory_space<vmem>>, vector<4x256xf32>
    %c0_1 = arith.constant 0 : index
    %c0_2 = arith.constant 0 : index
    %1 = vector.load %arg2[%c0_1, %c0_2] : memref<256x256xf32, #tpu.memory_space<vmem>>, vector<256x256xf32>
    %cst = arith.constant dense<0.000000e+00> : vector<4x256xf32>
    %2 = tpu.matmul %0, %1, %cst {dimension_numbers = #tpu.dot_dimension_numbers<[1], [0], [0], [1], [0, 0, 1, 1], [], []>} : vector<4x256xf32>, vector<256x256xf32>, vector<4x256xf32> -> vector<4x256xf32>
    %c0_3 = arith.constant 0 : index
    %c0_4 = arith.constant 0 : index
    %3 = vector.load %arg3[%c0_3, %c0_4] : memref<256x1024xf32, #tpu.memory_space<vmem>>, vector<256x1024xf32>
    %cst_5 = arith.constant dense<0.000000e+00> : vector<4x1024xf32>
    %4 = tpu.matmul %2, %3, %cst_5 {dimension_numbers = #tpu.dot_dimension_numbers<[1], [0], [0], [1], [0, 0, 1, 1], [], []>} : vector<4x256xf32>, vector<256x1024xf32>, vector<4x1024xf32> -> vector<4x1024xf32>
    %c0_6 = arith.constant 0 : index
    %c0_7 = arith.constant 0 : index
    %5 = vector.load %arg4[%c0_6, %c0_7] : memref<1x1024xf32, #tpu.memory_space<vmem>>, vector<1x1024xf32>
    %6 = vector.broadcast %5 : vector<1x1024xf32> to vector<4x1024xf32>
    %7 = arith.addf %4, %6 : vector<4x1024xf32>
    %c4_i32 = arith.constant 4 : i32
    %8 = arith.muli %arg0, %c4_i32 : i32
    %9 = arith.index_cast %8 : i32 to index
    %c0_8 = arith.constant 0 : index
    %10 = vector.load %arg12[%9, %c0_8] : memref<4x1024xf32, #tpu.memory_space<vmem>>, vector<4x1024xf32>
    tpu.vector_store %arg12[%9, %c0_8], %7 {strides = array<i32>} : memref<4x1024xf32, #tpu.memory_space<vmem>>, vector<4x1024xf32>,
    %c0_i32 = arith.constant 0 : i32
    %11 = arith.cmpi eq, %arg0, %c0_i32 : i32
    %12 = arith.extui %11 : i1 to i32
    %c0_i32_9 = arith.constant 0 : i32
    %13 = arith.cmpi ne, %12, %c0_i32_9 : i32
    scf.if %13 {
      %c0_10 = arith.constant 0 : index
      %c0_11 = arith.constant 0 : index
      %14 = vector.load %arg12[%c0_10, %c0_11] : memref<4x1024xf32, #tpu.memory_space<vmem>>, vector<4x1024xf32>
      %cst_12 = arith.constant dense<0.000000e+00> : vector<1024xf32>
      %15 = vector.multi_reduction <add>, %14, %cst_12 [0] : vector<4x1024xf32> to vector<1024xf32>
      %16 = vector.shape_cast %15 : vector<1024xf32> to vector<1x1024xf32>
      %cst_13 = arith.constant 4.000000e+00 : f32
      %17 = vector.broadcast %cst_13 : f32 to vector<1x1024xf32>
      %18 = arith.divf %16, %17 : vector<1x1024xf32>
      %19 = vector.broadcast %18 : vector<1x1024xf32> to vector<4x1024xf32>
      %20 = arith.subf %14, %19 : vector<4x1024xf32>
      %21 = vector.broadcast %18 : vector<1x1024xf32> to vector<4x1024xf32>
      %22 = arith.subf %14, %21 : vector<4x1024xf32>
      %23 = arith.mulf %20, %22 : vector<4x1024xf32>
      %cst_14 = arith.constant dense<0.000000e+00> : vector<1024xf32>
      %24 = vector.multi_reduction <add>, %23, %cst_14 [0] : vector<4x1024xf32> to vector<1024xf32>
      %25 = vector.shape_cast %24 : vector<1024xf32> to vector<1x1024xf32>
      %cst_15 = arith.constant 4.000000e+00 : f32
      %26 = vector.broadcast %cst_15 : f32 to vector<1x1024xf32>
      %27 = arith.divf %25, %26 : vector<1x1024xf32>
      %28 = vector.broadcast %18 : vector<1x1024xf32> to vector<4x1024xf32>
      %29 = arith.subf %14, %28 : vector<4x1024xf32>
      %cst_16 = arith.constant 9.99999974E-6 : f32
      %30 = vector.broadcast %cst_16 : f32 to vector<1x1024xf32>
      %31 = arith.addf %27, %30 : vector<1x1024xf32>
      %32 = math.rsqrt %31 : vector<1x1024xf32>
      %33 = vector.broadcast %32 : vector<1x1024xf32> to vector<4x1024xf32>
      %34 = arith.mulf %29, %33 : vector<4x1024xf32>
      %c0_17 = arith.constant 0 : index
      %c0_18 = arith.constant 0 : index
      %35 = vector.load %arg5[%c0_17, %c0_18] : memref<1x1024xf32, #tpu.memory_space<vmem>>, vector<1x1024xf32>
      %36 = vector.broadcast %35 : vector<1x1024xf32> to vector<4x1024xf32>
      %37 = arith.mulf %34, %36 : vector<4x1024xf32>
      %c0_19 = arith.constant 0 : index
      %c0_20 = arith.constant 0 : index
      %38 = vector.load %arg6[%c0_19, %c0_20] : memref<1x1024xf32, #tpu.memory_space<vmem>>, vector<1x1024xf32>
      %39 = vector.broadcast %38 : vector<1x1024xf32> to vector<4x1024xf32>
      %40 = arith.addf %37, %39 : vector<4x1024xf32>
      %cst_21 = arith.constant 0.000000e+00 : f32
      %41 = vector.broadcast %cst_21 : f32 to vector<4x1024xf32>
      %42 = arith.maximumf %40, %41 : vector<4x1024xf32>
      %43 = arith.truncf %42 : vector<4x1024xf32> to vector<4x1024xbf16>
      %c0_22 = arith.constant 0 : index
      %c0_23 = arith.constant 0 : index
      %44 = vector.load %arg7[%c0_22, %c0_23] : memref<1024x512xbf16, #tpu.memory_space<vmem>>, vector<1024x512xbf16>
      %cst_24 = arith.constant dense<0.000000e+00> : vector<4x512xf32>
      %45 = tpu.matmul %43, %44, %cst_24 {dimension_numbers = #tpu.dot_dimension_numbers<[1], [0], [0], [1], [0, 0, 1, 1], [], []>} : vector<4x1024xbf16>, vector<1024x512xbf16>, vector<4x512xf32> -> vector<4x512xf32>
      %c0_25 = arith.constant 0 : index
      %c0_26 = arith.constant 0 : index
      %46 = vector.load %arg8[%c0_25, %c0_26] : memref<1x512xf32, #tpu.memory_space<vmem>>, vector<1x512xf32>
      %47 = vector.broadcast %46 : vector<1x512xf32> to vector<4x512xf32>
      %48 = arith.addf %45, %47 : vector<4x512xf32>
      %cst_27 = arith.constant 0.000000e+00 : f32
      %49 = vector.broadcast %cst_27 : f32 to vector<4x512xf32>
      %50 = arith.maximumf %48, %49 : vector<4x512xf32>
      %51 = arith.truncf %50 : vector<4x512xf32> to vector<4x512xbf16>
      %c0_28 = arith.constant 0 : index
      %c0_29 = arith.constant 0 : index
      %52 = vector.load %arg9[%c0_28, %c0_29] : memref<512x512xbf16, #tpu.memory_space<vmem>>, vector<512x512xbf16>
      %cst_30 = arith.constant dense<0.000000e+00> : vector<4x512xf32>
      %53 = tpu.matmul %51, %52, %cst_30 {dimension_numbers = #tpu.dot_dimension_numbers<[1], [0], [0], [1], [0, 0, 1, 1], [], []>} : vector<4x512xbf16>, vector<512x512xbf16>, vector<4x512xf32> -> vector<4x512xf32>
      %c0_31 = arith.constant 0 : index
      %c0_32 = arith.constant 0 : index
      %54 = vector.load %arg10[%c0_31, %c0_32] : memref<1x512xf32, #tpu.memory_space<vmem>>, vector<1x512xf32>
      %55 = vector.broadcast %54 : vector<1x512xf32> to vector<4x512xf32>
      %56 = arith.addf %53, %55 : vector<4x512xf32>
      %c0_33 = arith.constant 0 : index
      %c0_34 = arith.constant 0 : index
      %57 = vector.load %arg11[%c0_33, %c0_34] : memref<4x512xf32, #tpu.memory_space<vmem>>, vector<4x512xf32>
      tpu.vector_store %arg11[%c0_33, %c0_34], %56 {strides = array<i32>} : memref<4x512xf32, #tpu.memory_space<vmem>>, vector<4x512xf32>,
    } else {
    }
    return
  }
  func.func @transform_0(%arg0: i32) -> (i32, i32) {
    %c0_i32 = arith.constant 0 : i32
    %c0_i32_0 = arith.constant 0 : i32
    return %arg0, %c0_i32 : i32, i32
  }
  func.func @transform_1(%arg0: i32) -> (i32, i32) {
    %c0_i32 = arith.constant 0 : i32
    %c0_i32_0 = arith.constant 0 : i32
    %c0_i32_1 = arith.constant 0 : i32
    return %c0_i32, %c0_i32_0 : i32, i32
  }
  func.func @transform_2(%arg0: i32) -> (i32, i32) {
    %c0_i32 = arith.constant 0 : i32
    %c0_i32_0 = arith.constant 0 : i32
    %c0_i32_1 = arith.constant 0 : i32
    return %c0_i32, %c0_i32_0 : i32, i32
  }
  func.func @transform_3(%arg0: i32) -> (i32, i32) {
    %c0_i32 = arith.constant 0 : i32
    %c0_i32_0 = arith.constant 0 : i32
    %c0_i32_1 = arith.constant 0 : i32
    return %c0_i32, %c0_i32_0 : i32, i32
  }
  func.func @transform_4(%arg0: i32) -> (i32, i32) {
    %c0_i32 = arith.constant 0 : i32
    %c0_i32_0 = arith.constant 0 : i32
    %c0_i32_1 = arith.constant 0 : i32
    return %c0_i32, %c0_i32_0 : i32, i32
  }
  func.func @transform_5(%arg0: i32) -> (i32, i32) {
    %c0_i32 = arith.constant 0 : i32
    %c0_i32_0 = arith.constant 0 : i32
    %c0_i32_1 = arith.constant 0 : i32
    return %c0_i32, %c0_i32_0 : i32, i32
  }
  func.func @transform_6(%arg0: i32) -> (i32, i32) {
    %c0_i32 = arith.constant 0 : i32
    %c0_i32_0 = arith.constant 0 : i32
    %c0_i32_1 = arith.constant 0 : i32
    return %c0_i32, %c0_i32_0 : i32, i32
  }
  func.func @transform_7(%arg0: i32) -> (i32, i32) {
    %c0_i32 = arith.constant 0 : i32
    %c0_i32_0 = arith.constant 0 : i32
    %c0_i32_1 = arith.constant 0 : i32
    return %c0_i32, %c0_i32_0 : i32, i32
  }
  func.func @transform_8(%arg0: i32) -> (i32, i32) {
    %c0_i32 = arith.constant 0 : i32
    %c0_i32_0 = arith.constant 0 : i32
    %c0_i32_1 = arith.constant 0 : i32
    return %c0_i32, %c0_i32_0 : i32, i32
  }
  func.func @transform_9(%arg0: i32) -> (i32, i32) {
    %c0_i32 = arith.constant 0 : i32
    %c0_i32_0 = arith.constant 0 : i32
    %c0_i32_1 = arith.constant 0 : i32
    return %c0_i32, %c0_i32_0 : i32, i32
  }
  func.func @transform_10(%arg0: i32) -> (i32, i32) {
    %c0_i32 = arith.constant 0 : i32
    %c0_i32_0 = arith.constant 0 : i32
    %c0_i32_1 = arith.constant 0 : i32
    return %c0_i32, %c0_i32_0 : i32, i32
  }
}

</mosaic_0001>

<llo_original>
// kernel: tpu_custom_call.1
$region0: #{tpu_custom_call.1}
  #allocation0 [shape = 'u32[]', space=smem, size = 0x4, offset = 0x4, fixed_abs, tag = 'smem constant byte address 0x4 - core index']
  #allocation1 [shape = 'u32[144,128]{1,0:T(1,128)}', space=vmem, size = 0x12000, scoped, tag = 'internal scratch']
  #allocation2 [shape = 'f32[4,1024]{1,0:T(4,128)}', space=vmem, size = 0x4000, scoped, tag = 'scratch operand']
  %s0 = inlined_call_operand.hbm [shape: f32[4,256], index: 0, kind: input, shape index: {}]
  %s1 = inlined_call_operand.hbm [shape: f32[256,256], index: 1, kind: input, shape index: {}]
  %s2 = inlined_call_operand.hbm [shape: f32[256,1024], index: 2, kind: input, shape index: {}]
  %s3 = inlined_call_operand.hbm [shape: f32[1,1024], index: 3, kind: input, shape index: {}]
  %s4 = inlined_call_operand.hbm [shape: f32[1,1024], index: 4, kind: input, shape index: {}]
  %s5 = inlined_call_operand.vmem [shape: f32[1,1024], index: 5, kind: input, shape index: {}]
  %s6 = inlined_call_operand.hbm [shape: bf16[1024,512], index: 6, kind: input, shape index: {}]
  %s7 = inlined_call_operand.vmem [shape: f32[1,512], index: 7, kind: input, shape index: {}]
  %s8 = inlined_call_operand.hbm [shape: bf16[512,512], index: 8, kind: input, shape index: {}]
  %s9 = inlined_call_operand.vmem [shape: f32[1,512], index: 9, kind: input, shape index: {}]
  %s10 = inlined_call_operand.hbm [shape: f32[4,512], index: 10, kind: output, shape index: {}]
  %s11 = sld [smem:[#allocation0]]
  $region82: #{tpu_custom_call.1} parent=0
    _
  %s13 = ssub.s32 1, %s11
  %s14 = scalar_select 0, %s13, %s11
  $region1: #{tpu_custom_call.1} parent=0
    #allocation3 [shape = 'u8[4096]{0}', space=vmem, size = 0x1000, scoped, tag = 'input window, operand 0, single buffered']
    #allocation4 [shape = 's32[1]{0}', space=sflag, size = 0x4, scoped, tag = 'scoped memory for tpu_custom_call.1']
    #allocation5 [shape = 's32[1]{0}', space=sflag, size = 0x4, scoped, tag = 'scoped memory for tpu_custom_call.1']
    #allocation6 [shape = 'u8[262144]{0}', space=vmem, size = 0x40000, scoped, tag = 'input window, operand 1, single buffered']
    #allocation7 [shape = 's32[1]{0}', space=sflag, size = 0x4, scoped, tag = 'scoped memory for tpu_custom_call.1']
    #allocation8 [shape = 'u8[1048576]{0}', space=vmem, size = 0x100000, scoped, tag = 'input window, operand 2, single buffered']
    #allocation9 [shape = 'u8[4096]{0}', space=vmem, size = 0x1000, scoped, tag = 'input window, operand 3, single buffered']
    #allocation10 [shape = 's32[1]{0}', space=sflag, size = 0x4, scoped, tag = 'scoped memory for tpu_custom_call.1']
    #allocation11 [shape = 'u8[4096]{0}', space=vmem, size = 0x1000, scoped, tag = 'input window, operand 4, single buffered']
    #allocation12 [shape = 'u8[1048576]{0}', space=vmem, size = 0x100000, scoped, tag = 'input window, operand 6, single buffered']
    #allocation13 [shape = 's32[1]{0}', space=sflag, size = 0x4, scoped, tag = 'scoped memory for tpu_custom_call.1']
    #allocation14 [shape = 'u8[524288]{0}', space=vmem, size = 0x80000, scoped, tag = 'input window, operand 8, single buffered']
    #allocation15 [shape = 'u8[8192]{0}', space=vmem, size = 0x2000, scoped, tag = 'output window, operand 0, single buffered']
    %15 = vsyncpa [#allocation4], 0
    %16 = vsyncpa [#allocation7], 0
    %17 = vsyncpa [#allocation10], 0
    %18 = vsyncpa [#allocation13], 0
    %19 = vsyncpa [#allocation5], 0
    // Predicated region
    $region2: #{tpu_custom_call.1} parent=1 // pred_check
      _
    $region3: #{tpu_custom_call.1} parent=1 // pred_check_branch
      %21 = sbr.rel (0) target = $region5
    $region4: #{tpu_custom_call.1} parent=1 // pred_region
      %s23 = ssub.s32 128, 128
      %24 = vsyncadd [#allocation4], %s23
      %s26 = sshll.u32 [#allocation3], 4
      %s27 = int_to_ptr.vmem [resolvable:$true] %s26
      %29 = dma.hbm_to_vmem [thread:$0]  %s0, 128, %s27, [#allocation4]
    $region5: #{tpu_custom_call.1} parent=1 // pred_fallthru
      _
    // Predicated region
    $region6: #{tpu_custom_call.1} parent=1 // pred_check
      _
    $region7: #{tpu_custom_call.1} parent=1 // pred_check_branch
      %31 = sbr.rel (0) target = $region9
    $region8: #{tpu_custom_call.1} parent=1 // pred_region
      %s33 = ssub.s32 8192, 8192
      %34 = vsyncadd [#allocation7], %s33
      %s35 = sshll.u32 [#allocation6], 4
      %s36 = int_to_ptr.vmem [resolvable:$true] %s35
      %41 = dma.hbm_to_vmem [thread:$0]  %s1, 8192, %s36, [#allocation7], 256, 256, 16
    $region9: #{tpu_custom_call.1} parent=1 // pred_fallthru
      _
    // Predicated region
    $region10: #{tpu_custom_call.1} parent=1 // pred_check
      _
    $region11: #{tpu_custom_call.1} parent=1 // pred_check_branch
      %43 = sbr.rel (0) target = $region13
    $region12: #{tpu_custom_call.1} parent=1 // pred_region
      %s45 = ssub.s32 32768, 32768
      %46 = vsyncadd [#allocation7], %s45
      %s47 = sshll.u32 [#allocation8], 4
      %s48 = int_to_ptr.vmem [resolvable:$true] %s47
      %53 = dma.hbm_to_vmem [thread:$0]  %s2, 32768, %s48, [#allocation7], 1024, 1024, 64
    $region13: #{tpu_custom_call.1} parent=1 // pred_fallthru
      _
    // Predicated region
    $region14: #{tpu_custom_call.1} parent=1 // pred_check
      _
    $region15: #{tpu_custom_call.1} parent=1 // pred_check_branch
      %55 = sbr.rel (0) target = $region17
    $region16: #{tpu_custom_call.1} parent=1 // pred_region
      %s57 = ssub.s32 128, 128
      %58 = vsyncadd [#allocation10], %s57
      %s60 = sshll.u32 [#allocation9], 4
      %s61 = int_to_ptr.vmem [resolvable:$true] %s60
      %63 = dma.hbm_to_vmem [thread:$0]  %s3, 128, %s61, [#allocation10]
    $region17: #{tpu_custom_call.1} parent=1 // pred_fallthru
      _
    // Predicated region
    $region18: #{tpu_custom_call.1} parent=1 // pred_check
      _
    $region19: #{tpu_custom_call.1} parent=1 // pred_check_branch
      %65 = sbr.rel (0) target = $region21
    $region20: #{tpu_custom_call.1} parent=1 // pred_region
      %s67 = ssub.s32 128, 128
      %68 = vsyncadd [#allocation10], %s67
      %s70 = sshll.u32 [#allocation11], 4
      %s71 = int_to_ptr.vmem [resolvable:$true] %s70
      %73 = dma.hbm_to_vmem [thread:$0]  %s4, 128, %s71, [#allocation10]
    $region21: #{tpu_custom_call.1} parent=1 // pred_fallthru
      _
    // Predicated region
    $region22: #{tpu_custom_call.1} parent=1 // pred_check
      _
    $region23: #{tpu_custom_call.1} parent=1 // pred_check_branch
      %75 = sbr.rel (0) target = $region25
    $region24: #{tpu_custom_call.1} parent=1 // pred_region
      _
    $region25: #{tpu_custom_call.1} parent=1 // pred_fallthru
      _
    // Predicated region
    $region26: #{tpu_custom_call.1} parent=1 // pred_check
      _
    $region27: #{tpu_custom_call.1} parent=1 // pred_check_branch
      %77 = sbr.rel (0) target = $region29
    $region28: #{tpu_custom_call.1} parent=1 // pred_region
      %s79 = ssub.s32 32768, 32768
      %80 = vsyncadd [#allocation13], %s79
      %s81 = sshll.u32 [#allocation12], 4
      %s82 = int_to_ptr.vmem [resolvable:$true] %s81
      %87 = dma.hbm_to_vmem [thread:$0]  %s6, 32768, %s82, [#allocation13], 256, 256, 16
    $region29: #{tpu_custom_call.1} parent=1 // pred_fallthru
      _
    // Predicated region
    $region30: #{tpu_custom_call.1} parent=1 // pred_check
      _
    $region31: #{tpu_custom_call.1} parent=1 // pred_check_branch
      %89 = sbr.rel (0) target = $region33
    $region32: #{tpu_custom_call.1} parent=1 // pred_region
      _
    $region33: #{tpu_custom_call.1} parent=1 // pred_fallthru
      _
    // Predicated region
    $region34: #{tpu_custom_call.1} parent=1 // pred_check
      _
    $region35: #{tpu_custom_call.1} parent=1 // pred_check_branch
      %91 = sbr.rel (0) target = $region37
    $region36: #{tpu_custom_call.1} parent=1 // pred_region
      %s93 = ssub.s32 16384, 16384
      %94 = vsyncadd [#allocation13], %s93
      %s95 = sshll.u32 [#allocation14], 4
      %s96 = int_to_ptr.vmem [resolvable:$true] %s95
      %101 = dma.hbm_to_vmem [thread:$0]  %s8, 16384, %s96, [#allocation13], 256, 256, 16
    $region37: #{tpu_custom_call.1} parent=1 // pred_fallthru
      _
    // Predicated region
    $region38: #{tpu_custom_call.1} parent=1 // pred_check
      _
    $region39: #{tpu_custom_call.1} parent=1 // pred_check_branch
      %103 = sbr.rel (0) target = $region41
    $region40: #{tpu_custom_call.1} parent=1 // pred_region
      _
    $region41: #{tpu_custom_call.1} parent=1 // pred_fallthru
      _
    // Predicated region
    $region42: #{tpu_custom_call.1} parent=1 // pred_check
      _
    $region43: #{tpu_custom_call.1} parent=1 // pred_check_branch
      %105 = sbr.rel (0) target = $region45
    $region44: #{tpu_custom_call.1} parent=1 // pred_region
      %106 = dma.done [#allocation4], 128
    $region45: #{tpu_custom_call.1} parent=1 // pred_fallthru
      _
    // Predicated region
    $region46: #{tpu_custom_call.1} parent=1 // pred_check
      _
    $region47: #{tpu_custom_call.1} parent=1 // pred_check_branch
      %108 = sbr.rel (0) target = $region49
    $region48: #{tpu_custom_call.1} parent=1 // pred_region
      %109 = dma.done [#allocation7], 8192
    $region49: #{tpu_custom_call.1} parent=1 // pred_fallthru
      _
    // Predicated region
    $region50: #{tpu_custom_call.1} parent=1 // pred_check
      _
    $region51: #{tpu_custom_call.1} parent=1 // pred_check_branch
      %111 = sbr.rel (0) target = $region53
    $region52: #{tpu_custom_call.1} parent=1 // pred_region
      %112 = dma.done [#allocation7], 32768
    $region53: #{tpu_custom_call.1} parent=1 // pred_fallthru
      _
    // Predicated region
    $region54: #{tpu_custom_call.1} parent=1 // pred_check
      _
    $region55: #{tpu_custom_call.1} parent=1 // pred_check_branch
      %114 = sbr.rel (0) target = $region57
    $region56: #{tpu_custom_call.1} parent=1 // pred_region
      %115 = dma.done [#allocation10], 128
    $region57: #{tpu_custom_call.1} parent=1 // pred_fallthru
      _
    // Predicated region
    $region58: #{tpu_custom_call.1} parent=1 // pred_check
      _
    $region59: #{tpu_custom_call.1} parent=1 // pred_check_branch
      %117 = sbr.rel (0) target = $region61
    $region60: #{tpu_custom_call.1} parent=1 // pred_region
      %118 = dma.done [#allocation10], 128
    $region61: #{tpu_custom_call.1} parent=1 // pred_fallthru
      _
    // Predicated region
    $region62: #{tpu_custom_call.1} parent=1 // pred_check
      _
    $region63: #{tpu_custom_call.1} parent=1 // pred_check_branch
      %120 = sbr.rel (0) target = $region65
    $region64: #{tpu_custom_call.1} parent=1 // pred_region
      %121 = dma.done [#allocation13], 32768
    $region65: #{tpu_custom_call.1} parent=1 // pred_fallthru
      _
    // Predicated region
    $region66: #{tpu_custom_call.1} parent=1 // pred_check
      _
    $region67: #{tpu_custom_call.1} parent=1 // pred_check_branch
      %123 = sbr.rel (0) target = $region69
    $region68: #{tpu_custom_call.1} parent=1 // pred_region
      %124 = dma.done [#allocation13], 16384
    $region69: #{tpu_custom_call.1} parent=1 // pred_fallthru
      _
    %v125 = vld [vmem:[#allocation3] sm:$0xff]
    %v126 = vld [vmem:[#allocation6] sm:$0xff]
    %v127 = vld [vmem:[#allocation6 + $0x8] sm:$0xff]
    %v128 = vld [vmem:[#allocation6 + $0x10] sm:$0xff]
    %v129 = vld [vmem:[#allocation6 + $0x18] sm:$0xff]
    %v130 = vld [vmem:[#allocation6 + $0x20] sm:$0xff]
    %v131 = vld [vmem:[#allocation6 + $0x28] sm:$0xff]
    %v132 = vld [vmem:[#allocation6 + $0x30] sm:$0xff]
    %v133 = vld [vmem:[#allocation6 + $0x38] sm:$0xff]
    %v134 = vld [vmem:[#allocation6 + $0x40] sm:$0xff]
    %v135 = vld [vmem:[#allocation6 + $0x48] sm:$0xff]
    %v136 = vld [vmem:[#allocation6 + $0x50] sm:$0xff]
    %v137 = vld [vmem:[#allocation6 + $0x58] sm:$0xff]
    %v138 = vld [vmem:[#allocation6 + $0x60] sm:$0xff]
    %v139 = vld [vmem:[#allocation6 + $0x68] sm:$0xff]
    %v140 = vld [vmem:[#allocation6 + $0x70] sm:$0xff]
    %v141 = vld [vmem:[#allocation6 + $0x78] sm:$0xff]
    %v142 = vld [vmem:[#allocation6 + $0x80] sm:$0xff]
    %v143 = vld [vmem:[#allocation6 + $0x88] sm:$0xff]
    %v144 = vld [vmem:[#allocation6 + $0x90] sm:$0xff]
    %v145 = vld [vmem:[#allocation6 + $0x98] sm:$0xff]
    %v146 = vld [vmem:[#allocation6 + $0xa0] sm:$0xff]
    %v147 = vld [vmem:[#allocation6 + $0xa8] sm:$0xff]
    %v148 = vld [vmem:[#allocation6 + $0xb0] sm:$0xff]
    %v149 = vld [vmem:[#allocation6 + $0xb8] sm:$0xff]
    %v150 = vld [vmem:[#allocation6 + $0xc0] sm:$0xff]
    %v151 = vld [vmem:[#allocation6 + $0xc8] sm:$0xff]
    %v152 = vld [vmem:[#allocation6 + $0xd0] sm:$0xff]
    %v153 = vld [vmem:[#allocation6 + $0xd8] sm:$0xff]
    %v154 = vld [vmem:[#allocation6 + $0xe0] sm:$0xff]
    %v155 = vld [vmem:[#allocation6 + $0xe8] sm:$0xff]
    %v156 = vld [vmem:[#allocation6 + $0xf0] sm:$0xff]
    %v157 = vld [vmem:[#allocation6 + $0xf8] sm:$0xff]
    %v158 = vld [vmem:[#allocation6 + $0x100] sm:$0xff]
    %v159 = vld [vmem:[#allocation6 + $0x108] sm:$0xff]
    %v160 = vld [vmem:[#allocation6 + $0x110] sm:$0xff]
    %v161 = vld [vmem:[#allocation6 + $0x118] sm:$0xff]
    %v162 = vld [vmem:[#allocation6 + $0x120] sm:$0xff]
    %v163 = vld [vmem:[#allocation6 + $0x128] sm:$0xff]
    %v164 = vld [vmem:[#allocation6 + $0x130] sm:$0xff]
    %v165 = vld [vmem:[#allocation6 + $0x138] sm:$0xff]
    %v166 = vld [vmem:[#allocation6 + $0x140] sm:$0xff]
    %v167 = vld [vmem:[#allocation6 + $0x148] sm:$0xff]
    %v168 = vld [vmem:[#allocation6 + $0x150] sm:$0xff]
    %v169 = vld [vmem:[#allocation6 + $0x158] sm:$0xff]
    %v170 = vld [vmem:[#allocation6 + $0x160] sm:$0xff]
    %v171 = vld [vmem:[#allocation6 + $0x168] sm:$0xff]
    %v172 = vld [vmem:[#allocation6 + $0x170] sm:$0xff]
    %v173 = vld [vmem:[#allocation6 + $0x178] sm:$0xff]
    %v174 = vld [vmem:[#allocation6 + $0x180] sm:$0xff]
    %v175 = vld [vmem:[#allocation6 + $0x188] sm:$0xff]
    %v176 = vld [vmem:[#allocation6 + $0x190] sm:$0xff]
    %v177 = vld [vmem:[#allocation6 + $0x198] sm:$0xff]
    %v178 = vld [vmem:[#allocation6 + $0x1a0] sm:$0xff]
    %v179 = vld [vmem:[#allocation6 + $0x1a8] sm:$0xff]
    %v180 = vld [vmem:[#allocation6 + $0x1b0] sm:$0xff]
    %v181 = vld [vmem:[#allocation6 + $0x1b8] sm:$0xff]
    %v182 = vld [vmem:[#allocation6 + $0x1c0] sm:$0xff]
    %v183 = vld [vmem:[#allocation6 + $0x1c8] sm:$0xff]
    %v184 = vld [vmem:[#allocation6 + $0x1d0] sm:$0xff]
    %v185 = vld [vmem:[#allocation6 + $0x1d8] sm:$0xff]
    %v186 = vld [vmem:[#allocation6 + $0x1e0] sm:$0xff]
    %v187 = vld [vmem:[#allocation6 + $0x1e8] sm:$0xff]
    %v188 = vld [vmem:[#allocation6 + $0x1f0] sm:$0xff]
    %v189 = vld [vmem:[#allocation6 + $0x1f8] sm:$0xff]
    %v191 = vcombine.high %v125, %v125
    %193 = vmatprep.subr.mxu0 %v157
    %194 = vmatpush1.msra.mxu0 %v156
    %195 = vmatprep.subr.mxu0 %v155
    %196 = vmatpush1.msra.mxu0 %v154
    %197 = vmatprep.subr.mxu0 %v153
    %198 = vmatpush1.msra.mxu0 %v152
    %199 = vmatprep.subr.mxu0 %v151
    %200 = vmatpush1.msra.mxu0 %v150
    %201 = vmatprep.subr.mxu0 %v149
    %202 = vmatpush1.msra.mxu0 %v148
    %203 = vmatprep.subr.mxu0 %v147
    %204 = vmatpush1.msra.mxu0 %v146
    %205 = vmatprep.subr.mxu0 %v145
    %206 = vmatpush1.msra.mxu0 %v144
    %207 = vmatprep.subr.mxu0 %v143
    %208 = vmatpush1.msra.mxu0 %v142
    %209 = vmatprep.subr.mxu0 %v141
    %210 = vmatpush1.msra.mxu0 %v140
    %211 = vmatprep.subr.mxu0 %v139
    %212 = vmatpush1.msra.mxu0 %v138
    %213 = vmatprep.subr.mxu0 %v137
    %214 = vmatpush1.msra.mxu0 %v136
    %215 = vmatprep.subr.mxu0 %v135
    %216 = vmatpush1.msra.mxu0 %v134
    %217 = vmatprep.subr.mxu0 %v133
    %218 = vmatpush1.msra.mxu0 %v132
    %219 = vmatprep.subr.mxu0 %v131
    %220 = vmatpush1.msra.mxu0 %v130
    %221 = vmatprep.subr.mxu0 %v129
    %222 = vmatpush1.msra.mxu0 %v128
    %223 = vmatprep.subr.mxu0 %v127
    %224 = vmatpush1.msra.mxu0 %v126
    %225 = vmatprep.subr.mxu0 %v189
    %226 = vmatpush2.msra.mxu0 %v188
    %227 = vmatprep.subr.mxu0 %v187
    %228 = vmatpush2.msra.mxu0 %v186
    %229 = vmatprep.subr.mxu0 %v185
    %230 = vmatpush2.msra.mxu0 %v184
    %231 = vmatprep.subr.mxu0 %v183
    %232 = vmatpush2.msra.mxu0 %v182
    %233 = vmatprep.subr.mxu0 %v181
    %234 = vmatpush2.msra.mxu0 %v180
    %235 = vmatprep.subr.mxu0 %v179
    %236 = vmatpush2.msra.mxu0 %v178
    %237 = vmatprep.subr.mxu0 %v177
    %238 = vmatpush2.msra.mxu0 %v176
    %239 = vmatprep.subr.mxu0 %v175
    %240 = vmatpush2.msra.mxu0 %v174
    %241 = vmatprep.subr.mxu0 %v173
    %242 = vmatpush2.msra.mxu0 %v172
    %243 = vmatprep.subr.mxu0 %v171
    %244 = vmatpush2.msra.mxu0 %v170
    %245 = vmatprep.subr.mxu0 %v169
    %246 = vmatpush2.msra.mxu0 %v168
    %247 = vmatprep.subr.mxu0 %v167
    %248 = vmatpush2.msra.mxu0 %v166
    %249 = vmatprep.subr.mxu0 %v165
    %250 = vmatpush2.msra.mxu0 %v164
    %251 = vmatprep.subr.mxu0 %v163
    %252 = vmatpush2.msra.mxu0 %v162
    %253 = vmatprep.subr.mxu0 %v161
    %254 = vmatpush2.msra.mxu0 %v160
    %255 = vmatprep.subr.mxu0 %v159
    %256 = vmatpush2.msra.mxu0 %v158
    %257 = vmatprep.mubr.f32.mxu0 %v191
    %258 = vmatmul.mubr.f32.gmra.mxu0 %v125
    %v259 = vpop.f32.mrf.mxu0
    %v260 = vadd.f32 0.0, %v259
    %v261 = vpop.f32.mrf.mxu0
    %v262 = vadd.f32 0.0, %v261
    %263 = vdwg.mxu0
    %v264 = vld [vmem:[#allocation8] sm:$0xff]
    %v265 = vld [vmem:[#allocation8 + $0x8] sm:$0xff]
    %v266 = vld [vmem:[#allocation8 + $0x10] sm:$0xff]
    %v267 = vld [vmem:[#allocation8 + $0x18] sm:$0xff]
    %v268 = vld [vmem:[#allocation8 + $0x20] sm:$0xff]
    %v269 = vld [vmem:[#allocation8 + $0x28] sm:$0xff]
    %v270 = vld [vmem:[#allocation8 + $0x30] sm:$0xff]
    %v271 = vld [vmem:[#allocation8 + $0x38] sm:$0xff]
    %v272 = vld [vmem:[#allocation8 + $0x40] sm:$0xff]
    %v273 = vld [vmem:[#allocation8 + $0x48] sm:$0xff]
    %v274 = vld [vmem:[#allocation8 + $0x50] sm:$0xff]
    %v275 = vld [vmem:[#allocation8 + $0x58] sm:$0xff]
    %v276 = vld [vmem:[#allocation8 + $0x60] sm:$0xff]
    %v277 = vld [vmem:[#allocation8 + $0x68] sm:$0xff]
    %v278 = vld [vmem:[#allocation8 + $0x70] sm:$0xff]
    %v279 = vld [vmem:[#allocation8 + $0x78] sm:$0xff]
    %v280 = vld [vmem:[#allocation8 + $0x80] sm:$0xff]
    %v281 = vld [vmem:[#allocation8 + $0x88] sm:$0xff]
    %v282 = vld [vmem:[#allocation8 + $0x90] sm:$0xff]
    %v283 = vld [vmem:[#allocation8 + $0x98] sm:$0xff]
    %v284 = vld [vmem:[#allocation8 + $0xa0] sm:$0xff]
    %v285 = vld [vmem:[#allocation8 + $0xa8] sm:$0xff]
    %v286 = vld [vmem:[#allocation8 + $0xb0] sm:$0xff]
    %v287 = vld [vmem:[#allocation8 + $0xb8] sm:$0xff]
    %v288 = vld [vmem:[#allocation8 + $0xc0] sm:$0xff]
    %v289 = vld [vmem:[#allocation8 + $0xc8] sm:$0xff]
    %v290 = vld [vmem:[#allocation8 + $0xd0] sm:$0xff]
    %v291 = vld [vmem:[#allocation8 + $0xd8] sm:$0xff]
    %v292 = vld [vmem:[#allocation8 + $0xe0] sm:$0xff]
    %v293 = vld [vmem:[#allocation8 + $0xe8] sm:$0xff]
    %v294 = vld [vmem:[#allocation8 + $0xf0] sm:$0xff]
    %v295 = vld [vmem:[#allocation8 + $0xf8] sm:$0xff]
    %v296 = vld [vmem:[#allocation8 + $0x100] sm:$0xff]
    %v297 = vld [vmem:[#allocation8 + $0x108] sm:$0xff]
    %v298 = vld [vmem:[#allocation8 + $0x110] sm:$0xff]
    %v299 = vld [vmem:[#allocation8 + $0x118] sm:$0xff]
    %v300 = vld [vmem:[#allocation8 + $0x120] sm:$0xff]
    %v301 = vld [vmem:[#allocation8 + $0x128] sm:$0xff]
    %v302 = vld [vmem:[#allocation8 + $0x130] sm:$0xff]
    %v303 = vld [vmem:[#allocation8 + $0x138] sm:$0xff]
    %v304 = vld [vmem:[#allocation8 + $0x140] sm:$0xff]
    %v305 = vld [vmem:[#allocation8 + $0x148] sm:$0xff]
    %v306 = vld [vmem:[#allocation8 + $0x150] sm:$0xff]
    %v307 = vld [vmem:[#allocation8 + $0x158] sm:$0xff]
    %v308 = vld [vmem:[#allocation8 + $0x160] sm:$0xff]
    %v309 = vld [vmem:[#allocation8 + $0x168] sm:$0xff]
    %v310 = vld [vmem:[#allocation8 + $0x170] sm:$0xff]
    %v311 = vld [vmem:[#allocation8 + $0x178] sm:$0xff]
    %v312 = vld [vmem:[#allocation8 + $0x180] sm:$0xff]
    %v313 = vld [vmem:[#allocation8 + $0x188] sm:$0xff]
    %v314 = vld [vmem:[#allocation8 + $0x190] sm:$0xff]
    %v315 = vld [vmem:[#allocation8 + $0x198] sm:$0xff]
    %v316 = vld [vmem:[#allocation8 + $0x1a0] sm:$0xff]
    %v317 = vld [vmem:[#allocation8 + $0x1a8] sm:$0xff]
    %v318 = vld [vmem:[#allocation8 + $0x1b0] sm:$0xff]
    %v319 = vld [vmem:[#allocation8 + $0x1b8] sm:$0xff]
    %v320 = vld [vmem:[#allocation8 + $0x1c0] sm:$0xff]
    %v321 = vld [vmem:[#allocation8 + $0x1c8] sm:$0xff]
    %v322 = vld [vmem:[#allocation8 + $0x1d0] sm:$0xff]
    %v323 = vld [vmem:[#allocation8 + $0x1d8] sm:$0xff]
    %v324 = vld [vmem:[#allocation8 + $0x1e0] sm:$0xff]
    %v325 = vld [vmem:[#allocation8 + $0x1e8] sm:$0xff]
    %v326 = vld [vmem:[#allocation8 + $0x1f0] sm:$0xff]
    %v327 = vld [vmem:[#allocation8 + $0x1f8] sm:$0xff]
    %v328 = vld [vmem:[#allocation8 + $0x200] sm:$0xff]
    %v329 = vld [vmem:[#allocation8 + $0x208] sm:$0xff]
    %v330 = vld [vmem:[#allocation8 + $0x210] sm:$0xff]
    %v331 = vld [vmem:[#allocation8 + $0x218] sm:$0xff]
    %v332 = vld [vmem:[#allocation8 + $0x220] sm:$0xff]
    %v333 = vld [vmem:[#allocation8 + $0x228] sm:$0xff]
    %v334 = vld [vmem:[#allocation8 + $0x230] sm:$0xff]
    %v335 = vld [vmem:[#allocation8 + $0x238] sm:$0xff]
    %v336 = vld [vmem:[#allocation8 + $0x240] sm:$0xff]
    %v337 = vld [vmem:[#allocation8 + $0x248] sm:$0xff]
    %v338 = vld [vmem:[#allocation8 + $0x250] sm:$0xff]
    %v339 = vld [vmem:[#allocation8 + $0x258] sm:$0xff]
    %v340 = vld [vmem:[#allocation8 + $0x260] sm:$0xff]
    %v341 = vld [vmem:[#allocation8 + $0x268] sm:$0xff]
    %v342 = vld [vmem:[#allocation8 + $0x270] sm:$0xff]
    %v343 = vld [vmem:[#allocation8 + $0x278] sm:$0xff]
    %v344 = vld [vmem:[#allocation8 + $0x280] sm:$0xff]
    %v345 = vld [vmem:[#allocation8 + $0x288] sm:$0xff]
    %v346 = vld [vmem:[#allocation8 + $0x290] sm:$0xff]
    %v347 = vld [vmem:[#allocation8 + $0x298] sm:$0xff]
    %v348 = vld [vmem:[#allocation8 + $0x2a0] sm:$0xff]
    %v349 = vld [vmem:[#allocation8 + $0x2a8] sm:$0xff]
    %v350 = vld [vmem:[#allocation8 + $0x2b0] sm:$0xff]
    %v351 = vld [vmem:[#allocation8 + $0x2b8] sm:$0xff]
    %v352 = vld [vmem:[#allocation8 + $0x2c0] sm:$0xff]
    %v353 = vld [vmem:[#allocation8 + $0x2c8] sm:$0xff]
    %v354 = vld [vmem:[#allocation8 + $0x2d0] sm:$0xff]
    %v355 = vld [vmem:[#allocation8 + $0x2d8] sm:$0xff]
    %v356 = vld [vmem:[#allocation8 + $0x2e0] sm:$0xff]
    %v357 = vld [vmem:[#allocation8 + $0x2e8] sm:$0xff]
    %v358 = vld [vmem:[#allocation8 + $0x2f0] sm:$0xff]
    %v359 = vld [vmem:[#allocation8 + $0x2f8] sm:$0xff]
    %v360 = vld [vmem:[#allocation8 + $0x300] sm:$0xff]
    %v361 = vld [vmem:[#allocation8 + $0x308] sm:$0xff]
    %v362 = vld [vmem:[#allocation8 + $0x310] sm:$0xff]
    %v363 = vld [vmem:[#allocation8 + $0x318] sm:$0xff]
    %v364 = vld [vmem:[#allocation8 + $0x320] sm:$0xff]
    %v365 = vld [vmem:[#allocation8 + $0x328] sm:$0xff]
    %v366 = vld [vmem:[#allocation8 + $0x330] sm:$0xff]
    %v367 = vld [vmem:[#allocation8 + $0x338] sm:$0xff]
    %v368 = vld [vmem:[#allocation8 + $0x340] sm:$0xff]
    %v369 = vld [vmem:[#allocation8 + $0x348] sm:$0xff]
    %v370 = vld [vmem:[#allocation8 + $0x350] sm:$0xff]
    %v371 = vld [vmem:[#allocation8 + $0x358] sm:$0xff]
    %v372 = vld [vmem:[#allocation8 + $0x360] sm:$0xff]
    %v373 = vld [vmem:[#allocation8 + $0x368] sm:$0xff]
    %v374 = vld [vmem:[#allocation8 + $0x370] sm:$0xff]
    %v375 = vld [vmem:[#allocation8 + $0x378] sm:$0xff]
    %v376 = vld [vmem:[#allocation8 + $0x380] sm:$0xff]
    %v377 = vld [vmem:[#allocation8 + $0x388] sm:$0xff]
    %v378 = vld [vmem:[#allocation8 + $0x390] sm:$0xff]
    %v379 = vld [vmem:[#allocation8 + $0x398] sm:$0xff]
    %v380 = vld [vmem:[#allocation8 + $0x3a0] sm:$0xff]
    %v381 = vld [vmem:[#allocation8 + $0x3a8] sm:$0xff]
    %v382 = vld [vmem:[#allocation8 + $0x3b0] sm:$0xff]
    %v383 = vld [vmem:[#allocation8 + $0x3b8] sm:$0xff]
    %v384 = vld [vmem:[#allocation8 + $0x3c0] sm:$0xff]
    %v385 = vld [vmem:[#allocation8 + $0x3c8] sm:$0xff]
    %v386 = vld [vmem:[#allocation8 + $0x3d0] sm:$0xff]
    %v387 = vld [vmem:[#allocation8 + $0x3d8] sm:$0xff]
    %v388 = vld [vmem:[#allocation8 + $0x3e0] sm:$0xff]
    %v389 = vld [vmem:[#allocation8 + $0x3e8] sm:$0xff]
    %v390 = vld [vmem:[#allocation8 + $0x3f0] sm:$0xff]
    %v391 = vld [vmem:[#allocation8 + $0x3f8] sm:$0xff]
    %v392 = vld [vmem:[#allocation8 + $0x400] sm:$0xff]
    %v393 = vld [vmem:[#allocation8 + $0x408] sm:$0xff]
    %v394 = vld [vmem:[#allocation8 + $0x410] sm:$0xff]
    %v395 = vld [vmem:[#allocation8 + $0x418] sm:$0xff]
    %v396 = vld [vmem:[#allocation8 + $0x420] sm:$0xff]
    %v397 = vld [vmem:[#allocation8 + $0x428] sm:$0xff]
    %v398 = vld [vmem:[#allocation8 + $0x430] sm:$0xff]
    %v399 = vld [vmem:[#allocation8 + $0x438] sm:$0xff]
    %v400 = vld [vmem:[#allocation8 + $0x440] sm:$0xff]
    %v401 = vld [vmem:[#allocation8 + $0x448] sm:$0xff]
    %v402 = vld [vmem:[#allocation8 + $0x450] sm:$0xff]
    %v403 = vld [vmem:[#allocation8 + $0x458] sm:$0xff]
    %v404 = vld [vmem:[#allocation8 + $0x460] sm:$0xff]
    %v405 = vld [vmem:[#allocation8 + $0x468] sm:$0xff]
    %v406 = vld [vmem:[#allocation8 + $0x470] sm:$0xff]
    %v407 = vld [vmem:[#allocation8 + $0x478] sm:$0xff]
    %v408 = vld [vmem:[#allocation8 + $0x480] sm:$0xff]
    %v409 = vld [vmem:[#allocation8 + $0x488] sm:$0xff]
    %v410 = vld [vmem:[#allocation8 + $0x490] sm:$0xff]
    %v411 = vld [vmem:[#allocation8 + $0x498] sm:$0xff]
    %v412 = vld [vmem:[#allocation8 + $0x4a0] sm:$0xff]
    %v413 = vld [vmem:[#allocation8 + $0x4a8] sm:$0xff]
    %v414 = vld [vmem:[#allocation8 + $0x4b0] sm:$0xff]
    %v415 = vld [vmem:[#allocation8 + $0x4b8] sm:$0xff]
    %v416 = vld [vmem:[#allocation8 + $0x4c0] sm:$0xff]
    %v417 = vld [vmem:[#allocation8 + $0x4c8] sm:$0xff]
    %v418 = vld [vmem:[#allocation8 + $0x4d0] sm:$0xff]
    %v419 = vld [vmem:[#allocation8 + $0x4d8] sm:$0xff]
    %v420 = vld [vmem:[#allocation8 + $0x4e0] sm:$0xff]
    %v421 = vld [vmem:[#allocation8 + $0x4e8] sm:$0xff]
    %v422 = vld [vmem:[#allocation8 + $0x4f0] sm:$0xff]
    %v423 = vld [vmem:[#allocation8 + $0x4f8] sm:$0xff]
    %v424 = vld [vmem:[#allocation8 + $0x500] sm:$0xff]
    %v425 = vld [vmem:[#allocation8 + $0x508] sm:$0xff]
    %v426 = vld [vmem:[#allocation8 + $0x510] sm:$0xff]
    %v427 = vld [vmem:[#allocation8 + $0x518] sm:$0xff]
    %v428 = vld [vmem:[#allocation8 + $0x520] sm:$0xff]
    %v429 = vld [vmem:[#allocation8 + $0x528] sm:$0xff]
    %v430 = vld [vmem:[#allocation8 + $0x530] sm:$0xff]
    %v431 = vld [vmem:[#allocation8 + $0x538] sm:$0xff]
    %v432 = vld [vmem:[#allocation8 + $0x540] sm:$0xff]
    %v433 = vld [vmem:[#allocation8 + $0x548] sm:$0xff]
    %v434 = vld [vmem:[#allocation8 + $0x550] sm:$0xff]
    %v435 = vld [vmem:[#allocation8 + $0x558] sm:$0xff]
    %v436 = vld [vmem:[#allocation8 + $0x560] sm:$0xff]
    %v437 = vld [vmem:[#allocation8 + $0x568] sm:$0xff]
    %v438 = vld [vmem:[#allocation8 + $0x570] sm:$0xff]
    %v439 = vld [vmem:[#allocation8 + $0x578] sm:$0xff]
    %v440 = vld [vmem:[#allocation8 + $0x580] sm:$0xff]
    %v441 = vld [vmem:[#allocation8 + $0x588] sm:$0xff]
    %v442 = vld [vmem:[#allocation8 + $0x590] sm:$0xff]
    %v443 = vld [vmem:[#allocation8 + $0x598] sm:$0xff]
    %v444 = vld [vmem:[#allocation8 + $0x5a0] sm:$0xff]
    %v445 = vld [vmem:[#allocation8 + $0x5a8] sm:$0xff]
    %v446 = vld [vmem:[#allocation8 + $0x5b0] sm:$0xff]
    %v447 = vld [vmem:[#allocation8 + $0x5b8] sm:$0xff]
    %v448 = vld [vmem:[#allocation8 + $0x5c0] sm:$0xff]
    %v449 = vld [vmem:[#allocation8 + $0x5c8] sm:$0xff]
    %v450 = vld [vmem:[#allocation8 + $0x5d0] sm:$0xff]
    %v451 = vld [vmem:[#allocation8 + $0x5d8] sm:$0xff]
    %v452 = vld [vmem:[#allocation8 + $0x5e0] sm:$0xff]
    %v453 = vld [vmem:[#allocation8 + $0x5e8] sm:$0xff]
    %v454 = vld [vmem:[#allocation8 + $0x5f0] sm:$0xff]
    %v455 = vld [vmem:[#allocation8 + $0x5f8] sm:$0xff]
    %v456 = vld [vmem:[#allocation8 + $0x600] sm:$0xff]
    %v457 = vld [vmem:[#allocation8 + $0x608] sm:$0xff]
    %v458 = vld [vmem:[#allocation8 + $0x610] sm:$0xff]
    %v459 = vld [vmem:[#allocation8 + $0x618] sm:$0xff]
    %v460 = vld [vmem:[#allocation8 + $0x620] sm:$0xff]
    %v461 = vld [vmem:[#allocation8 + $0x628] sm:$0xff]
    %v462 = vld [vmem:[#allocation8 + $0x630] sm:$0xff]
    %v463 = vld [vmem:[#allocation8 + $0x638] sm:$0xff]
    %v464 = vld [vmem:[#allocation8 + $0x640] sm:$0xff]
    %v465 = vld [vmem:[#allocation8 + $0x648] sm:$0xff]
    %v466 = vld [vmem:[#allocation8 + $0x650] sm:$0xff]
    %v467 = vld [vmem:[#allocation8 + $0x658] sm:$0xff]
    %v468 = vld [vmem:[#allocation8 + $0x660] sm:$0xff]
    %v469 = vld [vmem:[#allocation8 + $0x668] sm:$0xff]
    %v470 = vld [vmem:[#allocation8 + $0x670] sm:$0xff]
    %v471 = vld [vmem:[#allocation8 + $0x678] sm:$0xff]
    %v472 = vld [vmem:[#allocation8 + $0x680] sm:$0xff]
    %v473 = vld [vmem:[#allocation8 + $0x688] sm:$0xff]
    %v474 = vld [vmem:[#allocation8 + $0x690] sm:$0xff]
    %v475 = vld [vmem:[#allocation8 + $0x698] sm:$0xff]
    %v476 = vld [vmem:[#allocation8 + $0x6a0] sm:$0xff]
    %v477 = vld [vmem:[#allocation8 + $0x6a8] sm:$0xff]
    %v478 = vld [vmem:[#allocation8 + $0x6b0] sm:$0xff]
    %v479 = vld [vmem:[#allocation8 + $0x6b8] sm:$0xff]
    %v480 = vld [vmem:[#allocation8 + $0x6c0] sm:$0xff]
    %v481 = vld [vmem:[#allocation8 + $0x6c8] sm:$0xff]
    %v482 = vld [vmem:[#allocation8 + $0x6d0] sm:$0xff]
    %v483 = vld [vmem:[#allocation8 + $0x6d8] sm:$0xff]
    %v484 = vld [vmem:[#allocation8 + $0x6e0] sm:$0xff]
    %v485 = vld [vmem:[#allocation8 + $0x6e8] sm:$0xff]
    %v486 = vld [vmem:[#allocation8 + $0x6f0] sm:$0xff]
    %v487 = vld [vmem:[#allocation8 + $0x6f8] sm:$0xff]
    %v488 = vld [vmem:[#allocation8 + $0x700] sm:$0xff]
    %v489 = vld [vmem:[#allocation8 + $0x708] sm:$0xff]
    %v490 = vld [vmem:[#allocation8 + $0x710] sm:$0xff]
    %v491 = vld [vmem:[#allocation8 + $0x718] sm:$0xff]
    %v492 = vld [vmem:[#allocation8 + $0x720] sm:$0xff]
    %v493 = vld [vmem:[#allocation8 + $0x728] sm:$0xff]
    %v494 = vld [vmem:[#allocation8 + $0x730] sm:$0xff]
    %v495 = vld [vmem:[#allocation8 + $0x738] sm:$0xff]
    %v496 = vld [vmem:[#allocation8 + $0x740] sm:$0xff]
    %v497 = vld [vmem:[#allocation8 + $0x748] sm:$0xff]
    %v498 = vld [vmem:[#allocation8 + $0x750] sm:$0xff]
    %v499 = vld [vmem:[#allocation8 + $0x758] sm:$0xff]
    %v500 = vld [vmem:[#allocation8 + $0x760] sm:$0xff]
    %v501 = vld [vmem:[#allocation8 + $0x768] sm:$0xff]
    %v502 = vld [vmem:[#allocation8 + $0x770] sm:$0xff]
    %v503 = vld [vmem:[#allocation8 + $0x778] sm:$0xff]
    %v504 = vld [vmem:[#allocation8 + $0x780] sm:$0xff]
    %v505 = vld [vmem:[#allocation8 + $0x788] sm:$0xff]
    %v506 = vld [vmem:[#allocation8 + $0x790] sm:$0xff]
    %v507 = vld [vmem:[#allocation8 + $0x798] sm:$0xff]
    %v508 = vld [vmem:[#allocation8 + $0x7a0] sm:$0xff]
    %v509 = vld [vmem:[#allocation8 + $0x7a8] sm:$0xff]
    %v510 = vld [vmem:[#allocation8 + $0x7b0] sm:$0xff]
    %v511 = vld [vmem:[#allocation8 + $0x7b8] sm:$0xff]
    %v512 = vld [vmem:[#allocation8 + $0x7c0] sm:$0xff]
    %v513 = vld [vmem:[#allocation8 + $0x7c8] sm:$0xff]
    %v514 = vld [vmem:[#allocation8 + $0x7d0] sm:$0xff]
    %v515 = vld [vmem:[#allocation8 + $0x7d8] sm:$0xff]
    %v516 = vld [vmem:[#allocation8 + $0x7e0] sm:$0xff]
    %v517 = vld [vmem:[#allocation8 + $0x7e8] sm:$0xff]
    %v518 = vld [vmem:[#allocation8 + $0x7f0] sm:$0xff]
    %v519 = vld [vmem:[#allocation8 + $0x7f8] sm:$0xff]
    %v520 = vld [vmem:[#allocation9] sm:$0xff]
    %v522 = vlaneseq
    %v523 = vshrl.u32 %v522, 7
    %v524 = vsub.s32 0, %v523
    %v525 = vrot.slane %v520, %v524
    %v526 = vlaneseq
    %v527 = vshrl.u32 %v526, 7
    %v528 = vsub.s32 1, %v527
    %v529 = vrot.slane %v520, %v528
    %v530 = vlaneseq
    %v531 = vshrl.u32 %v530, 7
    %v532 = vsub.s32 2, %v531
    %v533 = vrot.slane %v520, %v532
    %v534 = vlaneseq
    %v535 = vshrl.u32 %v534, 7
    %v536 = vsub.s32 3, %v535
    %v537 = vrot.slane %v520, %v536
    %v538 = vlaneseq
    %v539 = vshrl.u32 %v538, 7
    %v540 = vsub.s32 4, %v539
    %v541 = vrot.slane %v520, %v540
    %v542 = vlaneseq
    %v543 = vshrl.u32 %v542, 7
    %v544 = vsub.s32 5, %v543
    %v545 = vrot.slane %v520, %v544
    %v546 = vlaneseq
    %v547 = vshrl.u32 %v546, 7
    %v548 = vsub.s32 6, %v547
    %v549 = vrot.slane %v520, %v548
    %v550 = vlaneseq
    %v551 = vshrl.u32 %v550, 7
    %v552 = vsub.s32 7, %v551
    %v553 = vrot.slane %v520, %v552
    %562 = vmatprep.subr.mxu0 %v385
    %563 = vmatpush1.msra.mxu0 %v384
    %564 = vmatprep.subr.mxu0 %v377
    %565 = vmatpush1.msra.mxu0 %v376
    %566 = vmatprep.subr.mxu0 %v369
    %567 = vmatpush1.msra.mxu0 %v368
    %568 = vmatprep.subr.mxu0 %v361
    %569 = vmatpush1.msra.mxu0 %v360
    %570 = vmatprep.subr.mxu0 %v353
    %571 = vmatpush1.msra.mxu0 %v352
    %572 = vmatprep.subr.mxu0 %v345
    %573 = vmatpush1.msra.mxu0 %v344
    %574 = vmatprep.subr.mxu0 %v337
    %575 = vmatpush1.msra.mxu0 %v336
    %576 = vmatprep.subr.mxu0 %v329
    %577 = vmatpush1.msra.mxu0 %v328
    %578 = vmatprep.subr.mxu0 %v321
    %579 = vmatpush1.msra.mxu0 %v320
    %580 = vmatprep.subr.mxu0 %v313
    %581 = vmatpush1.msra.mxu0 %v312
    %582 = vmatprep.subr.mxu0 %v305
    %583 = vmatpush1.msra.mxu0 %v304
    %584 = vmatprep.subr.mxu0 %v297
    %585 = vmatpush1.msra.mxu0 %v296
    %586 = vmatprep.subr.mxu0 %v289
    %587 = vmatpush1.msra.mxu0 %v288
    %588 = vmatprep.subr.mxu0 %v281
    %589 = vmatpush1.msra.mxu0 %v280
    %590 = vmatprep.subr.mxu0 %v273
    %591 = vmatpush1.msra.mxu0 %v272
    %592 = vmatprep.subr.mxu0 %v265
    %593 = vmatpush1.msra.mxu0 %v264
    %594 = vmatprep.subr.mxu0 %v513
    %595 = vmatpush2.msra.mxu0 %v512
    %596 = vmatprep.subr.mxu0 %v505
    %597 = vmatpush2.msra.mxu0 %v504
    %598 = vmatprep.subr.mxu0 %v497
    %599 = vmatpush2.msra.mxu0 %v496
    %600 = vmatprep.subr.mxu0 %v489
    %601 = vmatpush2.msra.mxu0 %v488
    %602 = vmatprep.subr.mxu0 %v481
    %603 = vmatpush2.msra.mxu0 %v480
    %604 = vmatprep.subr.mxu0 %v473
    %605 = vmatpush2.msra.mxu0 %v472
    %606 = vmatprep.subr.mxu0 %v465
    %607 = vmatpush2.msra.mxu0 %v464
    %608 = vmatprep.subr.mxu0 %v457
    %609 = vmatpush2.msra.mxu0 %v456
    %610 = vmatprep.subr.mxu0 %v449
    %611 = vmatpush2.msra.mxu0 %v448
    %612 = vmatprep.subr.mxu0 %v441
    %613 = vmatpush2.msra.mxu0 %v440
    %614 = vmatprep.subr.mxu0 %v433
    %615 = vmatpush2.msra.mxu0 %v432
    %616 = vmatprep.subr.mxu0 %v425
    %617 = vmatpush2.msra.mxu0 %v424
    %618 = vmatprep.subr.mxu0 %v417
    %619 = vmatpush2.msra.mxu0 %v416
    %620 = vmatprep.subr.mxu0 %v409
    %621 = vmatpush2.msra.mxu0 %v408
    %622 = vmatprep.subr.mxu0 %v401
    %623 = vmatpush2.msra.mxu0 %v400
    %624 = vmatprep.subr.mxu0 %v393
    %625 = vmatpush2.msra.mxu0 %v392
    %626 = vmatprep.mubr.f32.mxu0 %v262
    %627 = vmatmul.mubr.f32.gmra.mxu0 %v260
    %v628 = vpop.f32.mrf.mxu0
    %v629 = vadd.f32 %v525, %v628
    %v630 = vpop.f32.mrf.mxu0
    %v631 = vadd.f32 %v529, %v630
    %632 = vdwg.mxu0
    %633 = vmatprep.subr.mxu0 %v387
    %634 = vmatpush1.msra.mxu0 %v386
    %635 = vmatprep.subr.mxu0 %v379
    %636 = vmatpush1.msra.mxu0 %v378
    %637 = vmatprep.subr.mxu0 %v371
    %638 = vmatpush1.msra.mxu0 %v370
    %639 = vmatprep.subr.mxu0 %v363
    %640 = vmatpush1.msra.mxu0 %v362
    %641 = vmatprep.subr.mxu0 %v355
    %642 = vmatpush1.msra.mxu0 %v354
    %643 = vmatprep.subr.mxu0 %v347
    %644 = vmatpush1.msra.mxu0 %v346
    %645 = vmatprep.subr.mxu0 %v339
    %646 = vmatpush1.msra.mxu0 %v338
    %647 = vmatprep.subr.mxu0 %v331
    %648 = vmatpush1.msra.mxu0 %v330
    %649 = vmatprep.subr.mxu0 %v323
    %650 = vmatpush1.msra.mxu0 %v322
    %651 = vmatprep.subr.mxu0 %v315
    %652 = vmatpush1.msra.mxu0 %v314
    %653 = vmatprep.subr.mxu0 %v307
    %654 = vmatpush1.msra.mxu0 %v306
    %655 = vmatprep.subr.mxu0 %v299
    %656 = vmatpush1.msra.mxu0 %v298
    %657 = vmatprep.subr.mxu0 %v291
    %658 = vmatpush1.msra.mxu0 %v290
    %659 = vmatprep.subr.mxu0 %v283
    %660 = vmatpush1.msra.mxu0 %v282
    %661 = vmatprep.subr.mxu0 %v275
    %662 = vmatpush1.msra.mxu0 %v274
    %663 = vmatprep.subr.mxu0 %v267
    %664 = vmatpush1.msra.mxu0 %v266
    %665 = vmatprep.subr.mxu0 %v515
    %666 = vmatpush2.msra.mxu0 %v514
    %667 = vmatprep.subr.mxu0 %v507
    %668 = vmatpush2.msra.mxu0 %v506
    %669 = vmatprep.subr.mxu0 %v499
    %670 = vmatpush2.msra.mxu0 %v498
    %671 = vmatprep.subr.mxu0 %v491
    %672 = vmatpush2.msra.mxu0 %v490
    %673 = vmatprep.subr.mxu0 %v483
    %674 = vmatpush2.msra.mxu0 %v482
    %675 = vmatprep.subr.mxu0 %v475
    %676 = vmatpush2.msra.mxu0 %v474
    %677 = vmatprep.subr.mxu0 %v467
    %678 = vmatpush2.msra.mxu0 %v466
    %679 = vmatprep.subr.mxu0 %v459
    %680 = vmatpush2.msra.mxu0 %v458
    %681 = vmatprep.subr.mxu0 %v451
    %682 = vmatpush2.msra.mxu0 %v450
    %683 = vmatprep.subr.mxu0 %v443
    %684 = vmatpush2.msra.mxu0 %v442
    %685 = vmatprep.subr.mxu0 %v435
    %686 = vmatpush2.msra.mxu0 %v434
    %687 = vmatprep.subr.mxu0 %v427
    %688 = vmatpush2.msra.mxu0 %v426
    %689 = vmatprep.subr.mxu0 %v419
    %690 = vmatpush2.msra.mxu0 %v418
    %691 = vmatprep.subr.mxu0 %v411
    %692 = vmatpush2.msra.mxu0 %v410
    %693 = vmatprep.subr.mxu0 %v403
    %694 = vmatpush2.msra.mxu0 %v402
    %695 = vmatprep.subr.mxu0 %v395
    %696 = vmatpush2.msra.mxu0 %v394
    %697 = vmatprep.mubr.f32.mxu0 %v262
    %698 = vmatmul.mubr.f32.gmra.mxu0 %v260
    %v699 = vpop.f32.mrf.mxu0
    %v700 = vadd.f32 %v533, %v699
    %v701 = vpop.f32.mrf.mxu0
    %v702 = vadd.f32 %v537, %v701
    %703 = vdwg.mxu0
    %704 = vmatprep.subr.mxu0 %v389
    %705 = vmatpush1.msra.mxu0 %v388
    %706 = vmatprep.subr.mxu0 %v381
    %707 = vmatpush1.msra.mxu0 %v380
    %708 = vmatprep.subr.mxu0 %v373
    %709 = vmatpush1.msra.mxu0 %v372
    %710 = vmatprep.subr.mxu0 %v365
    %711 = vmatpush1.msra.mxu0 %v364
    %712 = vmatprep.subr.mxu0 %v357
    %713 = vmatpush1.msra.mxu0 %v356
    %714 = vmatprep.subr.mxu0 %v349
    %715 = vmatpush1.msra.mxu0 %v348
    %716 = vmatprep.subr.mxu0 %v341
    %717 = vmatpush1.msra.mxu0 %v340
    %718 = vmatprep.subr.mxu0 %v333
    %719 = vmatpush1.msra.mxu0 %v332
    %720 = vmatprep.subr.mxu0 %v325
    %721 = vmatpush1.msra.mxu0 %v324
    %722 = vmatprep.subr.mxu0 %v317
    %723 = vmatpush1.msra.mxu0 %v316
    %724 = vmatprep.subr.mxu0 %v309
    %725 = vmatpush1.msra.mxu0 %v308
    %726 = vmatprep.subr.mxu0 %v301
    %727 = vmatpush1.msra.mxu0 %v300
    %728 = vmatprep.subr.mxu0 %v293
    %729 = vmatpush1.msra.mxu0 %v292
    %730 = vmatprep.subr.mxu0 %v285
    %731 = vmatpush1.msra.mxu0 %v284
    %732 = vmatprep.subr.mxu0 %v277
    %733 = vmatpush1.msra.mxu0 %v276
    %734 = vmatprep.subr.mxu0 %v269
    %735 = vmatpush1.msra.mxu0 %v268
    %736 = vmatprep.subr.mxu0 %v517
    %737 = vmatpush2.msra.mxu0 %v516
    %738 = vmatprep.subr.mxu0 %v509
    %739 = vmatpush2.msra.mxu0 %v508
    %740 = vmatprep.subr.mxu0 %v501
    %741 = vmatpush2.msra.mxu0 %v500
    %742 = vmatprep.subr.mxu0 %v493
    %743 = vmatpush2.msra.mxu0 %v492
    %744 = vmatprep.subr.mxu0 %v485
    %745 = vmatpush2.msra.mxu0 %v484
    %746 = vmatprep.subr.mxu0 %v477
    %747 = vmatpush2.msra.mxu0 %v476
    %748 = vmatprep.subr.mxu0 %v469
    %749 = vmatpush2.msra.mxu0 %v468
    %750 = vmatprep.subr.mxu0 %v461
    %751 = vmatpush2.msra.mxu0 %v460
    %752 = vmatprep.subr.mxu0 %v453
    %753 = vmatpush2.msra.mxu0 %v452
    %754 = vmatprep.subr.mxu0 %v445
    %755 = vmatpush2.msra.mxu0 %v444
    %756 = vmatprep.subr.mxu0 %v437
    %757 = vmatpush2.msra.mxu0 %v436
    %758 = vmatprep.subr.mxu0 %v429
    %759 = vmatpush2.msra.mxu0 %v428
    %760 = vmatprep.subr.mxu0 %v421
    %761 = vmatpush2.msra.mxu0 %v420
    %762 = vmatprep.subr.mxu0 %v413
    %763 = vmatpush2.msra.mxu0 %v412
    %764 = vmatprep.subr.mxu0 %v405
    %765 = vmatpush2.msra.mxu0 %v404
    %766 = vmatprep.subr.mxu0 %v397
    %767 = vmatpush2.msra.mxu0 %v396
    %768 = vmatprep.mubr.f32.mxu0 %v262
    %769 = vmatmul.mubr.f32.gmra.mxu0 %v260
    %v770 = vpop.f32.mrf.mxu0
    %v771 = vadd.f32 %v541, %v770
    %v772 = vpop.f32.mrf.mxu0
    %v773 = vadd.f32 %v545, %v772
    %774 = vdwg.mxu0
    %775 = vmatprep.subr.mxu0 %v391
    %776 = vmatpush1.msra.mxu0 %v390
    %777 = vmatprep.subr.mxu0 %v383
    %778 = vmatpush1.msra.mxu0 %v382
    %779 = vmatprep.subr.mxu0 %v375
    %780 = vmatpush1.msra.mxu0 %v374
    %781 = vmatprep.subr.mxu0 %v367
    %782 = vmatpush1.msra.mxu0 %v366
    %783 = vmatprep.subr.mxu0 %v359
    %784 = vmatpush1.msra.mxu0 %v358
    %785 = vmatprep.subr.mxu0 %v351
    %786 = vmatpush1.msra.mxu0 %v350
    %787 = vmatprep.subr.mxu0 %v343
    %788 = vmatpush1.msra.mxu0 %v342
    %789 = vmatprep.subr.mxu0 %v335
    %790 = vmatpush1.msra.mxu0 %v334
    %791 = vmatprep.subr.mxu0 %v327
    %792 = vmatpush1.msra.mxu0 %v326
    %793 = vmatprep.subr.mxu0 %v319
    %794 = vmatpush1.msra.mxu0 %v318
    %795 = vmatprep.subr.mxu0 %v311
    %796 = vmatpush1.msra.mxu0 %v310
    %797 = vmatprep.subr.mxu0 %v303
    %798 = vmatpush1.msra.mxu0 %v302
    %799 = vmatprep.subr.mxu0 %v295
    %800 = vmatpush1.msra.mxu0 %v294
    %801 = vmatprep.subr.mxu0 %v287
    %802 = vmatpush1.msra.mxu0 %v286
    %803 = vmatprep.subr.mxu0 %v279
    %804 = vmatpush1.msra.mxu0 %v278
    %805 = vmatprep.subr.mxu0 %v271
    %806 = vmatpush1.msra.mxu0 %v270
    %807 = vmatprep.subr.mxu0 %v519
    %808 = vmatpush2.msra.mxu0 %v518
    %809 = vmatprep.subr.mxu0 %v511
    %810 = vmatpush2.msra.mxu0 %v510
    %811 = vmatprep.subr.mxu0 %v503
    %812 = vmatpush2.msra.mxu0 %v502
    %813 = vmatprep.subr.mxu0 %v495
    %814 = vmatpush2.msra.mxu0 %v494
    %815 = vmatprep.subr.mxu0 %v487
    %816 = vmatpush2.msra.mxu0 %v486
    %817 = vmatprep.subr.mxu0 %v479
    %818 = vmatpush2.msra.mxu0 %v478
    %819 = vmatprep.subr.mxu0 %v471
    %820 = vmatpush2.msra.mxu0 %v470
    %821 = vmatprep.subr.mxu0 %v463
    %822 = vmatpush2.msra.mxu0 %v462
    %823 = vmatprep.subr.mxu0 %v455
    %824 = vmatpush2.msra.mxu0 %v454
    %825 = vmatprep.subr.mxu0 %v447
    %826 = vmatpush2.msra.mxu0 %v446
    %827 = vmatprep.subr.mxu0 %v439
    %828 = vmatpush2.msra.mxu0 %v438
    %829 = vmatprep.subr.mxu0 %v431
    %830 = vmatpush2.msra.mxu0 %v430
    %831 = vmatprep.subr.mxu0 %v423
    %832 = vmatpush2.msra.mxu0 %v422
    %833 = vmatprep.subr.mxu0 %v415
    %834 = vmatpush2.msra.mxu0 %v414
    %835 = vmatprep.subr.mxu0 %v407
    %836 = vmatpush2.msra.mxu0 %v406
    %837 = vmatprep.subr.mxu0 %v399
    %838 = vmatpush2.msra.mxu0 %v398
    %839 = vmatprep.mubr.f32.mxu0 %v262
    %840 = vmatmul.mubr.f32.gmra.mxu0 %v260
    %v841 = vpop.f32.mrf.mxu0
    %v842 = vadd.f32 %v549, %v841
    %v843 = vpop.f32.mrf.mxu0
    %v844 = vadd.f32 %v553, %v843
    %845 = vdwg.mxu0
    %s846 = smul.u32 0, 4
    %v855 = vcombine.low %v629, %v631
    %v856 = vcombine.low %v700, %v702
    %v857 = vcombine.low %v771, %v773
    %v858 = vcombine.low %v842, %v844
    %s863 = sshra.s32 %s846, 2
    %s864 = sand.u32 %s846, 3
    %s865 = smul.u32 %s863, 8
    %s866 = smul.addr %s865, 4
    %s867 = scalar_lea.vmem [#allocation2], %s866
    %868 = vst [vmem:[%s867] sm:$0xff] %v855
    %869 = vst [vmem:[%s867 + $0x8] sm:$0xff] %v856
    %870 = vst [vmem:[%s867 + $0x10] sm:$0xff] %v857
    %871 = vst [vmem:[%s867 + $0x18] sm:$0xff] %v858
    %p872 = scmp.eq.s32.totalorder 0, 0
    // Predicated region
    $region70: #{tpu_custom_call.1} parent=1 // pred_check
      %p873 = pneg %p872
    $region71: #{tpu_custom_call.1} parent=1 // pred_check_branch
      %875 = sbr.rel (%p873) target = $region73
    $region72: #{tpu_custom_call.1} parent=1 // pred_region
      %v876 = vld [vmem:[#allocation2] sm:$0xff]
      %v877 = vld [vmem:[#allocation2 + $0x8] sm:$0xff]
      %v878 = vld [vmem:[#allocation2 + $0x10] sm:$0xff]
      %v879 = vld [vmem:[#allocation2 + $0x18] sm:$0xff]
      %v884 = vcombine.high %v876, %v876
      %v885 = vcombine.high %v877, %v877
      %v886 = vcombine.high %v878, %v878
      %v887 = vcombine.high %v879, %v879
      %vm892 = vcmask 1043456
      %v893 = vsel %vm892, %v876, 0.0
      %v894 = vrot.slane %v893, 4
      %v895 = vadd.f32 %v893, %v894
      %v896 = vrot.slane %v895, 2
      %v897 = vadd.f32 %v895, %v896
      %v898 = vrot.slane %v897, 1
      %v899 = vadd.f32 %v897, %v898
      %v900 = vsel %vm892, %v884, 0.0
      %v901 = vrot.slane %v900, 4
      %v902 = vadd.f32 %v900, %v901
      %v903 = vrot.slane %v902, 2
      %v904 = vadd.f32 %v902, %v903
      %v905 = vrot.slane %v904, 1
      %v906 = vadd.f32 %v904, %v905
      %v907 = vsel %vm892, %v877, 0.0
      %v908 = vrot.slane %v907, 4
      %v909 = vadd.f32 %v907, %v908
      %v910 = vrot.slane %v909, 2
      %v911 = vadd.f32 %v909, %v910
      %v912 = vrot.slane %v911, 1
      %v913 = vadd.f32 %v911, %v912
      %v914 = vsel %vm892, %v885, 0.0
      %v915 = vrot.slane %v914, 4
      %v916 = vadd.f32 %v914, %v915
      %v917 = vrot.slane %v916, 2
      %v918 = vadd.f32 %v916, %v917
      %v919 = vrot.slane %v918, 1
      %v920 = vadd.f32 %v918, %v919
      %v921 = vsel %vm892, %v878, 0.0
      %v922 = vrot.slane %v921, 4
      %v923 = vadd.f32 %v921, %v922
      %v924 = vrot.slane %v923, 2
      %v925 = vadd.f32 %v923, %v924
      %v926 = vrot.slane %v925, 1
      %v927 = vadd.f32 %v925, %v926
      %v928 = vsel %vm892, %v886, 0.0
      %v929 = vrot.slane %v928, 4
      %v930 = vadd.f32 %v928, %v929
      %v931 = vrot.slane %v930, 2
      %v932 = vadd.f32 %v930, %v931
      %v933 = vrot.slane %v932, 1
      %v934 = vadd.f32 %v932, %v933
      %v935 = vsel %vm892, %v879, 0.0
      %v936 = vrot.slane %v935, 4
      %v937 = vadd.f32 %v935, %v936
      %v938 = vrot.slane %v937, 2
      %v939 = vadd.f32 %v937, %v938
      %v940 = vrot.slane %v939, 1
      %v941 = vadd.f32 %v939, %v940
      %v942 = vsel %vm892, %v887, 0.0
      %v943 = vrot.slane %v942, 4
      %v944 = vadd.f32 %v942, %v943
      %v945 = vrot.slane %v944, 2
      %v946 = vadd.f32 %v944, %v945
      %v947 = vrot.slane %v946, 1
      %v948 = vadd.f32 %v946, %v947
      %v949 = vrcp.pop 4.0
      %v950 = vmul.f32 %v899, %v949
      %v951 = vmul.f32 %v906, %v949
      %v952 = vmul.f32 %v913, %v949
      %v953 = vmul.f32 %v920, %v949
      %v954 = vmul.f32 %v927, %v949
      %v955 = vmul.f32 %v934, %v949
      %v956 = vmul.f32 %v941, %v949
      %v957 = vmul.f32 %v948, %v949
      %v966 = vcombine.low %v950, %v951
      %v967 = vcombine.low %v952, %v953
      %v968 = vcombine.low %v954, %v955
      %v969 = vcombine.low %v956, %v957
      %v974 = vsub.f32 %v876, %v966
      %v975 = vsub.f32 %v877, %v967
      %v976 = vsub.f32 %v878, %v968
      %v977 = vsub.f32 %v879, %v969
      %v978 = vmul.f32 %v974, %v974
      %v979 = vmul.f32 %v975, %v975
      %v980 = vmul.f32 %v976, %v976
      %v981 = vmul.f32 %v977, %v977
      %v986 = vcombine.high %v978, %v978
      %v987 = vcombine.high %v979, %v979
      %v988 = vcombine.high %v980, %v980
      %v989 = vcombine.high %v981, %v981
      %v994 = vsel %vm892, %v978, 0.0
      %v995 = vrot.slane %v994, 4
      %v996 = vadd.f32 %v994, %v995
      %v997 = vrot.slane %v996, 2
      %v998 = vadd.f32 %v996, %v997
      %v999 = vrot.slane %v998, 1
      %v1000 = vadd.f32 %v998, %v999
      %v1001 = vsel %vm892, %v986, 0.0
      %v1002 = vrot.slane %v1001, 4
      %v1003 = vadd.f32 %v1001, %v1002
      %v1004 = vrot.slane %v1003, 2
      %v1005 = vadd.f32 %v1003, %v1004
      %v1006 = vrot.slane %v1005, 1
      %v1007 = vadd.f32 %v1005, %v1006
      %v1008 = vsel %vm892, %v979, 0.0
      %v1009 = vrot.slane %v1008, 4
      %v1010 = vadd.f32 %v1008, %v1009
      %v1011 = vrot.slane %v1010, 2
      %v1012 = vadd.f32 %v1010, %v1011
      %v1013 = vrot.slane %v1012, 1
      %v1014 = vadd.f32 %v1012, %v1013
      %v1015 = vsel %vm892, %v987, 0.0
      %v1016 = vrot.slane %v1015, 4
      %v1017 = vadd.f32 %v1015, %v1016
      %v1018 = vrot.slane %v1017, 2
      %v1019 = vadd.f32 %v1017, %v1018
      %v1020 = vrot.slane %v1019, 1
      %v1021 = vadd.f32 %v1019, %v1020
      %v1022 = vsel %vm892, %v980, 0.0
      %v1023 = vrot.slane %v1022, 4
      %v1024 = vadd.f32 %v1022, %v1023
      %v1025 = vrot.slane %v1024, 2
      %v1026 = vadd.f32 %v1024, %v1025
      %v1027 = vrot.slane %v1026, 1
      %v1028 = vadd.f32 %v1026, %v1027
      %v1029 = vsel %vm892, %v988, 0.0
      %v1030 = vrot.slane %v1029, 4
      %v1031 = vadd.f32 %v1029, %v1030
      %v1032 = vrot.slane %v1031, 2
      %v1033 = vadd.f32 %v1031, %v1032
      %v1034 = vrot.slane %v1033, 1
      %v1035 = vadd.f32 %v1033, %v1034
      %v1036 = vsel %vm892, %v981, 0.0
      %v1037 = vrot.slane %v1036, 4
      %v1038 = vadd.f32 %v1036, %v1037
      %v1039 = vrot.slane %v1038, 2
      %v1040 = vadd.f32 %v1038, %v1039
      %v1041 = vrot.slane %v1040, 1
      %v1042 = vadd.f32 %v1040, %v1041
      %v1043 = vsel %vm892, %v989, 0.0
      %v1044 = vrot.slane %v1043, 4
      %v1045 = vadd.f32 %v1043, %v1044
      %v1046 = vrot.slane %v1045, 2
      %v1047 = vadd.f32 %v1045, %v1046
      %v1048 = vrot.slane %v1047, 1
      %v1049 = vadd.f32 %v1047, %v1048
      %v1050 = vmul.f32 %v1000, %v949
      %v1051 = vmul.f32 %v1007, %v949
      %v1052 = vmul.f32 %v1014, %v949
      %v1053 = vmul.f32 %v1021, %v949
      %v1054 = vmul.f32 %v1028, %v949
      %v1055 = vmul.f32 %v1035, %v949
      %v1056 = vmul.f32 %v1042, %v949
      %v1057 = vmul.f32 %v1049, %v949
      %v1058 = vadd.f32 %v1050, 1e-05
      %v1059 = vadd.f32 %v1051, 1e-05
      %v1060 = vadd.f32 %v1052, 1e-05
      %v1061 = vadd.f32 %v1053, 1e-05
      %v1062 = vadd.f32 %v1054, 1e-05
      %v1063 = vadd.f32 %v1055, 1e-05
      %v1064 = vadd.f32 %v1056, 1e-05
      %v1065 = vadd.f32 %v1057, 1e-05
      %v1066 = vrsqrt.pop %v1058
      %v1067 = vrsqrt.pop %v1059
      %v1068 = vrsqrt.pop %v1060
      %v1069 = vrsqrt.pop %v1061
      %v1070 = vrsqrt.pop %v1062
      %v1071 = vrsqrt.pop %v1063
      %v1072 = vrsqrt.pop %v1064
      %v1073 = vrsqrt.pop %v1065
      %v1082 = vcombine.low %v1066, %v1067
      %v1083 = vcombine.low %v1068, %v1069
      %v1084 = vcombine.low %v1070, %v1071
      %v1085 = vcombine.low %v1072, %v1073
      %v1090 = vmul.f32 %v974, %v1082
      %v1091 = vmul.f32 %v975, %v1083
      %v1092 = vmul.f32 %v976, %v1084
      %v1093 = vmul.f32 %v977, %v1085
      %v1094 = vld [vmem:[#allocation11] sm:$0xff]
      %v1096 = vlaneseq
      %v1097 = vshrl.u32 %v1096, 7
      %v1098 = vsub.s32 0, %v1097
      %v1099 = vrot.slane %v1094, %v1098
      %v1100 = vlaneseq
      %v1101 = vshrl.u32 %v1100, 7
      %v1102 = vsub.s32 1, %v1101
      %v1103 = vrot.slane %v1094, %v1102
      %v1104 = vlaneseq
      %v1105 = vshrl.u32 %v1104, 7
      %v1106 = vsub.s32 2, %v1105
      %v1107 = vrot.slane %v1094, %v1106
      %v1108 = vlaneseq
      %v1109 = vshrl.u32 %v1108, 7
      %v1110 = vsub.s32 3, %v1109
      %v1111 = vrot.slane %v1094, %v1110
      %v1112 = vlaneseq
      %v1113 = vshrl.u32 %v1112, 7
      %v1114 = vsub.s32 4, %v1113
      %v1115 = vrot.slane %v1094, %v1114
      %v1116 = vlaneseq
      %v1117 = vshrl.u32 %v1116, 7
      %v1118 = vsub.s32 5, %v1117
      %v1119 = vrot.slane %v1094, %v1118
      %v1120 = vlaneseq
      %v1121 = vshrl.u32 %v1120, 7
      %v1122 = vsub.s32 6, %v1121
      %v1123 = vrot.slane %v1094, %v1122
      %v1124 = vlaneseq
      %v1125 = vshrl.u32 %v1124, 7
      %v1126 = vsub.s32 7, %v1125
      %v1127 = vrot.slane %v1094, %v1126
      %v1128 = vcombine.low %v1099, %v1103
      %v1129 = vcombine.low %v1107, %v1111
      %v1130 = vcombine.low %v1115, %v1119
      %v1131 = vcombine.low %v1123, %v1127
      %v1136 = vmul.f32 %v1090, %v1128
      %v1137 = vmul.f32 %v1091, %v1129
      %v1138 = vmul.f32 %v1092, %v1130
      %v1139 = vmul.f32 %v1093, %v1131
      %v1140 = vld [vmem:[%s5] sm:$0xff]
      %v1142 = vlaneseq
      %v1143 = vshrl.u32 %v1142, 7
      %v1144 = vsub.s32 0, %v1143
      %v1145 = vrot.slane %v1140, %v1144
      %v1146 = vlaneseq
      %v1147 = vshrl.u32 %v1146, 7
      %v1148 = vsub.s32 1, %v1147
      %v1149 = vrot.slane %v1140, %v1148
      %v1150 = vlaneseq
      %v1151 = vshrl.u32 %v1150, 7
      %v1152 = vsub.s32 2, %v1151
      %v1153 = vrot.slane %v1140, %v1152
      %v1154 = vlaneseq
      %v1155 = vshrl.u32 %v1154, 7
      %v1156 = vsub.s32 3, %v1155
      %v1157 = vrot.slane %v1140, %v1156
      %v1158 = vlaneseq
      %v1159 = vshrl.u32 %v1158, 7
      %v1160 = vsub.s32 4, %v1159
      %v1161 = vrot.slane %v1140, %v1160
      %v1162 = vlaneseq
      %v1163 = vshrl.u32 %v1162, 7
      %v1164 = vsub.s32 5, %v1163
      %v1165 = vrot.slane %v1140, %v1164
      %v1166 = vlaneseq
      %v1167 = vshrl.u32 %v1166, 7
      %v1168 = vsub.s32 6, %v1167
      %v1169 = vrot.slane %v1140, %v1168
      %v1170 = vlaneseq
      %v1171 = vshrl.u32 %v1170, 7
      %v1172 = vsub.s32 7, %v1171
      %v1173 = vrot.slane %v1140, %v1172
      %v1174 = vcombine.low %v1145, %v1149
      %v1175 = vcombine.low %v1153, %v1157
      %v1176 = vcombine.low %v1161, %v1165
      %v1177 = vcombine.low %v1169, %v1173
      %v1182 = vadd.f32 %v1136, %v1174
      %v1183 = vadd.f32 %v1137, %v1175
      %v1184 = vadd.f32 %v1138, %v1176
      %v1185 = vadd.f32 %v1139, %v1177
      %v1186 = vmax.f32 %v1182, 0.0
      %v1187 = vmax.f32 %v1183, 0.0
      %v1188 = vmax.f32 %v1184, 0.0
      %v1189 = vmax.f32 %v1185, 0.0
      %v1194 = vcombine.high %v1186, %v1186
      %v1195 = vcombine.high %v1187, %v1187
      %v1196 = vcombine.high %v1188, %v1188
      %v1197 = vcombine.high %v1189, %v1189
      %v1202 = vpack.c.bf16 %v1186, %v1186
      %v1203 = vpack.c.bf16 %v1194, %v1194
      %v1204 = vpack.c.bf16 %v1187, %v1187
      %v1205 = vpack.c.bf16 %v1195, %v1195
      %v1206 = vpack.c.bf16 %v1188, %v1188
      %v1207 = vpack.c.bf16 %v1196, %v1196
      %v1208 = vpack.c.bf16 %v1189, %v1189
      %v1209 = vpack.c.bf16 %v1197, %v1197
      %v1210 = vld [vmem:[#allocation12] sm:$0xff]
      %v1211 = vld [vmem:[#allocation12 + $0x8] sm:$0xff]
      %v1212 = vld [vmem:[#allocation12 + $0x10] sm:$0xff]
      %v1213 = vld [vmem:[#allocation12 + $0x18] sm:$0xff]
      %v1214 = vld [vmem:[#allocation12 + $0x20] sm:$0xff]
      %v1215 = vld [vmem:[#allocation12 + $0x28] sm:$0xff]
      %v1216 = vld [vmem:[#allocation12 + $0x30] sm:$0xff]
      %v1217 = vld [vmem:[#allocation12 + $0x38] sm:$0xff]
      %v1218 = vld [vmem:[#allocation12 + $0x40] sm:$0xff]
      %v1219 = vld [vmem:[#allocation12 + $0x48] sm:$0xff]
      %v1220 = vld [vmem:[#allocation12 + $0x50] sm:$0xff]
      %v1221 = vld [vmem:[#allocation12 + $0x58] sm:$0xff]
      %v1222 = vld [vmem:[#allocation12 + $0x60] sm:$0xff]
      %v1223 = vld [vmem:[#allocation12 + $0x68] sm:$0xff]
      %v1224 = vld [vmem:[#allocation12 + $0x70] sm:$0xff]
      %v1225 = vld [vmem:[#allocation12 + $0x78] sm:$0xff]
      %v1226 = vld [vmem:[#allocation12 + $0x80] sm:$0xff]
      %v1227 = vld [vmem:[#allocation12 + $0x88] sm:$0xff]
      %v1228 = vld [vmem:[#allocation12 + $0x90] sm:$0xff]
      %v1229 = vld [vmem:[#allocation12 + $0x98] sm:$0xff]
      %v1230 = vld [vmem:[#allocation12 + $0xa0] sm:$0xff]
      %v1231 = vld [vmem:[#allocation12 + $0xa8] sm:$0xff]
      %v1232 = vld [vmem:[#allocation12 + $0xb0] sm:$0xff]
      %v1233 = vld [vmem:[#allocation12 + $0xb8] sm:$0xff]
      %v1234 = vld [vmem:[#allocation12 + $0xc0] sm:$0xff]
      %v1235 = vld [vmem:[#allocation12 + $0xc8] sm:$0xff]
      %v1236 = vld [vmem:[#allocation12 + $0xd0] sm:$0xff]
      %v1237 = vld [vmem:[#allocation12 + $0xd8] sm:$0xff]
      %v1238 = vld [vmem:[#allocation12 + $0xe0] sm:$0xff]
      %v1239 = vld [vmem:[#allocation12 + $0xe8] sm:$0xff]
      %v1240 = vld [vmem:[#allocation12 + $0xf0] sm:$0xff]
      %v1241 = vld [vmem:[#allocation12 + $0xf8] sm:$0xff]
      %v1242 = vld [vmem:[#allocation12 + $0x100] sm:$0xff]
      %v1243 = vld [vmem:[#allocation12 + $0x108] sm:$0xff]
      %v1244 = vld [vmem:[#allocation12 + $0x110] sm:$0xff]
      %v1245 = vld [vmem:[#allocation12 + $0x118] sm:$0xff]
      %v1246 = vld [vmem:[#allocation12 + $0x120] sm:$0xff]
      %v1247 = vld [vmem:[#allocation12 + $0x128] sm:$0xff]
      %v1248 = vld [vmem:[#allocation12 + $0x130] sm:$0xff]
      %v1249 = vld [vmem:[#allocation12 + $0x138] sm:$0xff]
      %v1250 = vld [vmem:[#allocation12 + $0x140] sm:$0xff]
      %v1251 = vld [vmem:[#allocation12 + $0x148] sm:$0xff]
      %v1252 = vld [vmem:[#allocation12 + $0x150] sm:$0xff]
      %v1253 = vld [vmem:[#allocation12 + $0x158] sm:$0xff]
      %v1254 = vld [vmem:[#allocation12 + $0x160] sm:$0xff]
      %v1255 = vld [vmem:[#allocation12 + $0x168] sm:$0xff]
      %v1256 = vld [vmem:[#allocation12 + $0x170] sm:$0xff]
      %v1257 = vld [vmem:[#allocation12 + $0x178] sm:$0xff]
      %v1258 = vld [vmem:[#allocation12 + $0x180] sm:$0xff]
      %v1259 = vld [vmem:[#allocation12 + $0x188] sm:$0xff]
      %v1260 = vld [vmem:[#allocation12 + $0x190] sm:$0xff]
      %v1261 = vld [vmem:[#allocation12 + $0x198] sm:$0xff]
      %v1262 = vld [vmem:[#allocation12 + $0x1a0] sm:$0xff]
      %v1263 = vld [vmem:[#allocation12 + $0x1a8] sm:$0xff]
      %v1264 = vld [vmem:[#allocation12 + $0x1b0] sm:$0xff]
      %v1265 = vld [vmem:[#allocation12 + $0x1b8] sm:$0xff]
      %v1266 = vld [vmem:[#allocation12 + $0x1c0] sm:$0xff]
      %v1267 = vld [vmem:[#allocation12 + $0x1c8] sm:$0xff]
      %v1268 = vld [vmem:[#allocation12 + $0x1d0] sm:$0xff]
      %v1269 = vld [vmem:[#allocation12 + $0x1d8] sm:$0xff]
      %v1270 = vld [vmem:[#allocation12 + $0x1e0] sm:$0xff]
      %v1271 = vld [vmem:[#allocation12 + $0x1e8] sm:$0xff]
      %v1272 = vld [vmem:[#allocation12 + $0x1f0] sm:$0xff]
      %v1273 = vld [vmem:[#allocation12 + $0x1f8] sm:$0xff]
      %v1274 = vld [vmem:[#allocation12 + $0x200] sm:$0xff]
      %v1275 = vld [vmem:[#allocation12 + $0x208] sm:$0xff]
      %v1276 = vld [vmem:[#allocation12 + $0x210] sm:$0xff]
      %v1277 = vld [vmem:[#allocation12 + $0x218] sm:$0xff]
      %v1278 = vld [vmem:[#allocation12 + $0x220] sm:$0xff]
      %v1279 = vld [vmem:[#allocation12 + $0x228] sm:$0xff]
      %v1280 = vld [vmem:[#allocation12 + $0x230] sm:$0xff]
      %v1281 = vld [vmem:[#allocation12 + $0x238] sm:$0xff]
      %v1282 = vld [vmem:[#allocation12 + $0x240] sm:$0xff]
      %v1283 = vld [vmem:[#allocation12 + $0x248] sm:$0xff]
      %v1284 = vld [vmem:[#allocation12 + $0x250] sm:$0xff]
      %v1285 = vld [vmem:[#allocation12 + $0x258] sm:$0xff]
      %v1286 = vld [vmem:[#allocation12 + $0x260] sm:$0xff]
      %v1287 = vld [vmem:[#allocation12 + $0x268] sm:$0xff]
      %v1288 = vld [vmem:[#allocation12 + $0x270] sm:$0xff]
      %v1289 = vld [vmem:[#allocation12 + $0x278] sm:$0xff]
      %v1290 = vld [vmem:[#allocation12 + $0x280] sm:$0xff]
      %v1291 = vld [vmem:[#allocation12 + $0x288] sm:$0xff]
      %v1292 = vld [vmem:[#allocation12 + $0x290] sm:$0xff]
      %v1293 = vld [vmem:[#allocation12 + $0x298] sm:$0xff]
      %v1294 = vld [vmem:[#allocation12 + $0x2a0] sm:$0xff]
      %v1295 = vld [vmem:[#allocation12 + $0x2a8] sm:$0xff]
      %v1296 = vld [vmem:[#allocation12 + $0x2b0] sm:$0xff]
      %v1297 = vld [vmem:[#allocation12 + $0x2b8] sm:$0xff]
      %v1298 = vld [vmem:[#allocation12 + $0x2c0] sm:$0xff]
      %v1299 = vld [vmem:[#allocation12 + $0x2c8] sm:$0xff]
      %v1300 = vld [vmem:[#allocation12 + $0x2d0] sm:$0xff]
      %v1301 = vld [vmem:[#allocation12 + $0x2d8] sm:$0xff]
      %v1302 = vld [vmem:[#allocation12 + $0x2e0] sm:$0xff]
      %v1303 = vld [vmem:[#allocation12 + $0x2e8] sm:$0xff]
      %v1304 = vld [vmem:[#allocation12 + $0x2f0] sm:$0xff]
      %v1305 = vld [vmem:[#allocation12 + $0x2f8] sm:$0xff]
      %v1306 = vld [vmem:[#allocation12 + $0x300] sm:$0xff]
      %v1307 = vld [vmem:[#allocation12 + $0x308] sm:$0xff]
      %v1308 = vld [vmem:[#allocation12 + $0x310] sm:$0xff]
      %v1309 = vld [vmem:[#allocation12 + $0x318] sm:$0xff]
      %v1310 = vld [vmem:[#allocation12 + $0x320] sm:$0xff]
      %v1311 = vld [vmem:[#allocation12 + $0x328] sm:$0xff]
      %v1312 = vld [vmem:[#allocation12 + $0x330] sm:$0xff]
      %v1313 = vld [vmem:[#allocation12 + $0x338] sm:$0xff]
      %v1314 = vld [vmem:[#allocation12 + $0x340] sm:$0xff]
      %v1315 = vld [vmem:[#allocation12 + $0x348] sm:$0xff]
      %v1316 = vld [vmem:[#allocation12 + $0x350] sm:$0xff]
      %v1317 = vld [vmem:[#allocation12 + $0x358] sm:$0xff]
      %v1318 = vld [vmem:[#allocation12 + $0x360] sm:$0xff]
      %v1319 = vld [vmem:[#allocation12 + $0x368] sm:$0xff]
      %v1320 = vld [vmem:[#allocation12 + $0x370] sm:$0xff]
      %v1321 = vld [vmem:[#allocation12 + $0x378] sm:$0xff]
      %v1322 = vld [vmem:[#allocation12 + $0x380] sm:$0xff]
      %v1323 = vld [vmem:[#allocation12 + $0x388] sm:$0xff]
      %v1324 = vld [vmem:[#allocation12 + $0x390] sm:$0xff]
      %v1325 = vld [vmem:[#allocation12 + $0x398] sm:$0xff]
      %v1326 = vld [vmem:[#allocation12 + $0x3a0] sm:$0xff]
      %v1327 = vld [vmem:[#allocation12 + $0x3a8] sm:$0xff]
      %v1328 = vld [vmem:[#allocation12 + $0x3b0] sm:$0xff]
      %v1329 = vld [vmem:[#allocation12 + $0x3b8] sm:$0xff]
      %v1330 = vld [vmem:[#allocation12 + $0x3c0] sm:$0xff]
      %v1331 = vld [vmem:[#allocation12 + $0x3c8] sm:$0xff]
      %v1332 = vld [vmem:[#allocation12 + $0x3d0] sm:$0xff]
      %v1333 = vld [vmem:[#allocation12 + $0x3d8] sm:$0xff]
      %v1334 = vld [vmem:[#allocation12 + $0x3e0] sm:$0xff]
      %v1335 = vld [vmem:[#allocation12 + $0x3e8] sm:$0xff]
      %v1336 = vld [vmem:[#allocation12 + $0x3f0] sm:$0xff]
      %v1337 = vld [vmem:[#allocation12 + $0x3f8] sm:$0xff]
      %v1338 = vld [vmem:[#allocation12 + $0x400] sm:$0xff]
      %v1339 = vld [vmem:[#allocation12 + $0x408] sm:$0xff]
      %v1340 = vld [vmem:[#allocation12 + $0x410] sm:$0xff]
      %v1341 = vld [vmem:[#allocation12 + $0x418] sm:$0xff]
      %v1342 = vld [vmem:[#allocation12 + $0x420] sm:$0xff]
      %v1343 = vld [vmem:[#allocation12 + $0x428] sm:$0xff]
      %v1344 = vld [vmem:[#allocation12 + $0x430] sm:$0xff]
      %v1345 = vld [vmem:[#allocation12 + $0x438] sm:$0xff]
      %v1346 = vld [vmem:[#allocation12 + $0x440] sm:$0xff]
      %v1347 = vld [vmem:[#allocation12 + $0x448] sm:$0xff]
      %v1348 = vld [vmem:[#allocation12 + $0x450] sm:$0xff]
      %v1349 = vld [vmem:[#allocation12 + $0x458] sm:$0xff]
      %v1350 = vld [vmem:[#allocation12 + $0x460] sm:$0xff]
      %v1351 = vld [vmem:[#allocation12 + $0x468] sm:$0xff]
      %v1352 = vld [vmem:[#allocation12 + $0x470] sm:$0xff]
      %v1353 = vld [vmem:[#allocation12 + $0x478] sm:$0xff]
      %v1354 = vld [vmem:[#allocation12 + $0x480] sm:$0xff]
      %v1355 = vld [vmem:[#allocation12 + $0x488] sm:$0xff]
      %v1356 = vld [vmem:[#allocation12 + $0x490] sm:$0xff]
      %v1357 = vld [vmem:[#allocation12 + $0x498] sm:$0xff]
      %v1358 = vld [vmem:[#allocation12 + $0x4a0] sm:$0xff]
      %v1359 = vld [vmem:[#allocation12 + $0x4a8] sm:$0xff]
      %v1360 = vld [vmem:[#allocation12 + $0x4b0] sm:$0xff]
      %v1361 = vld [vmem:[#allocation12 + $0x4b8] sm:$0xff]
      %v1362 = vld [vmem:[#allocation12 + $0x4c0] sm:$0xff]
      %v1363 = vld [vmem:[#allocation12 + $0x4c8] sm:$0xff]
      %v1364 = vld [vmem:[#allocation12 + $0x4d0] sm:$0xff]
      %v1365 = vld [vmem:[#allocation12 + $0x4d8] sm:$0xff]
      %v1366 = vld [vmem:[#allocation12 + $0x4e0] sm:$0xff]
      %v1367 = vld [vmem:[#allocation12 + $0x4e8] sm:$0xff]
      %v1368 = vld [vmem:[#allocation12 + $0x4f0] sm:$0xff]
      %v1369 = vld [vmem:[#allocation12 + $0x4f8] sm:$0xff]
      %v1370 = vld [vmem:[#allocation12 + $0x500] sm:$0xff]
      %v1371 = vld [vmem:[#allocation12 + $0x508] sm:$0xff]
      %v1372 = vld [vmem:[#allocation12 + $0x510] sm:$0xff]
      %v1373 = vld [vmem:[#allocation12 + $0x518] sm:$0xff]
      %v1374 = vld [vmem:[#allocation12 + $0x520] sm:$0xff]
      %v1375 = vld [vmem:[#allocation12 + $0x528] sm:$0xff]
      %v1376 = vld [vmem:[#allocation12 + $0x530] sm:$0xff]
      %v1377 = vld [vmem:[#allocation12 + $0x538] sm:$0xff]
      %v1378 = vld [vmem:[#allocation12 + $0x540] sm:$0xff]
      %v1379 = vld [vmem:[#allocation12 + $0x548] sm:$0xff]
      %v1380 = vld [vmem:[#allocation12 + $0x550] sm:$0xff]
      %v1381 = vld [vmem:[#allocation12 + $0x558] sm:$0xff]
      %v1382 = vld [vmem:[#allocation12 + $0x560] sm:$0xff]
      %v1383 = vld [vmem:[#allocation12 + $0x568] sm:$0xff]
      %v1384 = vld [vmem:[#allocation12 + $0x570] sm:$0xff]
      %v1385 = vld [vmem:[#allocation12 + $0x578] sm:$0xff]
      %v1386 = vld [vmem:[#allocation12 + $0x580] sm:$0xff]
      %v1387 = vld [vmem:[#allocation12 + $0x588] sm:$0xff]
      %v1388 = vld [vmem:[#allocation12 + $0x590] sm:$0xff]
      %v1389 = vld [vmem:[#allocation12 + $0x598] sm:$0xff]
      %v1390 = vld [vmem:[#allocation12 + $0x5a0] sm:$0xff]
      %v1391 = vld [vmem:[#allocation12 + $0x5a8] sm:$0xff]
      %v1392 = vld [vmem:[#allocation12 + $0x5b0] sm:$0xff]
      %v1393 = vld [vmem:[#allocation12 + $0x5b8] sm:$0xff]
      %v1394 = vld [vmem:[#allocation12 + $0x5c0] sm:$0xff]
      %v1395 = vld [vmem:[#allocation12 + $0x5c8] sm:$0xff]
      %v1396 = vld [vmem:[#allocation12 + $0x5d0] sm:$0xff]
      %v1397 = vld [vmem:[#allocation12 + $0x5d8] sm:$0xff]
      %v1398 = vld [vmem:[#allocation12 + $0x5e0] sm:$0xff]
      %v1399 = vld [vmem:[#allocation12 + $0x5e8] sm:$0xff]
      %v1400 = vld [vmem:[#allocation12 + $0x5f0] sm:$0xff]
      %v1401 = vld [vmem:[#allocation12 + $0x5f8] sm:$0xff]
      %v1402 = vld [vmem:[#allocation12 + $0x600] sm:$0xff]
      %v1403 = vld [vmem:[#allocation12 + $0x608] sm:$0xff]
      %v1404 = vld [vmem:[#allocation12 + $0x610] sm:$0xff]
      %v1405 = vld [vmem:[#allocation12 + $0x618] sm:$0xff]
      %v1406 = vld [vmem:[#allocation12 + $0x620] sm:$0xff]
      %v1407 = vld [vmem:[#allocation12 + $0x628] sm:$0xff]
      %v1408 = vld [vmem:[#allocation12 + $0x630] sm:$0xff]
      %v1409 = vld [vmem:[#allocation12 + $0x638] sm:$0xff]
      %v1410 = vld [vmem:[#allocation12 + $0x640] sm:$0xff]
      %v1411 = vld [vmem:[#allocation12 + $0x648] sm:$0xff]
      %v1412 = vld [vmem:[#allocation12 + $0x650] sm:$0xff]
      %v1413 = vld [vmem:[#allocation12 + $0x658] sm:$0xff]
      %v1414 = vld [vmem:[#allocation12 + $0x660] sm:$0xff]
      %v1415 = vld [vmem:[#allocation12 + $0x668] sm:$0xff]
      %v1416 = vld [vmem:[#allocation12 + $0x670] sm:$0xff]
      %v1417 = vld [vmem:[#allocation12 + $0x678] sm:$0xff]
      %v1418 = vld [vmem:[#allocation12 + $0x680] sm:$0xff]
      %v1419 = vld [vmem:[#allocation12 + $0x688] sm:$0xff]
      %v1420 = vld [vmem:[#allocation12 + $0x690] sm:$0xff]
      %v1421 = vld [vmem:[#allocation12 + $0x698] sm:$0xff]
      %v1422 = vld [vmem:[#allocation12 + $0x6a0] sm:$0xff]
      %v1423 = vld [vmem:[#allocation12 + $0x6a8] sm:$0xff]
      %v1424 = vld [vmem:[#allocation12 + $0x6b0] sm:$0xff]
      %v1425 = vld [vmem:[#allocation12 + $0x6b8] sm:$0xff]
      %v1426 = vld [vmem:[#allocation12 + $0x6c0] sm:$0xff]
      %v1427 = vld [vmem:[#allocation12 + $0x6c8] sm:$0xff]
      %v1428 = vld [vmem:[#allocation12 + $0x6d0] sm:$0xff]
      %v1429 = vld [vmem:[#allocation12 + $0x6d8] sm:$0xff]
      %v1430 = vld [vmem:[#allocation12 + $0x6e0] sm:$0xff]
      %v1431 = vld [vmem:[#allocation12 + $0x6e8] sm:$0xff]
      %v1432 = vld [vmem:[#allocation12 + $0x6f0] sm:$0xff]
      %v1433 = vld [vmem:[#allocation12 + $0x6f8] sm:$0xff]
      %v1434 = vld [vmem:[#allocation12 + $0x700] sm:$0xff]
      %v1435 = vld [vmem:[#allocation12 + $0x708] sm:$0xff]
      %v1436 = vld [vmem:[#allocation12 + $0x710] sm:$0xff]
      %v1437 = vld [vmem:[#allocation12 + $0x718] sm:$0xff]
      %v1438 = vld [vmem:[#allocation12 + $0x720] sm:$0xff]
      %v1439 = vld [vmem:[#allocation12 + $0x728] sm:$0xff]
      %v1440 = vld [vmem:[#allocation12 + $0x730] sm:$0xff]
      %v1441 = vld [vmem:[#allocation12 + $0x738] sm:$0xff]
      %v1442 = vld [vmem:[#allocation12 + $0x740] sm:$0xff]
      %v1443 = vld [vmem:[#allocation12 + $0x748] sm:$0xff]
      %v1444 = vld [vmem:[#allocation12 + $0x750] sm:$0xff]
      %v1445 = vld [vmem:[#allocation12 + $0x758] sm:$0xff]
      %v1446 = vld [vmem:[#allocation12 + $0x760] sm:$0xff]
      %v1447 = vld [vmem:[#allocation12 + $0x768] sm:$0xff]
      %v1448 = vld [vmem:[#allocation12 + $0x770] sm:$0xff]
      %v1449 = vld [vmem:[#allocation12 + $0x778] sm:$0xff]
      %v1450 = vld [vmem:[#allocation12 + $0x780] sm:$0xff]
      %v1451 = vld [vmem:[#allocation12 + $0x788] sm:$0xff]
      %v1452 = vld [vmem:[#allocation12 + $0x790] sm:$0xff]
      %v1453 = vld [vmem:[#allocation12 + $0x798] sm:$0xff]
      %v1454 = vld [vmem:[#allocation12 + $0x7a0] sm:$0xff]
      %v1455 = vld [vmem:[#allocation12 + $0x7a8] sm:$0xff]
      %v1456 = vld [vmem:[#allocation12 + $0x7b0] sm:$0xff]
      %v1457 = vld [vmem:[#allocation12 + $0x7b8] sm:$0xff]
      %v1458 = vld [vmem:[#allocation12 + $0x7c0] sm:$0xff]
      %v1459 = vld [vmem:[#allocation12 + $0x7c8] sm:$0xff]
      %v1460 = vld [vmem:[#allocation12 + $0x7d0] sm:$0xff]
      %v1461 = vld [vmem:[#allocation12 + $0x7d8] sm:$0xff]
      %v1462 = vld [vmem:[#allocation12 + $0x7e0] sm:$0xff]
      %v1463 = vld [vmem:[#allocation12 + $0x7e8] sm:$0xff]
      %v1464 = vld [vmem:[#allocation12 + $0x7f0] sm:$0xff]
      %v1465 = vld [vmem:[#allocation12 + $0x7f8] sm:$0xff]
      %v1466 = vld [vmem:[%s7] sm:$0xf]
      %v1468 = vlaneseq
      %v1469 = vshrl.u32 %v1468, 7
      %v1470 = vsub.s32 0, %v1469
      %v1471 = vrot.slane %v1466, %v1470
      %v1472 = vlaneseq
      %v1473 = vshrl.u32 %v1472, 7
      %v1474 = vsub.s32 1, %v1473
      %v1475 = vrot.slane %v1466, %v1474
      %v1476 = vlaneseq
      %v1477 = vshrl.u32 %v1476, 7
      %v1478 = vsub.s32 2, %v1477
      %v1479 = vrot.slane %v1466, %v1478
      %v1480 = vlaneseq
      %v1481 = vshrl.u32 %v1480, 7
      %v1482 = vsub.s32 3, %v1481
      %v1483 = vrot.slane %v1466, %v1482
      %v1744 = vunpack.c.l.b16 %v1210
      %v1745 = vunpack.c.h.b16 %v1210
      %v1746 = vunpack.c.l.b16 %v1211
      %v1747 = vunpack.c.h.b16 %v1211
      %v1748 = vunpack.c.l.b16 %v1212
      %v1749 = vunpack.c.h.b16 %v1212
      %v1750 = vunpack.c.l.b16 %v1213
      %v1751 = vunpack.c.h.b16 %v1213
      %v1752 = vunpack.c.l.b16 %v1214
      %v1753 = vunpack.c.h.b16 %v1214
      %v1754 = vunpack.c.l.b16 %v1215
      %v1755 = vunpack.c.h.b16 %v1215
      %v1756 = vunpack.c.l.b16 %v1216
      %v1757 = vunpack.c.h.b16 %v1216
      %v1758 = vunpack.c.l.b16 %v1217
      %v1759 = vunpack.c.h.b16 %v1217
      %v1760 = vunpack.c.l.b16 %v1218
      %v1761 = vunpack.c.h.b16 %v1218
      %v1762 = vunpack.c.l.b16 %v1219
      %v1763 = vunpack.c.h.b16 %v1219
      %v1764 = vunpack.c.l.b16 %v1220
      %v1765 = vunpack.c.h.b16 %v1220
      %v1766 = vunpack.c.l.b16 %v1221
      %v1767 = vunpack.c.h.b16 %v1221
      %v1768 = vunpack.c.l.b16 %v1222
      %v1769 = vunpack.c.h.b16 %v1222
      %v1770 = vunpack.c.l.b16 %v1223
      %v1771 = vunpack.c.h.b16 %v1223
      %v1772 = vunpack.c.l.b16 %v1224
      %v1773 = vunpack.c.h.b16 %v1224
      %v1774 = vunpack.c.l.b16 %v1225
      %v1775 = vunpack.c.h.b16 %v1225
      %v1776 = vunpack.c.l.b16 %v1226
      %v1777 = vunpack.c.h.b16 %v1226
      %v1778 = vunpack.c.l.b16 %v1227
      %v1779 = vunpack.c.h.b16 %v1227
      %v1780 = vunpack.c.l.b16 %v1228
      %v1781 = vunpack.c.h.b16 %v1228
      %v1782 = vunpack.c.l.b16 %v1229
      %v1783 = vunpack.c.h.b16 %v1229
      %v1784 = vunpack.c.l.b16 %v1230
      %v1785 = vunpack.c.h.b16 %v1230
      %v1786 = vunpack.c.l.b16 %v1231
      %v1787 = vunpack.c.h.b16 %v1231
      %v1788 = vunpack.c.l.b16 %v1232
      %v1789 = vunpack.c.h.b16 %v1232
      %v1790 = vunpack.c.l.b16 %v1233
      %v1791 = vunpack.c.h.b16 %v1233
      %v1792 = vunpack.c.l.b16 %v1234
      %v1793 = vunpack.c.h.b16 %v1234
      %v1794 = vunpack.c.l.b16 %v1235
      %v1795 = vunpack.c.h.b16 %v1235
      %v1796 = vunpack.c.l.b16 %v1236
      %v1797 = vunpack.c.h.b16 %v1236
      %v1798 = vunpack.c.l.b16 %v1237
      %v1799 = vunpack.c.h.b16 %v1237
      %v1800 = vunpack.c.l.b16 %v1238
      %v1801 = vunpack.c.h.b16 %v1238
      %v1802 = vunpack.c.l.b16 %v1239
      %v1803 = vunpack.c.h.b16 %v1239
      %v1804 = vunpack.c.l.b16 %v1240
      %v1805 = vunpack.c.h.b16 %v1240
      %v1806 = vunpack.c.l.b16 %v1241
      %v1807 = vunpack.c.h.b16 %v1241
      %v1808 = vunpack.c.l.b16 %v1242
      %v1809 = vunpack.c.h.b16 %v1242
      %v1810 = vunpack.c.l.b16 %v1243
      %v1811 = vunpack.c.h.b16 %v1243
      %v1812 = vunpack.c.l.b16 %v1244
      %v1813 = vunpack.c.h.b16 %v1244
      %v1814 = vunpack.c.l.b16 %v1245
      %v1815 = vunpack.c.h.b16 %v1245
      %v1816 = vunpack.c.l.b16 %v1246
      %v1817 = vunpack.c.h.b16 %v1246
      %v1818 = vunpack.c.l.b16 %v1247
      %v1819 = vunpack.c.h.b16 %v1247
      %v1820 = vunpack.c.l.b16 %v1248
      %v1821 = vunpack.c.h.b16 %v1248
      %v1822 = vunpack.c.l.b16 %v1249
      %v1823 = vunpack.c.h.b16 %v1249
      %v1824 = vunpack.c.l.b16 %v1250
      %v1825 = vunpack.c.h.b16 %v1250
      %v1826 = vunpack.c.l.b16 %v1251
      %v1827 = vunpack.c.h.b16 %v1251
      %v1828 = vunpack.c.l.b16 %v1252
      %v1829 = vunpack.c.h.b16 %v1252
      %v1830 = vunpack.c.l.b16 %v1253
      %v1831 = vunpack.c.h.b16 %v1253
      %v1832 = vunpack.c.l.b16 %v1254
      %v1833 = vunpack.c.h.b16 %v1254
      %v1834 = vunpack.c.l.b16 %v1255
      %v1835 = vunpack.c.h.b16 %v1255
      %v1836 = vunpack.c.l.b16 %v1256
      %v1837 = vunpack.c.h.b16 %v1256
      %v1838 = vunpack.c.l.b16 %v1257
      %v1839 = vunpack.c.h.b16 %v1257
      %v1840 = vunpack.c.l.b16 %v1258
      %v1841 = vunpack.c.h.b16 %v1258
      %v1842 = vunpack.c.l.b16 %v1259
      %v1843 = vunpack.c.h.b16 %v1259
      %v1844 = vunpack.c.l.b16 %v1260
      %v1845 = vunpack.c.h.b16 %v1260
      %v1846 = vunpack.c.l.b16 %v1261
      %v1847 = vunpack.c.h.b16 %v1261
      %v1848 = vunpack.c.l.b16 %v1262
      %v1849 = vunpack.c.h.b16 %v1262
      %v1850 = vunpack.c.l.b16 %v1263
      %v1851 = vunpack.c.h.b16 %v1263
      %v1852 = vunpack.c.l.b16 %v1264
      %v1853 = vunpack.c.h.b16 %v1264
      %v1854 = vunpack.c.l.b16 %v1265
      %v1855 = vunpack.c.h.b16 %v1265
      %v1856 = vunpack.c.l.b16 %v1266
      %v1857 = vunpack.c.h.b16 %v1266
      %v1858 = vunpack.c.l.b16 %v1267
      %v1859 = vunpack.c.h.b16 %v1267
      %v1860 = vunpack.c.l.b16 %v1268
      %v1861 = vunpack.c.h.b16 %v1268
      %v1862 = vunpack.c.l.b16 %v1269
      %v1863 = vunpack.c.h.b16 %v1269
      %v1864 = vunpack.c.l.b16 %v1270
      %v1865 = vunpack.c.h.b16 %v1270
      %v1866 = vunpack.c.l.b16 %v1271
      %v1867 = vunpack.c.h.b16 %v1271
      %v1868 = vunpack.c.l.b16 %v1272
      %v1869 = vunpack.c.h.b16 %v1272
      %v1870 = vunpack.c.l.b16 %v1273
      %v1871 = vunpack.c.h.b16 %v1273
      %v1872 = vunpack.c.l.b16 %v1274
      %v1873 = vunpack.c.h.b16 %v1274
      %v1874 = vunpack.c.l.b16 %v1275
      %v1875 = vunpack.c.h.b16 %v1275
      %v1876 = vunpack.c.l.b16 %v1276
      %v1877 = vunpack.c.h.b16 %v1276
      %v1878 = vunpack.c.l.b16 %v1277
      %v1879 = vunpack.c.h.b16 %v1277
      %v1880 = vunpack.c.l.b16 %v1278
      %v1881 = vunpack.c.h.b16 %v1278
      %v1882 = vunpack.c.l.b16 %v1279
      %v1883 = vunpack.c.h.b16 %v1279
      %v1884 = vunpack.c.l.b16 %v1280
      %v1885 = vunpack.c.h.b16 %v1280
      %v1886 = vunpack.c.l.b16 %v1281
      %v1887 = vunpack.c.h.b16 %v1281
      %v1888 = vunpack.c.l.b16 %v1282
      %v1889 = vunpack.c.h.b16 %v1282
      %v1890 = vunpack.c.l.b16 %v1283
      %v1891 = vunpack.c.h.b16 %v1283
      %v1892 = vunpack.c.l.b16 %v1284
      %v1893 = vunpack.c.h.b16 %v1284
      %v1894 = vunpack.c.l.b16 %v1285
      %v1895 = vunpack.c.h.b16 %v1285
      %v1896 = vunpack.c.l.b16 %v1286
      %v1897 = vunpack.c.h.b16 %v1286
      %v1898 = vunpack.c.l.b16 %v1287
      %v1899 = vunpack.c.h.b16 %v1287
      %v1900 = vunpack.c.l.b16 %v1288
      %v1901 = vunpack.c.h.b16 %v1288
      %v1902 = vunpack.c.l.b16 %v1289
      %v1903 = vunpack.c.h.b16 %v1289
      %v1904 = vunpack.c.l.b16 %v1290
      %v1905 = vunpack.c.h.b16 %v1290
      %v1906 = vunpack.c.l.b16 %v1291
      %v1907 = vunpack.c.h.b16 %v1291
      %v1908 = vunpack.c.l.b16 %v1292
      %v1909 = vunpack.c.h.b16 %v1292
      %v1910 = vunpack.c.l.b16 %v1293
      %v1911 = vunpack.c.h.b16 %v1293
      %v1912 = vunpack.c.l.b16 %v1294
      %v1913 = vunpack.c.h.b16 %v1294
      %v1914 = vunpack.c.l.b16 %v1295
      %v1915 = vunpack.c.h.b16 %v1295
      %v1916 = vunpack.c.l.b16 %v1296
      %v1917 = vunpack.c.h.b16 %v1296
      %v1918 = vunpack.c.l.b16 %v1297
      %v1919 = vunpack.c.h.b16 %v1297
      %v1920 = vunpack.c.l.b16 %v1298
      %v1921 = vunpack.c.h.b16 %v1298
      %v1922 = vunpack.c.l.b16 %v1299
      %v1923 = vunpack.c.h.b16 %v1299
      %v1924 = vunpack.c.l.b16 %v1300
      %v1925 = vunpack.c.h.b16 %v1300
      %v1926 = vunpack.c.l.b16 %v1301
      %v1927 = vunpack.c.h.b16 %v1301
      %v1928 = vunpack.c.l.b16 %v1302
      %v1929 = vunpack.c.h.b16 %v1302
      %v1930 = vunpack.c.l.b16 %v1303
      %v1931 = vunpack.c.h.b16 %v1303
      %v1932 = vunpack.c.l.b16 %v1304
      %v1933 = vunpack.c.h.b16 %v1304
      %v1934 = vunpack.c.l.b16 %v1305
      %v1935 = vunpack.c.h.b16 %v1305
      %v1936 = vunpack.c.l.b16 %v1306
      %v1937 = vunpack.c.h.b16 %v1306
      %v1938 = vunpack.c.l.b16 %v1307
      %v1939 = vunpack.c.h.b16 %v1307
      %v1940 = vunpack.c.l.b16 %v1308
      %v1941 = vunpack.c.h.b16 %v1308
      %v1942 = vunpack.c.l.b16 %v1309
      %v1943 = vunpack.c.h.b16 %v1309
      %v1944 = vunpack.c.l.b16 %v1310
      %v1945 = vunpack.c.h.b16 %v1310
      %v1946 = vunpack.c.l.b16 %v1311
      %v1947 = vunpack.c.h.b16 %v1311
      %v1948 = vunpack.c.l.b16 %v1312
      %v1949 = vunpack.c.h.b16 %v1312
      %v1950 = vunpack.c.l.b16 %v1313
      %v1951 = vunpack.c.h.b16 %v1313
      %v1952 = vunpack.c.l.b16 %v1314
      %v1953 = vunpack.c.h.b16 %v1314
      %v1954 = vunpack.c.l.b16 %v1315
      %v1955 = vunpack.c.h.b16 %v1315
      %v1956 = vunpack.c.l.b16 %v1316
      %v1957 = vunpack.c.h.b16 %v1316
      %v1958 = vunpack.c.l.b16 %v1317
      %v1959 = vunpack.c.h.b16 %v1317
      %v1960 = vunpack.c.l.b16 %v1318
      %v1961 = vunpack.c.h.b16 %v1318
      %v1962 = vunpack.c.l.b16 %v1319
      %v1963 = vunpack.c.h.b16 %v1319
      %v1964 = vunpack.c.l.b16 %v1320
      %v1965 = vunpack.c.h.b16 %v1320
      %v1966 = vunpack.c.l.b16 %v1321
      %v1967 = vunpack.c.h.b16 %v1321
      %v1968 = vunpack.c.l.b16 %v1322
      %v1969 = vunpack.c.h.b16 %v1322
      %v1970 = vunpack.c.l.b16 %v1323
      %v1971 = vunpack.c.h.b16 %v1323
      %v1972 = vunpack.c.l.b16 %v1324
      %v1973 = vunpack.c.h.b16 %v1324
      %v1974 = vunpack.c.l.b16 %v1325
      %v1975 = vunpack.c.h.b16 %v1325
      %v1976 = vunpack.c.l.b16 %v1326
      %v1977 = vunpack.c.h.b16 %v1326
      %v1978 = vunpack.c.l.b16 %v1327
      %v1979 = vunpack.c.h.b16 %v1327
      %v1980 = vunpack.c.l.b16 %v1328
      %v1981 = vunpack.c.h.b16 %v1328
      %v1982 = vunpack.c.l.b16 %v1329
      %v1983 = vunpack.c.h.b16 %v1329
      %v1984 = vunpack.c.l.b16 %v1330
      %v1985 = vunpack.c.h.b16 %v1330
      %v1986 = vunpack.c.l.b16 %v1331
      %v1987 = vunpack.c.h.b16 %v1331
      %v1988 = vunpack.c.l.b16 %v1332
      %v1989 = vunpack.c.h.b16 %v1332
      %v1990 = vunpack.c.l.b16 %v1333
      %v1991 = vunpack.c.h.b16 %v1333
      %v1992 = vunpack.c.l.b16 %v1334
      %v1993 = vunpack.c.h.b16 %v1334
      %v1994 = vunpack.c.l.b16 %v1335
      %v1995 = vunpack.c.h.b16 %v1335
      %v1996 = vunpack.c.l.b16 %v1336
      %v1997 = vunpack.c.h.b16 %v1336
      %v1998 = vunpack.c.l.b16 %v1337
      %v1999 = vunpack.c.h.b16 %v1337
      %v2000 = vunpack.c.l.b16 %v1338
      %v2001 = vunpack.c.h.b16 %v1338
      %v2002 = vunpack.c.l.b16 %v1339
      %v2003 = vunpack.c.h.b16 %v1339
      %v2004 = vunpack.c.l.b16 %v1340
      %v2005 = vunpack.c.h.b16 %v1340
      %v2006 = vunpack.c.l.b16 %v1341
      %v2007 = vunpack.c.h.b16 %v1341
      %v2008 = vunpack.c.l.b16 %v1342
      %v2009 = vunpack.c.h.b16 %v1342
      %v2010 = vunpack.c.l.b16 %v1343
      %v2011 = vunpack.c.h.b16 %v1343
      %v2012 = vunpack.c.l.b16 %v1344
      %v2013 = vunpack.c.h.b16 %v1344
      %v2014 = vunpack.c.l.b16 %v1345
      %v2015 = vunpack.c.h.b16 %v1345
      %v2016 = vunpack.c.l.b16 %v1346
      %v2017 = vunpack.c.h.b16 %v1346
      %v2018 = vunpack.c.l.b16 %v1347
      %v2019 = vunpack.c.h.b16 %v1347
      %v2020 = vunpack.c.l.b16 %v1348
      %v2021 = vunpack.c.h.b16 %v1348
      %v2022 = vunpack.c.l.b16 %v1349
      %v2023 = vunpack.c.h.b16 %v1349
      %v2024 = vunpack.c.l.b16 %v1350
      %v2025 = vunpack.c.h.b16 %v1350
      %v2026 = vunpack.c.l.b16 %v1351
      %v2027 = vunpack.c.h.b16 %v1351
      %v2028 = vunpack.c.l.b16 %v1352
      %v2029 = vunpack.c.h.b16 %v1352
      %v2030 = vunpack.c.l.b16 %v1353
      %v2031 = vunpack.c.h.b16 %v1353
      %v2032 = vunpack.c.l.b16 %v1354
      %v2033 = vunpack.c.h.b16 %v1354
      %v2034 = vunpack.c.l.b16 %v1355
      %v2035 = vunpack.c.h.b16 %v1355
      %v2036 = vunpack.c.l.b16 %v1356
      %v2037 = vunpack.c.h.b16 %v1356
      %v2038 = vunpack.c.l.b16 %v1357
      %v2039 = vunpack.c.h.b16 %v1357
      %v2040 = vunpack.c.l.b16 %v1358
      %v2041 = vunpack.c.h.b16 %v1358
      %v2042 = vunpack.c.l.b16 %v1359
      %v2043 = vunpack.c.h.b16 %v1359
      %v2044 = vunpack.c.l.b16 %v1360
      %v2045 = vunpack.c.h.b16 %v1360
      %v2046 = vunpack.c.l.b16 %v1361
      %v2047 = vunpack.c.h.b16 %v1361
      %v2048 = vunpack.c.l.b16 %v1362
      %v2049 = vunpack.c.h.b16 %v1362
      %v2050 = vunpack.c.l.b16 %v1363
      %v2051 = vunpack.c.h.b16 %v1363
      %v2052 = vunpack.c.l.b16 %v1364
      %v2053 = vunpack.c.h.b16 %v1364
      %v2054 = vunpack.c.l.b16 %v1365
      %v2055 = vunpack.c.h.b16 %v1365
      %v2056 = vunpack.c.l.b16 %v1366
      %v2057 = vunpack.c.h.b16 %v1366
      %v2058 = vunpack.c.l.b16 %v1367
      %v2059 = vunpack.c.h.b16 %v1367
      %v2060 = vunpack.c.l.b16 %v1368
      %v2061 = vunpack.c.h.b16 %v1368
      %v2062 = vunpack.c.l.b16 %v1369
      %v2063 = vunpack.c.h.b16 %v1369
      %v2064 = vunpack.c.l.b16 %v1370
      %v2065 = vunpack.c.h.b16 %v1370
      %v2066 = vunpack.c.l.b16 %v1371
      %v2067 = vunpack.c.h.b16 %v1371
      %v2068 = vunpack.c.l.b16 %v1372
      %v2069 = vunpack.c.h.b16 %v1372
      %v2070 = vunpack.c.l.b16 %v1373
      %v2071 = vunpack.c.h.b16 %v1373
      %v2072 = vunpack.c.l.b16 %v1374
      %v2073 = vunpack.c.h.b16 %v1374
      %v2074 = vunpack.c.l.b16 %v1375
      %v2075 = vunpack.c.h.b16 %v1375
      %v2076 = vunpack.c.l.b16 %v1376
      %v2077 = vunpack.c.h.b16 %v1376
      %v2078 = vunpack.c.l.b16 %v1377
      %v2079 = vunpack.c.h.b16 %v1377
      %v2080 = vunpack.c.l.b16 %v1378
      %v2081 = vunpack.c.h.b16 %v1378
      %v2082 = vunpack.c.l.b16 %v1379
      %v2083 = vunpack.c.h.b16 %v1379
      %v2084 = vunpack.c.l.b16 %v1380
      %v2085 = vunpack.c.h.b16 %v1380
      %v2086 = vunpack.c.l.b16 %v1381
      %v2087 = vunpack.c.h.b16 %v1381
      %v2088 = vunpack.c.l.b16 %v1382
      %v2089 = vunpack.c.h.b16 %v1382
      %v2090 = vunpack.c.l.b16 %v1383
      %v2091 = vunpack.c.h.b16 %v1383
      %v2092 = vunpack.c.l.b16 %v1384
      %v2093 = vunpack.c.h.b16 %v1384
      %v2094 = vunpack.c.l.b16 %v1385
      %v2095 = vunpack.c.h.b16 %v1385
      %v2096 = vunpack.c.l.b16 %v1386
      %v2097 = vunpack.c.h.b16 %v1386
      %v2098 = vunpack.c.l.b16 %v1387
      %v2099 = vunpack.c.h.b16 %v1387
      %v2100 = vunpack.c.l.b16 %v1388
      %v2101 = vunpack.c.h.b16 %v1388
      %v2102 = vunpack.c.l.b16 %v1389
      %v2103 = vunpack.c.h.b16 %v1389
      %v2104 = vunpack.c.l.b16 %v1390
      %v2105 = vunpack.c.h.b16 %v1390
      %v2106 = vunpack.c.l.b16 %v1391
      %v2107 = vunpack.c.h.b16 %v1391
      %v2108 = vunpack.c.l.b16 %v1392
      %v2109 = vunpack.c.h.b16 %v1392
      %v2110 = vunpack.c.l.b16 %v1393
      %v2111 = vunpack.c.h.b16 %v1393
      %v2112 = vunpack.c.l.b16 %v1394
      %v2113 = vunpack.c.h.b16 %v1394
      %v2114 = vunpack.c.l.b16 %v1395
      %v2115 = vunpack.c.h.b16 %v1395
      %v2116 = vunpack.c.l.b16 %v1396
      %v2117 = vunpack.c.h.b16 %v1396
      %v2118 = vunpack.c.l.b16 %v1397
      %v2119 = vunpack.c.h.b16 %v1397
      %v2120 = vunpack.c.l.b16 %v1398
      %v2121 = vunpack.c.h.b16 %v1398
      %v2122 = vunpack.c.l.b16 %v1399
      %v2123 = vunpack.c.h.b16 %v1399
      %v2124 = vunpack.c.l.b16 %v1400
      %v2125 = vunpack.c.h.b16 %v1400
      %v2126 = vunpack.c.l.b16 %v1401
      %v2127 = vunpack.c.h.b16 %v1401
      %v2128 = vunpack.c.l.b16 %v1402
      %v2129 = vunpack.c.h.b16 %v1402
      %v2130 = vunpack.c.l.b16 %v1403
      %v2131 = vunpack.c.h.b16 %v1403
      %v2132 = vunpack.c.l.b16 %v1404
      %v2133 = vunpack.c.h.b16 %v1404
      %v2134 = vunpack.c.l.b16 %v1405
      %v2135 = vunpack.c.h.b16 %v1405
      %v2136 = vunpack.c.l.b16 %v1406
      %v2137 = vunpack.c.h.b16 %v1406
      %v2138 = vunpack.c.l.b16 %v1407
      %v2139 = vunpack.c.h.b16 %v1407
      %v2140 = vunpack.c.l.b16 %v1408
      %v2141 = vunpack.c.h.b16 %v1408
      %v2142 = vunpack.c.l.b16 %v1409
      %v2143 = vunpack.c.h.b16 %v1409
      %v2144 = vunpack.c.l.b16 %v1410
      %v2145 = vunpack.c.h.b16 %v1410
      %v2146 = vunpack.c.l.b16 %v1411
      %v2147 = vunpack.c.h.b16 %v1411
      %v2148 = vunpack.c.l.b16 %v1412
      %v2149 = vunpack.c.h.b16 %v1412
      %v2150 = vunpack.c.l.b16 %v1413
      %v2151 = vunpack.c.h.b16 %v1413
      %v2152 = vunpack.c.l.b16 %v1414
      %v2153 = vunpack.c.h.b16 %v1414
      %v2154 = vunpack.c.l.b16 %v1415
      %v2155 = vunpack.c.h.b16 %v1415
      %v2156 = vunpack.c.l.b16 %v1416
      %v2157 = vunpack.c.h.b16 %v1416
      %v2158 = vunpack.c.l.b16 %v1417
      %v2159 = vunpack.c.h.b16 %v1417
      %v2160 = vunpack.c.l.b16 %v1418
      %v2161 = vunpack.c.h.b16 %v1418
      %v2162 = vunpack.c.l.b16 %v1419
      %v2163 = vunpack.c.h.b16 %v1419
      %v2164 = vunpack.c.l.b16 %v1420
      %v2165 = vunpack.c.h.b16 %v1420
      %v2166 = vunpack.c.l.b16 %v1421
      %v2167 = vunpack.c.h.b16 %v1421
      %v2168 = vunpack.c.l.b16 %v1422
      %v2169 = vunpack.c.h.b16 %v1422
      %v2170 = vunpack.c.l.b16 %v1423
      %v2171 = vunpack.c.h.b16 %v1423
      %v2172 = vunpack.c.l.b16 %v1424
      %v2173 = vunpack.c.h.b16 %v1424
      %v2174 = vunpack.c.l.b16 %v1425
      %v2175 = vunpack.c.h.b16 %v1425
      %v2176 = vunpack.c.l.b16 %v1426
      %v2177 = vunpack.c.h.b16 %v1426
      %v2178 = vunpack.c.l.b16 %v1427
      %v2179 = vunpack.c.h.b16 %v1427
      %v2180 = vunpack.c.l.b16 %v1428
      %v2181 = vunpack.c.h.b16 %v1428
      %v2182 = vunpack.c.l.b16 %v1429
      %v2183 = vunpack.c.h.b16 %v1429
      %v2184 = vunpack.c.l.b16 %v1430
      %v2185 = vunpack.c.h.b16 %v1430
      %v2186 = vunpack.c.l.b16 %v1431
      %v2187 = vunpack.c.h.b16 %v1431
      %v2188 = vunpack.c.l.b16 %v1432
      %v2189 = vunpack.c.h.b16 %v1432
      %v2190 = vunpack.c.l.b16 %v1433
      %v2191 = vunpack.c.h.b16 %v1433
      %v2192 = vunpack.c.l.b16 %v1434
      %v2193 = vunpack.c.h.b16 %v1434
      %v2194 = vunpack.c.l.b16 %v1435
      %v2195 = vunpack.c.h.b16 %v1435
      %v2196 = vunpack.c.l.b16 %v1436
      %v2197 = vunpack.c.h.b16 %v1436
      %v2198 = vunpack.c.l.b16 %v1437
      %v2199 = vunpack.c.h.b16 %v1437
      %v2200 = vunpack.c.l.b16 %v1438
      %v2201 = vunpack.c.h.b16 %v1438
      %v2202 = vunpack.c.l.b16 %v1439
      %v2203 = vunpack.c.h.b16 %v1439
      %v2204 = vunpack.c.l.b16 %v1440
      %v2205 = vunpack.c.h.b16 %v1440
      %v2206 = vunpack.c.l.b16 %v1441
      %v2207 = vunpack.c.h.b16 %v1441
      %v2208 = vunpack.c.l.b16 %v1442
      %v2209 = vunpack.c.h.b16 %v1442
      %v2210 = vunpack.c.l.b16 %v1443
      %v2211 = vunpack.c.h.b16 %v1443
      %v2212 = vunpack.c.l.b16 %v1444
      %v2213 = vunpack.c.h.b16 %v1444
      %v2214 = vunpack.c.l.b16 %v1445
      %v2215 = vunpack.c.h.b16 %v1445
      %v2216 = vunpack.c.l.b16 %v1446
      %v2217 = vunpack.c.h.b16 %v1446
      %v2218 = vunpack.c.l.b16 %v1447
      %v2219 = vunpack.c.h.b16 %v1447
      %v2220 = vunpack.c.l.b16 %v1448
      %v2221 = vunpack.c.h.b16 %v1448
      %v2222 = vunpack.c.l.b16 %v1449
      %v2223 = vunpack.c.h.b16 %v1449
      %v2224 = vunpack.c.l.b16 %v1450
      %v2225 = vunpack.c.h.b16 %v1450
      %v2226 = vunpack.c.l.b16 %v1451
      %v2227 = vunpack.c.h.b16 %v1451
      %v2228 = vunpack.c.l.b16 %v1452
      %v2229 = vunpack.c.h.b16 %v1452
      %v2230 = vunpack.c.l.b16 %v1453
      %v2231 = vunpack.c.h.b16 %v1453
      %v2232 = vunpack.c.l.b16 %v1454
      %v2233 = vunpack.c.h.b16 %v1454
      %v2234 = vunpack.c.l.b16 %v1455
      %v2235 = vunpack.c.h.b16 %v1455
      %v2236 = vunpack.c.l.b16 %v1456
      %v2237 = vunpack.c.h.b16 %v1456
      %v2238 = vunpack.c.l.b16 %v1457
      %v2239 = vunpack.c.h.b16 %v1457
      %v2240 = vunpack.c.l.b16 %v1458
      %v2241 = vunpack.c.h.b16 %v1458
      %v2242 = vunpack.c.l.b16 %v1459
      %v2243 = vunpack.c.h.b16 %v1459
      %v2244 = vunpack.c.l.b16 %v1460
      %v2245 = vunpack.c.h.b16 %v1460
      %v2246 = vunpack.c.l.b16 %v1461
      %v2247 = vunpack.c.h.b16 %v1461
      %v2248 = vunpack.c.l.b16 %v1462
      %v2249 = vunpack.c.h.b16 %v1462
      %v2250 = vunpack.c.l.b16 %v1463
      %v2251 = vunpack.c.h.b16 %v1463
      %v2252 = vunpack.c.l.b16 %v1464
      %v2253 = vunpack.c.h.b16 %v1464
      %v2254 = vunpack.c.l.b16 %v1465
      %v2255 = vunpack.c.h.b16 %v1465
      %v2256 = vpack.c.b16 %v1748, %v1744
      %v2257 = vpack.c.b16 %v1749, %v1745
      %v2258 = vpack.c.b16 %v1750, %v1746
      %v2259 = vpack.c.b16 %v1751, %v1747
      %v2260 = vpack.c.b16 %v1756, %v1752
      %v2261 = vpack.c.b16 %v1757, %v1753
      %v2262 = vpack.c.b16 %v1758, %v1754
      %v2263 = vpack.c.b16 %v1759, %v1755
      %v2264 = vpack.c.b16 %v1764, %v1760
      %v2265 = vpack.c.b16 %v1765, %v1761
      %v2266 = vpack.c.b16 %v1766, %v1762
      %v2267 = vpack.c.b16 %v1767, %v1763
      %v2268 = vpack.c.b16 %v1772, %v1768
      %v2269 = vpack.c.b16 %v1773, %v1769
      %v2270 = vpack.c.b16 %v1774, %v1770
      %v2271 = vpack.c.b16 %v1775, %v1771
      %v2272 = vpack.c.b16 %v1780, %v1776
      %v2273 = vpack.c.b16 %v1781, %v1777
      %v2274 = vpack.c.b16 %v1782, %v1778
      %v2275 = vpack.c.b16 %v1783, %v1779
      %v2276 = vpack.c.b16 %v1788, %v1784
      %v2277 = vpack.c.b16 %v1789, %v1785
      %v2278 = vpack.c.b16 %v1790, %v1786
      %v2279 = vpack.c.b16 %v1791, %v1787
      %v2280 = vpack.c.b16 %v1796, %v1792
      %v2281 = vpack.c.b16 %v1797, %v1793
      %v2282 = vpack.c.b16 %v1798, %v1794
      %v2283 = vpack.c.b16 %v1799, %v1795
      %v2284 = vpack.c.b16 %v1804, %v1800
      %v2285 = vpack.c.b16 %v1805, %v1801
      %v2286 = vpack.c.b16 %v1806, %v1802
      %v2287 = vpack.c.b16 %v1807, %v1803
      %v2288 = vpack.c.b16 %v1812, %v1808
      %v2289 = vpack.c.b16 %v1813, %v1809
      %v2290 = vpack.c.b16 %v1814, %v1810
      %v2291 = vpack.c.b16 %v1815, %v1811
      %v2292 = vpack.c.b16 %v1820, %v1816
      %v2293 = vpack.c.b16 %v1821, %v1817
      %v2294 = vpack.c.b16 %v1822, %v1818
      %v2295 = vpack.c.b16 %v1823, %v1819
      %v2296 = vpack.c.b16 %v1828, %v1824
      %v2297 = vpack.c.b16 %v1829, %v1825
      %v2298 = vpack.c.b16 %v1830, %v1826
      %v2299 = vpack.c.b16 %v1831, %v1827
      %v2300 = vpack.c.b16 %v1836, %v1832
      %v2301 = vpack.c.b16 %v1837, %v1833
      %v2302 = vpack.c.b16 %v1838, %v1834
      %v2303 = vpack.c.b16 %v1839, %v1835
      %v2304 = vpack.c.b16 %v1844, %v1840
      %v2305 = vpack.c.b16 %v1845, %v1841
      %v2306 = vpack.c.b16 %v1846, %v1842
      %v2307 = vpack.c.b16 %v1847, %v1843
      %v2308 = vpack.c.b16 %v1852, %v1848
      %v2309 = vpack.c.b16 %v1853, %v1849
      %v2310 = vpack.c.b16 %v1854, %v1850
      %v2311 = vpack.c.b16 %v1855, %v1851
      %v2312 = vpack.c.b16 %v1860, %v1856
      %v2313 = vpack.c.b16 %v1861, %v1857
      %v2314 = vpack.c.b16 %v1862, %v1858
      %v2315 = vpack.c.b16 %v1863, %v1859
      %v2316 = vpack.c.b16 %v1868, %v1864
      %v2317 = vpack.c.b16 %v1869, %v1865
      %v2318 = vpack.c.b16 %v1870, %v1866
      %v2319 = vpack.c.b16 %v1871, %v1867
      %v2320 = vpack.c.b16 %v1876, %v1872
      %v2321 = vpack.c.b16 %v1877, %v1873
      %v2322 = vpack.c.b16 %v1878, %v1874
      %v2323 = vpack.c.b16 %v1879, %v1875
      %v2324 = vpack.c.b16 %v1884, %v1880
      %v2325 = vpack.c.b16 %v1885, %v1881
      %v2326 = vpack.c.b16 %v1886, %v1882
      %v2327 = vpack.c.b16 %v1887, %v1883
      %v2328 = vpack.c.b16 %v1892, %v1888
      %v2329 = vpack.c.b16 %v1893, %v1889
      %v2330 = vpack.c.b16 %v1894, %v1890
      %v2331 = vpack.c.b16 %v1895, %v1891
      %v2332 = vpack.c.b16 %v1900, %v1896
      %v2333 = vpack.c.b16 %v1901, %v1897
      %v2334 = vpack.c.b16 %v1902, %v1898
      %v2335 = vpack.c.b16 %v1903, %v1899
      %v2336 = vpack.c.b16 %v1908, %v1904
      %v2337 = vpack.c.b16 %v1909, %v1905
      %v2338 = vpack.c.b16 %v1910, %v1906
      %v2339 = vpack.c.b16 %v1911, %v1907
      %v2340 = vpack.c.b16 %v1916, %v1912
      %v2341 = vpack.c.b16 %v1917, %v1913
      %v2342 = vpack.c.b16 %v1918, %v1914
      %v2343 = vpack.c.b16 %v1919, %v1915
      %v2344 = vpack.c.b16 %v1924, %v1920
      %v2345 = vpack.c.b16 %v1925, %v1921
      %v2346 = vpack.c.b16 %v1926, %v1922
      %v2347 = vpack.c.b16 %v1927, %v1923
      %v2348 = vpack.c.b16 %v1932, %v1928
      %v2349 = vpack.c.b16 %v1933, %v1929
      %v2350 = vpack.c.b16 %v1934, %v1930
      %v2351 = vpack.c.b16 %v1935, %v1931
      %v2352 = vpack.c.b16 %v1940, %v1936
      %v2353 = vpack.c.b16 %v1941, %v1937
      %v2354 = vpack.c.b16 %v1942, %v1938
      %v2355 = vpack.c.b16 %v1943, %v1939
      %v2356 = vpack.c.b16 %v1948, %v1944
      %v2357 = vpack.c.b16 %v1949, %v1945
      %v2358 = vpack.c.b16 %v1950, %v1946
      %v2359 = vpack.c.b16 %v1951, %v1947
      %v2360 = vpack.c.b16 %v1956, %v1952
      %v2361 = vpack.c.b16 %v1957, %v1953
      %v2362 = vpack.c.b16 %v1958, %v1954
      %v2363 = vpack.c.b16 %v1959, %v1955
      %v2364 = vpack.c.b16 %v1964, %v1960
      %v2365 = vpack.c.b16 %v1965, %v1961
      %v2366 = vpack.c.b16 %v1966, %v1962
      %v2367 = vpack.c.b16 %v1967, %v1963
      %v2368 = vpack.c.b16 %v1972, %v1968
      %v2369 = vpack.c.b16 %v1973, %v1969
      %v2370 = vpack.c.b16 %v1974, %v1970
      %v2371 = vpack.c.b16 %v1975, %v1971
      %v2372 = vpack.c.b16 %v1980, %v1976
      %v2373 = vpack.c.b16 %v1981, %v1977
      %v2374 = vpack.c.b16 %v1982, %v1978
      %v2375 = vpack.c.b16 %v1983, %v1979
      %v2376 = vpack.c.b16 %v1988, %v1984
      %v2377 = vpack.c.b16 %v1989, %v1985
      %v2378 = vpack.c.b16 %v1990, %v1986
      %v2379 = vpack.c.b16 %v1991, %v1987
      %v2380 = vpack.c.b16 %v1996, %v1992
      %v2381 = vpack.c.b16 %v1997, %v1993
      %v2382 = vpack.c.b16 %v1998, %v1994
      %v2383 = vpack.c.b16 %v1999, %v1995
      %v2384 = vpack.c.b16 %v2004, %v2000
      %v2385 = vpack.c.b16 %v2005, %v2001
      %v2386 = vpack.c.b16 %v2006, %v2002
      %v2387 = vpack.c.b16 %v2007, %v2003
      %v2388 = vpack.c.b16 %v2012, %v2008
      %v2389 = vpack.c.b16 %v2013, %v2009
      %v2390 = vpack.c.b16 %v2014, %v2010
      %v2391 = vpack.c.b16 %v2015, %v2011
      %v2392 = vpack.c.b16 %v2020, %v2016
      %v2393 = vpack.c.b16 %v2021, %v2017
      %v2394 = vpack.c.b16 %v2022, %v2018
      %v2395 = vpack.c.b16 %v2023, %v2019
      %v2396 = vpack.c.b16 %v2028, %v2024
      %v2397 = vpack.c.b16 %v2029, %v2025
      %v2398 = vpack.c.b16 %v2030, %v2026
      %v2399 = vpack.c.b16 %v2031, %v2027
      %v2400 = vpack.c.b16 %v2036, %v2032
      %v2401 = vpack.c.b16 %v2037, %v2033
      %v2402 = vpack.c.b16 %v2038, %v2034
      %v2403 = vpack.c.b16 %v2039, %v2035
      %v2404 = vpack.c.b16 %v2044, %v2040
      %v2405 = vpack.c.b16 %v2045, %v2041
      %v2406 = vpack.c.b16 %v2046, %v2042
      %v2407 = vpack.c.b16 %v2047, %v2043
      %v2408 = vpack.c.b16 %v2052, %v2048
      %v2409 = vpack.c.b16 %v2053, %v2049
      %v2410 = vpack.c.b16 %v2054, %v2050
      %v2411 = vpack.c.b16 %v2055, %v2051
      %v2412 = vpack.c.b16 %v2060, %v2056
      %v2413 = vpack.c.b16 %v2061, %v2057
      %v2414 = vpack.c.b16 %v2062, %v2058
      %v2415 = vpack.c.b16 %v2063, %v2059
      %v2416 = vpack.c.b16 %v2068, %v2064
      %v2417 = vpack.c.b16 %v2069, %v2065
      %v2418 = vpack.c.b16 %v2070, %v2066
      %v2419 = vpack.c.b16 %v2071, %v2067
      %v2420 = vpack.c.b16 %v2076, %v2072
      %v2421 = vpack.c.b16 %v2077, %v2073
      %v2422 = vpack.c.b16 %v2078, %v2074
      %v2423 = vpack.c.b16 %v2079, %v2075
      %v2424 = vpack.c.b16 %v2084, %v2080
      %v2425 = vpack.c.b16 %v2085, %v2081
      %v2426 = vpack.c.b16 %v2086, %v2082
      %v2427 = vpack.c.b16 %v2087, %v2083
      %v2428 = vpack.c.b16 %v2092, %v2088
      %v2429 = vpack.c.b16 %v2093, %v2089
      %v2430 = vpack.c.b16 %v2094, %v2090
      %v2431 = vpack.c.b16 %v2095, %v2091
      %v2432 = vpack.c.b16 %v2100, %v2096
      %v2433 = vpack.c.b16 %v2101, %v2097
      %v2434 = vpack.c.b16 %v2102, %v2098
      %v2435 = vpack.c.b16 %v2103, %v2099
      %v2436 = vpack.c.b16 %v2108, %v2104
      %v2437 = vpack.c.b16 %v2109, %v2105
      %v2438 = vpack.c.b16 %v2110, %v2106
      %v2439 = vpack.c.b16 %v2111, %v2107
      %v2440 = vpack.c.b16 %v2116, %v2112
      %v2441 = vpack.c.b16 %v2117, %v2113
      %v2442 = vpack.c.b16 %v2118, %v2114
      %v2443 = vpack.c.b16 %v2119, %v2115
      %v2444 = vpack.c.b16 %v2124, %v2120
      %v2445 = vpack.c.b16 %v2125, %v2121
      %v2446 = vpack.c.b16 %v2126, %v2122
      %v2447 = vpack.c.b16 %v2127, %v2123
      %v2448 = vpack.c.b16 %v2132, %v2128
      %v2449 = vpack.c.b16 %v2133, %v2129
      %v2450 = vpack.c.b16 %v2134, %v2130
      %v2451 = vpack.c.b16 %v2135, %v2131
      %v2452 = vpack.c.b16 %v2140, %v2136
      %v2453 = vpack.c.b16 %v2141, %v2137
      %v2454 = vpack.c.b16 %v2142, %v2138
      %v2455 = vpack.c.b16 %v2143, %v2139
      %v2456 = vpack.c.b16 %v2148, %v2144
      %v2457 = vpack.c.b16 %v2149, %v2145
      %v2458 = vpack.c.b16 %v2150, %v2146
      %v2459 = vpack.c.b16 %v2151, %v2147
      %v2460 = vpack.c.b16 %v2156, %v2152
      %v2461 = vpack.c.b16 %v2157, %v2153
      %v2462 = vpack.c.b16 %v2158, %v2154
      %v2463 = vpack.c.b16 %v2159, %v2155
      %v2464 = vpack.c.b16 %v2164, %v2160
      %v2465 = vpack.c.b16 %v2165, %v2161
      %v2466 = vpack.c.b16 %v2166, %v2162
      %v2467 = vpack.c.b16 %v2167, %v2163
      %v2468 = vpack.c.b16 %v2172, %v2168
      %v2469 = vpack.c.b16 %v2173, %v2169
      %v2470 = vpack.c.b16 %v2174, %v2170
      %v2471 = vpack.c.b16 %v2175, %v2171
      %v2472 = vpack.c.b16 %v2180, %v2176
      %v2473 = vpack.c.b16 %v2181, %v2177
      %v2474 = vpack.c.b16 %v2182, %v2178
      %v2475 = vpack.c.b16 %v2183, %v2179
      %v2476 = vpack.c.b16 %v2188, %v2184
      %v2477 = vpack.c.b16 %v2189, %v2185
      %v2478 = vpack.c.b16 %v2190, %v2186
      %v2479 = vpack.c.b16 %v2191, %v2187
      %v2480 = vpack.c.b16 %v2196, %v2192
      %v2481 = vpack.c.b16 %v2197, %v2193
      %v2482 = vpack.c.b16 %v2198, %v2194
      %v2483 = vpack.c.b16 %v2199, %v2195
      %v2484 = vpack.c.b16 %v2204, %v2200
      %v2485 = vpack.c.b16 %v2205, %v2201
      %v2486 = vpack.c.b16 %v2206, %v2202
      %v2487 = vpack.c.b16 %v2207, %v2203
      %v2488 = vpack.c.b16 %v2212, %v2208
      %v2489 = vpack.c.b16 %v2213, %v2209
      %v2490 = vpack.c.b16 %v2214, %v2210
      %v2491 = vpack.c.b16 %v2215, %v2211
      %v2492 = vpack.c.b16 %v2220, %v2216
      %v2493 = vpack.c.b16 %v2221, %v2217
      %v2494 = vpack.c.b16 %v2222, %v2218
      %v2495 = vpack.c.b16 %v2223, %v2219
      %v2496 = vpack.c.b16 %v2228, %v2224
      %v2497 = vpack.c.b16 %v2229, %v2225
      %v2498 = vpack.c.b16 %v2230, %v2226
      %v2499 = vpack.c.b16 %v2231, %v2227
      %v2500 = vpack.c.b16 %v2236, %v2232
      %v2501 = vpack.c.b16 %v2237, %v2233
      %v2502 = vpack.c.b16 %v2238, %v2234
      %v2503 = vpack.c.b16 %v2239, %v2235
      %v2504 = vpack.c.b16 %v2244, %v2240
      %v2505 = vpack.c.b16 %v2245, %v2241
      %v2506 = vpack.c.b16 %v2246, %v2242
      %v2507 = vpack.c.b16 %v2247, %v2243
      %v2508 = vpack.c.b16 %v2252, %v2248
      %v2509 = vpack.c.b16 %v2253, %v2249
      %v2510 = vpack.c.b16 %v2254, %v2250
      %v2511 = vpack.c.b16 %v2255, %v2251
      %2768 = vmatprep.subr.bf16.mxu0 %v2285
      %2769 = vmatpush1.bf16.msra.mxu0 %v2284
      %2770 = vmatprep.subr.bf16.mxu0 %v2281
      %2771 = vmatpush1.bf16.msra.mxu0 %v2280
      %2772 = vmatprep.subr.bf16.mxu0 %v2277
      %2773 = vmatpush1.bf16.msra.mxu0 %v2276
      %2774 = vmatprep.subr.bf16.mxu0 %v2273
      %2775 = vmatpush1.bf16.msra.mxu0 %v2272
      %2776 = vmatprep.subr.bf16.mxu0 %v2269
      %2777 = vmatpush1.bf16.msra.mxu0 %v2268
      %2778 = vmatprep.subr.bf16.mxu0 %v2265
      %2779 = vmatpush1.bf16.msra.mxu0 %v2264
      %2780 = vmatprep.subr.bf16.mxu0 %v2261
      %2781 = vmatpush1.bf16.msra.mxu0 %v2260
      %2782 = vmatprep.subr.bf16.mxu0 %v2257
      %2783 = vmatpush1.bf16.msra.mxu0 %v2256
      %2784 = vmatprep.subr.bf16.mxu0 %v2317
      %2785 = vmatpush2.bf16.msra.mxu0 %v2316
      %2786 = vmatprep.subr.bf16.mxu0 %v2313
      %2787 = vmatpush2.bf16.msra.mxu0 %v2312
      %2788 = vmatprep.subr.bf16.mxu0 %v2309
      %2789 = vmatpush2.bf16.msra.mxu0 %v2308
      %2790 = vmatprep.subr.bf16.mxu0 %v2305
      %2791 = vmatpush2.bf16.msra.mxu0 %v2304
      %2792 = vmatprep.subr.bf16.mxu0 %v2301
      %2793 = vmatpush2.bf16.msra.mxu0 %v2300
      %2794 = vmatprep.subr.bf16.mxu0 %v2297
      %2795 = vmatpush2.bf16.msra.mxu0 %v2296
      %2796 = vmatprep.subr.bf16.mxu0 %v2293
      %2797 = vmatpush2.bf16.msra.mxu0 %v2292
      %2798 = vmatprep.subr.bf16.mxu0 %v2289
      %2799 = vmatpush2.bf16.msra.mxu0 %v2288
      %2800 = vmatprep.mubr.bf16.mxu0 %v1203
      %2801 = vmatmul.mubr.bf16.gmra.mxu0 %v1202
      %v2802 = vpop.f32.mrf.mxu0
      %v2803 = vadd.f32 %v1471, %v2802
      %v2804 = vpop.f32.mrf.mxu0
      %v2805 = vadd.f32 %v1475, %v2804
      %v2806 = vpop.f32.mrf.mxu0
      %v2807 = vpop.f32.mrf.mxu0
      %2808 = vdwg.mxu0
      %2809 = vmatprep.subr.bf16.mxu0 %v2349
      %2810 = vmatpush1.bf16.msra.mxu0 %v2348
      %2811 = vmatprep.subr.bf16.mxu0 %v2345
      %2812 = vmatpush1.bf16.msra.mxu0 %v2344
      %2813 = vmatprep.subr.bf16.mxu0 %v2341
      %2814 = vmatpush1.bf16.msra.mxu0 %v2340
      %2815 = vmatprep.subr.bf16.mxu0 %v2337
      %2816 = vmatpush1.bf16.msra.mxu0 %v2336
      %2817 = vmatprep.subr.bf16.mxu0 %v2333
      %2818 = vmatpush1.bf16.msra.mxu0 %v2332
      %2819 = vmatprep.subr.bf16.mxu0 %v2329
      %2820 = vmatpush1.bf16.msra.mxu0 %v2328
      %2821 = vmatprep.subr.bf16.mxu0 %v2325
      %2822 = vmatpush1.bf16.msra.mxu0 %v2324
      %2823 = vmatprep.subr.bf16.mxu0 %v2321
      %2824 = vmatpush1.bf16.msra.mxu0 %v2320
      %2825 = vmatprep.subr.bf16.mxu0 %v2381
      %2826 = vmatpush2.bf16.msra.mxu0 %v2380
      %2827 = vmatprep.subr.bf16.mxu0 %v2377
      %2828 = vmatpush2.bf16.msra.mxu0 %v2376
      %2829 = vmatprep.subr.bf16.mxu0 %v2373
      %2830 = vmatpush2.bf16.msra.mxu0 %v2372
      %2831 = vmatprep.subr.bf16.mxu0 %v2369
      %2832 = vmatpush2.bf16.msra.mxu0 %v2368
      %2833 = vmatprep.subr.bf16.mxu0 %v2365
      %2834 = vmatpush2.bf16.msra.mxu0 %v2364
      %2835 = vmatprep.subr.bf16.mxu0 %v2361
      %2836 = vmatpush2.bf16.msra.mxu0 %v2360
      %2837 = vmatprep.subr.bf16.mxu0 %v2357
      %2838 = vmatpush2.bf16.msra.mxu0 %v2356
      %2839 = vmatprep.subr.bf16.mxu0 %v2353
      %2840 = vmatpush2.bf16.msra.mxu0 %v2352
      %2841 = vmatprep.mubr.bf16.mxu0 %v1205
      %2842 = vmatmul.mubr.bf16.gmra.mxu0 %v1204
      %v2843 = vpop.f32.mrf.mxu0
      %v2844 = vadd.f32 %v2803, %v2843
      %v2845 = vpop.f32.mrf.mxu0
      %v2846 = vadd.f32 %v2805, %v2845
      %v2847 = vpop.f32.mrf.mxu0
      %v2848 = vpop.f32.mrf.mxu0
      %2849 = vdwg.mxu0
      %2850 = vmatprep.subr.bf16.mxu0 %v2413
      %2851 = vmatpush1.bf16.msra.mxu0 %v2412
      %2852 = vmatprep.subr.bf16.mxu0 %v2409
      %2853 = vmatpush1.bf16.msra.mxu0 %v2408
      %2854 = vmatprep.subr.bf16.mxu0 %v2405
      %2855 = vmatpush1.bf16.msra.mxu0 %v2404
      %2856 = vmatprep.subr.bf16.mxu0 %v2401
      %2857 = vmatpush1.bf16.msra.mxu0 %v2400
      %2858 = vmatprep.subr.bf16.mxu0 %v2397
      %2859 = vmatpush1.bf16.msra.mxu0 %v2396
      %2860 = vmatprep.subr.bf16.mxu0 %v2393
      %2861 = vmatpush1.bf16.msra.mxu0 %v2392
      %2862 = vmatprep.subr.bf16.mxu0 %v2389
      %2863 = vmatpush1.bf16.msra.mxu0 %v2388
      %2864 = vmatprep.subr.bf16.mxu0 %v2385
      %2865 = vmatpush1.bf16.msra.mxu0 %v2384
      %2866 = vmatprep.subr.bf16.mxu0 %v2445
      %2867 = vmatpush2.bf16.msra.mxu0 %v2444
      %2868 = vmatprep.subr.bf16.mxu0 %v2441
      %2869 = vmatpush2.bf16.msra.mxu0 %v2440
      %2870 = vmatprep.subr.bf16.mxu0 %v2437
      %2871 = vmatpush2.bf16.msra.mxu0 %v2436
      %2872 = vmatprep.subr.bf16.mxu0 %v2433
      %2873 = vmatpush2.bf16.msra.mxu0 %v2432
      %2874 = vmatprep.subr.bf16.mxu0 %v2429
      %2875 = vmatpush2.bf16.msra.mxu0 %v2428
      %2876 = vmatprep.subr.bf16.mxu0 %v2425
      %2877 = vmatpush2.bf16.msra.mxu0 %v2424
      %2878 = vmatprep.subr.bf16.mxu0 %v2421
      %2879 = vmatpush2.bf16.msra.mxu0 %v2420
      %2880 = vmatprep.subr.bf16.mxu0 %v2417
      %2881 = vmatpush2.bf16.msra.mxu0 %v2416
      %2882 = vmatprep.mubr.bf16.mxu0 %v1207
      %2883 = vmatmul.mubr.bf16.gmra.mxu0 %v1206
      %v2884 = vpop.f32.mrf.mxu0
      %v2885 = vadd.f32 %v2844, %v2884
      %v2886 = vpop.f32.mrf.mxu0
      %v2887 = vadd.f32 %v2846, %v2886
      %v2888 = vpop.f32.mrf.mxu0
      %v2889 = vpop.f32.mrf.mxu0
      %2890 = vdwg.mxu0
      %2891 = vmatprep.subr.bf16.mxu0 %v2477
      %2892 = vmatpush1.bf16.msra.mxu0 %v2476
      %2893 = vmatprep.subr.bf16.mxu0 %v2473
      %2894 = vmatpush1.bf16.msra.mxu0 %v2472
      %2895 = vmatprep.subr.bf16.mxu0 %v2469
      %2896 = vmatpush1.bf16.msra.mxu0 %v2468
      %2897 = vmatprep.subr.bf16.mxu0 %v2465
      %2898 = vmatpush1.bf16.msra.mxu0 %v2464
      %2899 = vmatprep.subr.bf16.mxu0 %v2461
      %2900 = vmatpush1.bf16.msra.mxu0 %v2460
      %2901 = vmatprep.subr.bf16.mxu0 %v2457
      %2902 = vmatpush1.bf16.msra.mxu0 %v2456
      %2903 = vmatprep.subr.bf16.mxu0 %v2453
      %2904 = vmatpush1.bf16.msra.mxu0 %v2452
      %2905 = vmatprep.subr.bf16.mxu0 %v2449
      %2906 = vmatpush1.bf16.msra.mxu0 %v2448
      %2907 = vmatprep.subr.bf16.mxu0 %v2509
      %2908 = vmatpush2.bf16.msra.mxu0 %v2508
      %2909 = vmatprep.subr.bf16.mxu0 %v2505
      %2910 = vmatpush2.bf16.msra.mxu0 %v2504
      %2911 = vmatprep.subr.bf16.mxu0 %v2501
      %2912 = vmatpush2.bf16.msra.mxu0 %v2500
      %2913 = vmatprep.subr.bf16.mxu0 %v2497
      %2914 = vmatpush2.bf16.msra.mxu0 %v2496
      %2915 = vmatprep.subr.bf16.mxu0 %v2493
      %2916 = vmatpush2.bf16.msra.mxu0 %v2492
      %2917 = vmatprep.subr.bf16.mxu0 %v2489
      %2918 = vmatpush2.bf16.msra.mxu0 %v2488
      %2919 = vmatprep.subr.bf16.mxu0 %v2485
      %2920 = vmatpush2.bf16.msra.mxu0 %v2484
      %2921 = vmatprep.subr.bf16.mxu0 %v2481
      %2922 = vmatpush2.bf16.msra.mxu0 %v2480
      %2923 = vmatprep.mubr.bf16.mxu0 %v1209
      %2924 = vmatmul.mubr.bf16.gmra.mxu0 %v1208
      %v2925 = vpop.f32.mrf.mxu0
      %v2926 = vadd.f32 %v2885, %v2925
      %v2927 = vpop.f32.mrf.mxu0
      %v2928 = vadd.f32 %v2887, %v2927
      %v2929 = vpop.f32.mrf.mxu0
      %v2930 = vpop.f32.mrf.mxu0
      %2931 = vdwg.mxu0
      %2932 = vmatprep.subr.bf16.mxu0 %v2287
      %2933 = vmatpush1.bf16.msra.mxu0 %v2286
      %2934 = vmatprep.subr.bf16.mxu0 %v2283
      %2935 = vmatpush1.bf16.msra.mxu0 %v2282
      %2936 = vmatprep.subr.bf16.mxu0 %v2279
      %2937 = vmatpush1.bf16.msra.mxu0 %v2278
      %2938 = vmatprep.subr.bf16.mxu0 %v2275
      %2939 = vmatpush1.bf16.msra.mxu0 %v2274
      %2940 = vmatprep.subr.bf16.mxu0 %v2271
      %2941 = vmatpush1.bf16.msra.mxu0 %v2270
      %2942 = vmatprep.subr.bf16.mxu0 %v2267
      %2943 = vmatpush1.bf16.msra.mxu0 %v2266
      %2944 = vmatprep.subr.bf16.mxu0 %v2263
      %2945 = vmatpush1.bf16.msra.mxu0 %v2262
      %2946 = vmatprep.subr.bf16.mxu0 %v2259
      %2947 = vmatpush1.bf16.msra.mxu0 %v2258
      %2948 = vmatprep.subr.bf16.mxu0 %v2319
      %2949 = vmatpush2.bf16.msra.mxu0 %v2318
      %2950 = vmatprep.subr.bf16.mxu0 %v2315
      %2951 = vmatpush2.bf16.msra.mxu0 %v2314
      %2952 = vmatprep.subr.bf16.mxu0 %v2311
      %2953 = vmatpush2.bf16.msra.mxu0 %v2310
      %2954 = vmatprep.subr.bf16.mxu0 %v2307
      %2955 = vmatpush2.bf16.msra.mxu0 %v2306
      %2956 = vmatprep.subr.bf16.mxu0 %v2303
      %2957 = vmatpush2.bf16.msra.mxu0 %v2302
      %2958 = vmatprep.subr.bf16.mxu0 %v2299
      %2959 = vmatpush2.bf16.msra.mxu0 %v2298
      %2960 = vmatprep.subr.bf16.mxu0 %v2295
      %2961 = vmatpush2.bf16.msra.mxu0 %v2294
      %2962 = vmatprep.subr.bf16.mxu0 %v2291
      %2963 = vmatpush2.bf16.msra.mxu0 %v2290
      %2964 = vmatprep.mubr.bf16.mxu0 %v1203
      %2965 = vmatmul.mubr.bf16.gmra.mxu0 %v1202
      %v2966 = vpop.f32.mrf.mxu0
      %v2967 = vadd.f32 %v1479, %v2966
      %v2968 = vpop.f32.mrf.mxu0
      %v2969 = vadd.f32 %v1483, %v2968
      %v2970 = vpop.f32.mrf.mxu0
      %v2971 = vpop.f32.mrf.mxu0
      %2972 = vdwg.mxu0
      %2973 = vmatprep.subr.bf16.mxu0 %v2351
      %2974 = vmatpush1.bf16.msra.mxu0 %v2350
      %2975 = vmatprep.subr.bf16.mxu0 %v2347
      %2976 = vmatpush1.bf16.msra.mxu0 %v2346
      %2977 = vmatprep.subr.bf16.mxu0 %v2343
      %2978 = vmatpush1.bf16.msra.mxu0 %v2342
      %2979 = vmatprep.subr.bf16.mxu0 %v2339
      %2980 = vmatpush1.bf16.msra.mxu0 %v2338
      %2981 = vmatprep.subr.bf16.mxu0 %v2335
      %2982 = vmatpush1.bf16.msra.mxu0 %v2334
      %2983 = vmatprep.subr.bf16.mxu0 %v2331
      %2984 = vmatpush1.bf16.msra.mxu0 %v2330
      %2985 = vmatprep.subr.bf16.mxu0 %v2327
      %2986 = vmatpush1.bf16.msra.mxu0 %v2326
      %2987 = vmatprep.subr.bf16.mxu0 %v2323
      %2988 = vmatpush1.bf16.msra.mxu0 %v2322
      %2989 = vmatprep.subr.bf16.mxu0 %v2383
      %2990 = vmatpush2.bf16.msra.mxu0 %v2382
      %2991 = vmatprep.subr.bf16.mxu0 %v2379
      %2992 = vmatpush2.bf16.msra.mxu0 %v2378
      %2993 = vmatprep.subr.bf16.mxu0 %v2375
      %2994 = vmatpush2.bf16.msra.mxu0 %v2374
      %2995 = vmatprep.subr.bf16.mxu0 %v2371
      %2996 = vmatpush2.bf16.msra.mxu0 %v2370
      %2997 = vmatprep.subr.bf16.mxu0 %v2367
      %2998 = vmatpush2.bf16.msra.mxu0 %v2366
      %2999 = vmatprep.subr.bf16.mxu0 %v2363
      %3000 = vmatpush2.bf16.msra.mxu0 %v2362
      %3001 = vmatprep.subr.bf16.mxu0 %v2359
      %3002 = vmatpush2.bf16.msra.mxu0 %v2358
      %3003 = vmatprep.subr.bf16.mxu0 %v2355
      %3004 = vmatpush2.bf16.msra.mxu0 %v2354
      %3005 = vmatprep.mubr.bf16.mxu0 %v1205
      %3006 = vmatmul.mubr.bf16.gmra.mxu0 %v1204
      %v3007 = vpop.f32.mrf.mxu0
      %v3008 = vadd.f32 %v2967, %v3007
      %v3009 = vpop.f32.mrf.mxu0
      %v3010 = vadd.f32 %v2969, %v3009
      %v3011 = vpop.f32.mrf.mxu0
      %v3012 = vpop.f32.mrf.mxu0
      %3013 = vdwg.mxu0
      %3014 = vmatprep.subr.bf16.mxu0 %v2415
      %3015 = vmatpush1.bf16.msra.mxu0 %v2414
      %3016 = vmatprep.subr.bf16.mxu0 %v2411
      %3017 = vmatpush1.bf16.msra.mxu0 %v2410
      %3018 = vmatprep.subr.bf16.mxu0 %v2407
      %3019 = vmatpush1.bf16.msra.mxu0 %v2406
      %3020 = vmatprep.subr.bf16.mxu0 %v2403
      %3021 = vmatpush1.bf16.msra.mxu0 %v2402
      %3022 = vmatprep.subr.bf16.mxu0 %v2399
      %3023 = vmatpush1.bf16.msra.mxu0 %v2398
      %3024 = vmatprep.subr.bf16.mxu0 %v2395
      %3025 = vmatpush1.bf16.msra.mxu0 %v2394
      %3026 = vmatprep.subr.bf16.mxu0 %v2391
      %3027 = vmatpush1.bf16.msra.mxu0 %v2390
      %3028 = vmatprep.subr.bf16.mxu0 %v2387
      %3029 = vmatpush1.bf16.msra.mxu0 %v2386
      %3030 = vmatprep.subr.bf16.mxu0 %v2447
      %3031 = vmatpush2.bf16.msra.mxu0 %v2446
      %3032 = vmatprep.subr.bf16.mxu0 %v2443
      %3033 = vmatpush2.bf16.msra.mxu0 %v2442
      %3034 = vmatprep.subr.bf16.mxu0 %v2439
      %3035 = vmatpush2.bf16.msra.mxu0 %v2438
      %3036 = vmatprep.subr.bf16.mxu0 %v2435
      %3037 = vmatpush2.bf16.msra.mxu0 %v2434
      %3038 = vmatprep.subr.bf16.mxu0 %v2431
      %3039 = vmatpush2.bf16.msra.mxu0 %v2430
      %3040 = vmatprep.subr.bf16.mxu0 %v2427
      %3041 = vmatpush2.bf16.msra.mxu0 %v2426
      %3042 = vmatprep.subr.bf16.mxu0 %v2423
      %3043 = vmatpush2.bf16.msra.mxu0 %v2422
      %3044 = vmatprep.subr.bf16.mxu0 %v2419
      %3045 = vmatpush2.bf16.msra.mxu0 %v2418
      %3046 = vmatprep.mubr.bf16.mxu0 %v1207
      %3047 = vmatmul.mubr.bf16.gmra.mxu0 %v1206
      %v3048 = vpop.f32.mrf.mxu0
      %v3049 = vadd.f32 %v3008, %v3048
      %v3050 = vpop.f32.mrf.mxu0
      %v3051 = vadd.f32 %v3010, %v3050
      %v3052 = vpop.f32.mrf.mxu0
      %v3053 = vpop.f32.mrf.mxu0
      %3054 = vdwg.mxu0
      %3055 = vmatprep.subr.bf16.mxu0 %v2479
      %3056 = vmatpush1.bf16.msra.mxu0 %v2478
      %3057 = vmatprep.subr.bf16.mxu0 %v2475
      %3058 = vmatpush1.bf16.msra.mxu0 %v2474
      %3059 = vmatprep.subr.bf16.mxu0 %v2471
      %3060 = vmatpush1.bf16.msra.mxu0 %v2470
      %3061 = vmatprep.subr.bf16.mxu0 %v2467
      %3062 = vmatpush1.bf16.msra.mxu0 %v2466
      %3063 = vmatprep.subr.bf16.mxu0 %v2463
      %3064 = vmatpush1.bf16.msra.mxu0 %v2462
      %3065 = vmatprep.subr.bf16.mxu0 %v2459
      %3066 = vmatpush1.bf16.msra.mxu0 %v2458
      %3067 = vmatprep.subr.bf16.mxu0 %v2455
      %3068 = vmatpush1.bf16.msra.mxu0 %v2454
      %3069 = vmatprep.subr.bf16.mxu0 %v2451
      %3070 = vmatpush1.bf16.msra.mxu0 %v2450
      %3071 = vmatprep.subr.bf16.mxu0 %v2511
      %3072 = vmatpush2.bf16.msra.mxu0 %v2510
      %3073 = vmatprep.subr.bf16.mxu0 %v2507
      %3074 = vmatpush2.bf16.msra.mxu0 %v2506
      %3075 = vmatprep.subr.bf16.mxu0 %v2503
      %3076 = vmatpush2.bf16.msra.mxu0 %v2502
      %3077 = vmatprep.subr.bf16.mxu0 %v2499
      %3078 = vmatpush2.bf16.msra.mxu0 %v2498
      %3079 = vmatprep.subr.bf16.mxu0 %v2495
      %3080 = vmatpush2.bf16.msra.mxu0 %v2494
      %3081 = vmatprep.subr.bf16.mxu0 %v2491
      %3082 = vmatpush2.bf16.msra.mxu0 %v2490
      %3083 = vmatprep.subr.bf16.mxu0 %v2487
      %3084 = vmatpush2.bf16.msra.mxu0 %v2486
      %3085 = vmatprep.subr.bf16.mxu0 %v2483
      %3086 = vmatpush2.bf16.msra.mxu0 %v2482
      %3087 = vmatprep.mubr.bf16.mxu0 %v1209
      %3088 = vmatmul.mubr.bf16.gmra.mxu0 %v1208
      %v3089 = vpop.f32.mrf.mxu0
      %v3090 = vadd.f32 %v3049, %v3089
      %v3091 = vpop.f32.mrf.mxu0
      %v3092 = vadd.f32 %v3051, %v3091
      %v3093 = vpop.f32.mrf.mxu0
      %v3094 = vpop.f32.mrf.mxu0
      %3095 = vdwg.mxu0
      %v3096 = vmax.f32 %v2926, 0.0
      %v3097 = vmax.f32 %v2928, 0.0
      %v3098 = vmax.f32 %v3090, 0.0
      %v3099 = vmax.f32 %v3092, 0.0
      %v3100 = vpack.c.bf16 %v3096, %v3096
      %v3101 = vpack.c.bf16 %v3097, %v3097
      %v3102 = vpack.c.bf16 %v3098, %v3098
      %v3103 = vpack.c.bf16 %v3099, %v3099
      %v3104 = vld [vmem:[#allocation14] sm:$0xff]
      %v3105 = vld [vmem:[#allocation14 + $0x8] sm:$0xff]
      %v3106 = vld [vmem:[#allocation14 + $0x10] sm:$0xff]
      %v3107 = vld [vmem:[#allocation14 + $0x18] sm:$0xff]
      %v3108 = vld [vmem:[#allocation14 + $0x20] sm:$0xff]
      %v3109 = vld [vmem:[#allocation14 + $0x28] sm:$0xff]
      %v3110 = vld [vmem:[#allocation14 + $0x30] sm:$0xff]
      %v3111 = vld [vmem:[#allocation14 + $0x38] sm:$0xff]
      %v3112 = vld [vmem:[#allocation14 + $0x40] sm:$0xff]
      %v3113 = vld [vmem:[#allocation14 + $0x48] sm:$0xff]
      %v3114 = vld [vmem:[#allocation14 + $0x50] sm:$0xff]
      %v3115 = vld [vmem:[#allocation14 + $0x58] sm:$0xff]
      %v3116 = vld [vmem:[#allocation14 + $0x60] sm:$0xff]
      %v3117 = vld [vmem:[#allocation14 + $0x68] sm:$0xff]
      %v3118 = vld [vmem:[#allocation14 + $0x70] sm:$0xff]
      %v3119 = vld [vmem:[#allocation14 + $0x78] sm:$0xff]
      %v3120 = vld [vmem:[#allocation14 + $0x80] sm:$0xff]
      %v3121 = vld [vmem:[#allocation14 + $0x88] sm:$0xff]
      %v3122 = vld [vmem:[#allocation14 + $0x90] sm:$0xff]
      %v3123 = vld [vmem:[#allocation14 + $0x98] sm:$0xff]
      %v3124 = vld [vmem:[#allocation14 + $0xa0] sm:$0xff]
      %v3125 = vld [vmem:[#allocation14 + $0xa8] sm:$0xff]
      %v3126 = vld [vmem:[#allocation14 + $0xb0] sm:$0xff]
      %v3127 = vld [vmem:[#allocation14 + $0xb8] sm:$0xff]
      %v3128 = vld [vmem:[#allocation14 + $0xc0] sm:$0xff]
      %v3129 = vld [vmem:[#allocation14 + $0xc8] sm:$0xff]
      %v3130 = vld [vmem:[#allocation14 + $0xd0] sm:$0xff]
      %v3131 = vld [vmem:[#allocation14 + $0xd8] sm:$0xff]
      %v3132 = vld [vmem:[#allocation14 + $0xe0] sm:$0xff]
      %v3133 = vld [vmem:[#allocation14 + $0xe8] sm:$0xff]
      %v3134 = vld [vmem:[#allocation14 + $0xf0] sm:$0xff]
      %v3135 = vld [vmem:[#allocation14 + $0xf8] sm:$0xff]
      %v3136 = vld [vmem:[#allocation14 + $0x100] sm:$0xff]
      %v3137 = vld [vmem:[#allocation14 + $0x108] sm:$0xff]
      %v3138 = vld [vmem:[#allocation14 + $0x110] sm:$0xff]
      %v3139 = vld [vmem:[#allocation14 + $0x118] sm:$0xff]
      %v3140 = vld [vmem:[#allocation14 + $0x120] sm:$0xff]
      %v3141 = vld [vmem:[#allocation14 + $0x128] sm:$0xff]
      %v3142 = vld [vmem:[#allocation14 + $0x130] sm:$0xff]
      %v3143 = vld [vmem:[#allocation14 + $0x138] sm:$0xff]
      %v3144 = vld [vmem:[#allocation14 + $0x140] sm:$0xff]
      %v3145 = vld [vmem:[#allocation14 + $0x148] sm:$0xff]
      %v3146 = vld [vmem:[#allocation14 + $0x150] sm:$0xff]
      %v3147 = vld [vmem:[#allocation14 + $0x158] sm:$0xff]
      %v3148 = vld [vmem:[#allocation14 + $0x160] sm:$0xff]
      %v3149 = vld [vmem:[#allocation14 + $0x168] sm:$0xff]
      %v3150 = vld [vmem:[#allocation14 + $0x170] sm:$0xff]
      %v3151 = vld [vmem:[#allocation14 + $0x178] sm:$0xff]
      %v3152 = vld [vmem:[#allocation14 + $0x180] sm:$0xff]
      %v3153 = vld [vmem:[#allocation14 + $0x188] sm:$0xff]
      %v3154 = vld [vmem:[#allocation14 + $0x190] sm:$0xff]
      %v3155 = vld [vmem:[#allocation14 + $0x198] sm:$0xff]
      %v3156 = vld [vmem:[#allocation14 + $0x1a0] sm:$0xff]
      %v3157 = vld [vmem:[#allocation14 + $0x1a8] sm:$0xff]
      %v3158 = vld [vmem:[#allocation14 + $0x1b0] sm:$0xff]
      %v3159 = vld [vmem:[#allocation14 + $0x1b8] sm:$0xff]
      %v3160 = vld [vmem:[#allocation14 + $0x1c0] sm:$0xff]
      %v3161 = vld [vmem:[#allocation14 + $0x1c8] sm:$0xff]
      %v3162 = vld [vmem:[#allocation14 + $0x1d0] sm:$0xff]
      %v3163 = vld [vmem:[#allocation14 + $0x1d8] sm:$0xff]
      %v3164 = vld [vmem:[#allocation14 + $0x1e0] sm:$0xff]
      %v3165 = vld [vmem:[#allocation14 + $0x1e8] sm:$0xff]
      %v3166 = vld [vmem:[#allocation14 + $0x1f0] sm:$0xff]
      %v3167 = vld [vmem:[#allocation14 + $0x1f8] sm:$0xff]
      %v3168 = vld [vmem:[#allocation14 + $0x200] sm:$0xff]
      %v3169 = vld [vmem:[#allocation14 + $0x208] sm:$0xff]
      %v3170 = vld [vmem:[#allocation14 + $0x210] sm:$0xff]
      %v3171 = vld [vmem:[#allocation14 + $0x218] sm:$0xff]
      %v3172 = vld [vmem:[#allocation14 + $0x220] sm:$0xff]
      %v3173 = vld [vmem:[#allocation14 + $0x228] sm:$0xff]
      %v3174 = vld [vmem:[#allocation14 + $0x230] sm:$0xff]
      %v3175 = vld [vmem:[#allocation14 + $0x238] sm:$0xff]
      %v3176 = vld [vmem:[#allocation14 + $0x240] sm:$0xff]
      %v3177 = vld [vmem:[#allocation14 + $0x248] sm:$0xff]
      %v3178 = vld [vmem:[#allocation14 + $0x250] sm:$0xff]
      %v3179 = vld [vmem:[#allocation14 + $0x258] sm:$0xff]
      %v3180 = vld [vmem:[#allocation14 + $0x260] sm:$0xff]
      %v3181 = vld [vmem:[#allocation14 + $0x268] sm:$0xff]
      %v3182 = vld [vmem:[#allocation14 + $0x270] sm:$0xff]
      %v3183 = vld [vmem:[#allocation14 + $0x278] sm:$0xff]
      %v3184 = vld [vmem:[#allocation14 + $0x280] sm:$0xff]
      %v3185 = vld [vmem:[#allocation14 + $0x288] sm:$0xff]
      %v3186 = vld [vmem:[#allocation14 + $0x290] sm:$0xff]
      %v3187 = vld [vmem:[#allocation14 + $0x298] sm:$0xff]
      %v3188 = vld [vmem:[#allocation14 + $0x2a0] sm:$0xff]
      %v3189 = vld [vmem:[#allocation14 + $0x2a8] sm:$0xff]
      %v3190 = vld [vmem:[#allocation14 + $0x2b0] sm:$0xff]
      %v3191 = vld [vmem:[#allocation14 + $0x2b8] sm:$0xff]
      %v3192 = vld [vmem:[#allocation14 + $0x2c0] sm:$0xff]
      %v3193 = vld [vmem:[#allocation14 + $0x2c8] sm:$0xff]
      %v3194 = vld [vmem:[#allocation14 + $0x2d0] sm:$0xff]
      %v3195 = vld [vmem:[#allocation14 + $0x2d8] sm:$0xff]
      %v3196 = vld [vmem:[#allocation14 + $0x2e0] sm:$0xff]
      %v3197 = vld [vmem:[#allocation14 + $0x2e8] sm:$0xff]
      %v3198 = vld [vmem:[#allocation14 + $0x2f0] sm:$0xff]
      %v3199 = vld [vmem:[#allocation14 + $0x2f8] sm:$0xff]
      %v3200 = vld [vmem:[#allocation14 + $0x300] sm:$0xff]
      %v3201 = vld [vmem:[#allocation14 + $0x308] sm:$0xff]
      %v3202 = vld [vmem:[#allocation14 + $0x310] sm:$0xff]
      %v3203 = vld [vmem:[#allocation14 + $0x318] sm:$0xff]
      %v3204 = vld [vmem:[#allocation14 + $0x320] sm:$0xff]
      %v3205 = vld [vmem:[#allocation14 + $0x328] sm:$0xff]
      %v3206 = vld [vmem:[#allocation14 + $0x330] sm:$0xff]
      %v3207 = vld [vmem:[#allocation14 + $0x338] sm:$0xff]
      %v3208 = vld [vmem:[#allocation14 + $0x340] sm:$0xff]
      %v3209 = vld [vmem:[#allocation14 + $0x348] sm:$0xff]
      %v3210 = vld [vmem:[#allocation14 + $0x350] sm:$0xff]
      %v3211 = vld [vmem:[#allocation14 + $0x358] sm:$0xff]
      %v3212 = vld [vmem:[#allocation14 + $0x360] sm:$0xff]
      %v3213 = vld [vmem:[#allocation14 + $0x368] sm:$0xff]
      %v3214 = vld [vmem:[#allocation14 + $0x370] sm:$0xff]
      %v3215 = vld [vmem:[#allocation14 + $0x378] sm:$0xff]
      %v3216 = vld [vmem:[#allocation14 + $0x380] sm:$0xff]
      %v3217 = vld [vmem:[#allocation14 + $0x388] sm:$0xff]
      %v3218 = vld [vmem:[#allocation14 + $0x390] sm:$0xff]
      %v3219 = vld [vmem:[#allocation14 + $0x398] sm:$0xff]
      %v3220 = vld [vmem:[#allocation14 + $0x3a0] sm:$0xff]
      %v3221 = vld [vmem:[#allocation14 + $0x3a8] sm:$0xff]
      %v3222 = vld [vmem:[#allocation14 + $0x3b0] sm:$0xff]
      %v3223 = vld [vmem:[#allocation14 + $0x3b8] sm:$0xff]
      %v3224 = vld [vmem:[#allocation14 + $0x3c0] sm:$0xff]
      %v3225 = vld [vmem:[#allocation14 + $0x3c8] sm:$0xff]
      %v3226 = vld [vmem:[#allocation14 + $0x3d0] sm:$0xff]
      %v3227 = vld [vmem:[#allocation14 + $0x3d8] sm:$0xff]
      %v3228 = vld [vmem:[#allocation14 + $0x3e0] sm:$0xff]
      %v3229 = vld [vmem:[#allocation14 + $0x3e8] sm:$0xff]
      %v3230 = vld [vmem:[#allocation14 + $0x3f0] sm:$0xff]
      %v3231 = vld [vmem:[#allocation14 + $0x3f8] sm:$0xff]
      %v3232 = vld [vmem:[%s9] sm:$0xf]
      %v3234 = vlaneseq
      %v3235 = vshrl.u32 %v3234, 7
      %v3236 = vsub.s32 0, %v3235
      %v3237 = vrot.slane %v3232, %v3236
      %v3238 = vlaneseq
      %v3239 = vshrl.u32 %v3238, 7
      %v3240 = vsub.s32 1, %v3239
      %v3241 = vrot.slane %v3232, %v3240
      %v3242 = vlaneseq
      %v3243 = vshrl.u32 %v3242, 7
      %v3244 = vsub.s32 2, %v3243
      %v3245 = vrot.slane %v3232, %v3244
      %v3246 = vlaneseq
      %v3247 = vshrl.u32 %v3246, 7
      %v3248 = vsub.s32 3, %v3247
      %v3249 = vrot.slane %v3232, %v3248
      %v3382 = vunpack.c.l.b16 %v3104
      %v3383 = vunpack.c.h.b16 %v3104
      %v3384 = vunpack.c.l.b16 %v3105
      %v3385 = vunpack.c.h.b16 %v3105
      %v3386 = vunpack.c.l.b16 %v3106
      %v3387 = vunpack.c.h.b16 %v3106
      %v3388 = vunpack.c.l.b16 %v3107
      %v3389 = vunpack.c.h.b16 %v3107
      %v3390 = vunpack.c.l.b16 %v3108
      %v3391 = vunpack.c.h.b16 %v3108
      %v3392 = vunpack.c.l.b16 %v3109
      %v3393 = vunpack.c.h.b16 %v3109
      %v3394 = vunpack.c.l.b16 %v3110
      %v3395 = vunpack.c.h.b16 %v3110
      %v3396 = vunpack.c.l.b16 %v3111
      %v3397 = vunpack.c.h.b16 %v3111
      %v3398 = vunpack.c.l.b16 %v3112
      %v3399 = vunpack.c.h.b16 %v3112
      %v3400 = vunpack.c.l.b16 %v3113
      %v3401 = vunpack.c.h.b16 %v3113
      %v3402 = vunpack.c.l.b16 %v3114
      %v3403 = vunpack.c.h.b16 %v3114
      %v3404 = vunpack.c.l.b16 %v3115
      %v3405 = vunpack.c.h.b16 %v3115
      %v3406 = vunpack.c.l.b16 %v3116
      %v3407 = vunpack.c.h.b16 %v3116
      %v3408 = vunpack.c.l.b16 %v3117
      %v3409 = vunpack.c.h.b16 %v3117
      %v3410 = vunpack.c.l.b16 %v3118
      %v3411 = vunpack.c.h.b16 %v3118
      %v3412 = vunpack.c.l.b16 %v3119
      %v3413 = vunpack.c.h.b16 %v3119
      %v3414 = vunpack.c.l.b16 %v3120
      %v3415 = vunpack.c.h.b16 %v3120
      %v3416 = vunpack.c.l.b16 %v3121
      %v3417 = vunpack.c.h.b16 %v3121
      %v3418 = vunpack.c.l.b16 %v3122
      %v3419 = vunpack.c.h.b16 %v3122
      %v3420 = vunpack.c.l.b16 %v3123
      %v3421 = vunpack.c.h.b16 %v3123
      %v3422 = vunpack.c.l.b16 %v3124
      %v3423 = vunpack.c.h.b16 %v3124
      %v3424 = vunpack.c.l.b16 %v3125
      %v3425 = vunpack.c.h.b16 %v3125
      %v3426 = vunpack.c.l.b16 %v3126
      %v3427 = vunpack.c.h.b16 %v3126
      %v3428 = vunpack.c.l.b16 %v3127
      %v3429 = vunpack.c.h.b16 %v3127
      %v3430 = vunpack.c.l.b16 %v3128
      %v3431 = vunpack.c.h.b16 %v3128
      %v3432 = vunpack.c.l.b16 %v3129
      %v3433 = vunpack.c.h.b16 %v3129
      %v3434 = vunpack.c.l.b16 %v3130
      %v3435 = vunpack.c.h.b16 %v3130
      %v3436 = vunpack.c.l.b16 %v3131
      %v3437 = vunpack.c.h.b16 %v3131
      %v3438 = vunpack.c.l.b16 %v3132
      %v3439 = vunpack.c.h.b16 %v3132
      %v3440 = vunpack.c.l.b16 %v3133
      %v3441 = vunpack.c.h.b16 %v3133
      %v3442 = vunpack.c.l.b16 %v3134
      %v3443 = vunpack.c.h.b16 %v3134
      %v3444 = vunpack.c.l.b16 %v3135
      %v3445 = vunpack.c.h.b16 %v3135
      %v3446 = vunpack.c.l.b16 %v3136
      %v3447 = vunpack.c.h.b16 %v3136
      %v3448 = vunpack.c.l.b16 %v3137
      %v3449 = vunpack.c.h.b16 %v3137
      %v3450 = vunpack.c.l.b16 %v3138
      %v3451 = vunpack.c.h.b16 %v3138
      %v3452 = vunpack.c.l.b16 %v3139
      %v3453 = vunpack.c.h.b16 %v3139
      %v3454 = vunpack.c.l.b16 %v3140
      %v3455 = vunpack.c.h.b16 %v3140
      %v3456 = vunpack.c.l.b16 %v3141
      %v3457 = vunpack.c.h.b16 %v3141
      %v3458 = vunpack.c.l.b16 %v3142
      %v3459 = vunpack.c.h.b16 %v3142
      %v3460 = vunpack.c.l.b16 %v3143
      %v3461 = vunpack.c.h.b16 %v3143
      %v3462 = vunpack.c.l.b16 %v3144
      %v3463 = vunpack.c.h.b16 %v3144
      %v3464 = vunpack.c.l.b16 %v3145
      %v3465 = vunpack.c.h.b16 %v3145
      %v3466 = vunpack.c.l.b16 %v3146
      %v3467 = vunpack.c.h.b16 %v3146
      %v3468 = vunpack.c.l.b16 %v3147
      %v3469 = vunpack.c.h.b16 %v3147
      %v3470 = vunpack.c.l.b16 %v3148
      %v3471 = vunpack.c.h.b16 %v3148
      %v3472 = vunpack.c.l.b16 %v3149
      %v3473 = vunpack.c.h.b16 %v3149
      %v3474 = vunpack.c.l.b16 %v3150
      %v3475 = vunpack.c.h.b16 %v3150
      %v3476 = vunpack.c.l.b16 %v3151
      %v3477 = vunpack.c.h.b16 %v3151
      %v3478 = vunpack.c.l.b16 %v3152
      %v3479 = vunpack.c.h.b16 %v3152
      %v3480 = vunpack.c.l.b16 %v3153
      %v3481 = vunpack.c.h.b16 %v3153
      %v3482 = vunpack.c.l.b16 %v3154
      %v3483 = vunpack.c.h.b16 %v3154
      %v3484 = vunpack.c.l.b16 %v3155
      %v3485 = vunpack.c.h.b16 %v3155
      %v3486 = vunpack.c.l.b16 %v3156
      %v3487 = vunpack.c.h.b16 %v3156
      %v3488 = vunpack.c.l.b16 %v3157
      %v3489 = vunpack.c.h.b16 %v3157
      %v3490 = vunpack.c.l.b16 %v3158
      %v3491 = vunpack.c.h.b16 %v3158
      %v3492 = vunpack.c.l.b16 %v3159
      %v3493 = vunpack.c.h.b16 %v3159
      %v3494 = vunpack.c.l.b16 %v3160
      %v3495 = vunpack.c.h.b16 %v3160
      %v3496 = vunpack.c.l.b16 %v3161
      %v3497 = vunpack.c.h.b16 %v3161
      %v3498 = vunpack.c.l.b16 %v3162
      %v3499 = vunpack.c.h.b16 %v3162
      %v3500 = vunpack.c.l.b16 %v3163
      %v3501 = vunpack.c.h.b16 %v3163
      %v3502 = vunpack.c.l.b16 %v3164
      %v3503 = vunpack.c.h.b16 %v3164
      %v3504 = vunpack.c.l.b16 %v3165
      %v3505 = vunpack.c.h.b16 %v3165
      %v3506 = vunpack.c.l.b16 %v3166
      %v3507 = vunpack.c.h.b16 %v3166
      %v3508 = vunpack.c.l.b16 %v3167
      %v3509 = vunpack.c.h.b16 %v3167
      %v3510 = vunpack.c.l.b16 %v3168
      %v3511 = vunpack.c.h.b16 %v3168
      %v3512 = vunpack.c.l.b16 %v3169
      %v3513 = vunpack.c.h.b16 %v3169
      %v3514 = vunpack.c.l.b16 %v3170
      %v3515 = vunpack.c.h.b16 %v3170
      %v3516 = vunpack.c.l.b16 %v3171
      %v3517 = vunpack.c.h.b16 %v3171
      %v3518 = vunpack.c.l.b16 %v3172
      %v3519 = vunpack.c.h.b16 %v3172
      %v3520 = vunpack.c.l.b16 %v3173
      %v3521 = vunpack.c.h.b16 %v3173
      %v3522 = vunpack.c.l.b16 %v3174
      %v3523 = vunpack.c.h.b16 %v3174
      %v3524 = vunpack.c.l.b16 %v3175
      %v3525 = vunpack.c.h.b16 %v3175
      %v3526 = vunpack.c.l.b16 %v3176
      %v3527 = vunpack.c.h.b16 %v3176
      %v3528 = vunpack.c.l.b16 %v3177
      %v3529 = vunpack.c.h.b16 %v3177
      %v3530 = vunpack.c.l.b16 %v3178
      %v3531 = vunpack.c.h.b16 %v3178
      %v3532 = vunpack.c.l.b16 %v3179
      %v3533 = vunpack.c.h.b16 %v3179
      %v3534 = vunpack.c.l.b16 %v3180
      %v3535 = vunpack.c.h.b16 %v3180
      %v3536 = vunpack.c.l.b16 %v3181
      %v3537 = vunpack.c.h.b16 %v3181
      %v3538 = vunpack.c.l.b16 %v3182
      %v3539 = vunpack.c.h.b16 %v3182
      %v3540 = vunpack.c.l.b16 %v3183
      %v3541 = vunpack.c.h.b16 %v3183
      %v3542 = vunpack.c.l.b16 %v3184
      %v3543 = vunpack.c.h.b16 %v3184
      %v3544 = vunpack.c.l.b16 %v3185
      %v3545 = vunpack.c.h.b16 %v3185
      %v3546 = vunpack.c.l.b16 %v3186
      %v3547 = vunpack.c.h.b16 %v3186
      %v3548 = vunpack.c.l.b16 %v3187
      %v3549 = vunpack.c.h.b16 %v3187
      %v3550 = vunpack.c.l.b16 %v3188
      %v3551 = vunpack.c.h.b16 %v3188
      %v3552 = vunpack.c.l.b16 %v3189
      %v3553 = vunpack.c.h.b16 %v3189
      %v3554 = vunpack.c.l.b16 %v3190
      %v3555 = vunpack.c.h.b16 %v3190
      %v3556 = vunpack.c.l.b16 %v3191
      %v3557 = vunpack.c.h.b16 %v3191
      %v3558 = vunpack.c.l.b16 %v3192
      %v3559 = vunpack.c.h.b16 %v3192
      %v3560 = vunpack.c.l.b16 %v3193
      %v3561 = vunpack.c.h.b16 %v3193
      %v3562 = vunpack.c.l.b16 %v3194
      %v3563 = vunpack.c.h.b16 %v3194
      %v3564 = vunpack.c.l.b16 %v3195
      %v3565 = vunpack.c.h.b16 %v3195
      %v3566 = vunpack.c.l.b16 %v3196
      %v3567 = vunpack.c.h.b16 %v3196
      %v3568 = vunpack.c.l.b16 %v3197
      %v3569 = vunpack.c.h.b16 %v3197
      %v3570 = vunpack.c.l.b16 %v3198
      %v3571 = vunpack.c.h.b16 %v3198
      %v3572 = vunpack.c.l.b16 %v3199
      %v3573 = vunpack.c.h.b16 %v3199
      %v3574 = vunpack.c.l.b16 %v3200
      %v3575 = vunpack.c.h.b16 %v3200
      %v3576 = vunpack.c.l.b16 %v3201
      %v3577 = vunpack.c.h.b16 %v3201
      %v3578 = vunpack.c.l.b16 %v3202
      %v3579 = vunpack.c.h.b16 %v3202
      %v3580 = vunpack.c.l.b16 %v3203
      %v3581 = vunpack.c.h.b16 %v3203
      %v3582 = vunpack.c.l.b16 %v3204
      %v3583 = vunpack.c.h.b16 %v3204
      %v3584 = vunpack.c.l.b16 %v3205
      %v3585 = vunpack.c.h.b16 %v3205
      %v3586 = vunpack.c.l.b16 %v3206
      %v3587 = vunpack.c.h.b16 %v3206
      %v3588 = vunpack.c.l.b16 %v3207
      %v3589 = vunpack.c.h.b16 %v3207
      %v3590 = vunpack.c.l.b16 %v3208
      %v3591 = vunpack.c.h.b16 %v3208
      %v3592 = vunpack.c.l.b16 %v3209
      %v3593 = vunpack.c.h.b16 %v3209
      %v3594 = vunpack.c.l.b16 %v3210
      %v3595 = vunpack.c.h.b16 %v3210
      %v3596 = vunpack.c.l.b16 %v3211
      %v3597 = vunpack.c.h.b16 %v3211
      %v3598 = vunpack.c.l.b16 %v3212
      %v3599 = vunpack.c.h.b16 %v3212
      %v3600 = vunpack.c.l.b16 %v3213
      %v3601 = vunpack.c.h.b16 %v3213
      %v3602 = vunpack.c.l.b16 %v3214
      %v3603 = vunpack.c.h.b16 %v3214
      %v3604 = vunpack.c.l.b16 %v3215
      %v3605 = vunpack.c.h.b16 %v3215
      %v3606 = vunpack.c.l.b16 %v3216
      %v3607 = vunpack.c.h.b16 %v3216
      %v3608 = vunpack.c.l.b16 %v3217
      %v3609 = vunpack.c.h.b16 %v3217
      %v3610 = vunpack.c.l.b16 %v3218
      %v3611 = vunpack.c.h.b16 %v3218
      %v3612 = vunpack.c.l.b16 %v3219
      %v3613 = vunpack.c.h.b16 %v3219
      %v3614 = vunpack.c.l.b16 %v3220
      %v3615 = vunpack.c.h.b16 %v3220
      %v3616 = vunpack.c.l.b16 %v3221
      %v3617 = vunpack.c.h.b16 %v3221
      %v3618 = vunpack.c.l.b16 %v3222
      %v3619 = vunpack.c.h.b16 %v3222
      %v3620 = vunpack.c.l.b16 %v3223
      %v3621 = vunpack.c.h.b16 %v3223
      %v3622 = vunpack.c.l.b16 %v3224
      %v3623 = vunpack.c.h.b16 %v3224
      %v3624 = vunpack.c.l.b16 %v3225
      %v3625 = vunpack.c.h.b16 %v3225
      %v3626 = vunpack.c.l.b16 %v3226
      %v3627 = vunpack.c.h.b16 %v3226
      %v3628 = vunpack.c.l.b16 %v3227
      %v3629 = vunpack.c.h.b16 %v3227
      %v3630 = vunpack.c.l.b16 %v3228
      %v3631 = vunpack.c.h.b16 %v3228
      %v3632 = vunpack.c.l.b16 %v3229
      %v3633 = vunpack.c.h.b16 %v3229
      %v3634 = vunpack.c.l.b16 %v3230
      %v3635 = vunpack.c.h.b16 %v3230
      %v3636 = vunpack.c.l.b16 %v3231
      %v3637 = vunpack.c.h.b16 %v3231
      %v3638 = vpack.c.b16 %v3386, %v3382
      %v3639 = vpack.c.b16 %v3387, %v3383
      %v3640 = vpack.c.b16 %v3388, %v3384
      %v3641 = vpack.c.b16 %v3389, %v3385
      %v3642 = vpack.c.b16 %v3394, %v3390
      %v3643 = vpack.c.b16 %v3395, %v3391
      %v3644 = vpack.c.b16 %v3396, %v3392
      %v3645 = vpack.c.b16 %v3397, %v3393
      %v3646 = vpack.c.b16 %v3402, %v3398
      %v3647 = vpack.c.b16 %v3403, %v3399
      %v3648 = vpack.c.b16 %v3404, %v3400
      %v3649 = vpack.c.b16 %v3405, %v3401
      %v3650 = vpack.c.b16 %v3410, %v3406
      %v3651 = vpack.c.b16 %v3411, %v3407
      %v3652 = vpack.c.b16 %v3412, %v3408
      %v3653 = vpack.c.b16 %v3413, %v3409
      %v3654 = vpack.c.b16 %v3418, %v3414
      %v3655 = vpack.c.b16 %v3419, %v3415
      %v3656 = vpack.c.b16 %v3420, %v3416
      %v3657 = vpack.c.b16 %v3421, %v3417
      %v3658 = vpack.c.b16 %v3426, %v3422
      %v3659 = vpack.c.b16 %v3427, %v3423
      %v3660 = vpack.c.b16 %v3428, %v3424
      %v3661 = vpack.c.b16 %v3429, %v3425
      %v3662 = vpack.c.b16 %v3434, %v3430
      %v3663 = vpack.c.b16 %v3435, %v3431
      %v3664 = vpack.c.b16 %v3436, %v3432
      %v3665 = vpack.c.b16 %v3437, %v3433
      %v3666 = vpack.c.b16 %v3442, %v3438
      %v3667 = vpack.c.b16 %v3443, %v3439
      %v3668 = vpack.c.b16 %v3444, %v3440
      %v3669 = vpack.c.b16 %v3445, %v3441
      %v3670 = vpack.c.b16 %v3450, %v3446
      %v3671 = vpack.c.b16 %v3451, %v3447
      %v3672 = vpack.c.b16 %v3452, %v3448
      %v3673 = vpack.c.b16 %v3453, %v3449
      %v3674 = vpack.c.b16 %v3458, %v3454
      %v3675 = vpack.c.b16 %v3459, %v3455
      %v3676 = vpack.c.b16 %v3460, %v3456
      %v3677 = vpack.c.b16 %v3461, %v3457
      %v3678 = vpack.c.b16 %v3466, %v3462
      %v3679 = vpack.c.b16 %v3467, %v3463
      %v3680 = vpack.c.b16 %v3468, %v3464
      %v3681 = vpack.c.b16 %v3469, %v3465
      %v3682 = vpack.c.b16 %v3474, %v3470
      %v3683 = vpack.c.b16 %v3475, %v3471
      %v3684 = vpack.c.b16 %v3476, %v3472
      %v3685 = vpack.c.b16 %v3477, %v3473
      %v3686 = vpack.c.b16 %v3482, %v3478
      %v3687 = vpack.c.b16 %v3483, %v3479
      %v3688 = vpack.c.b16 %v3484, %v3480
      %v3689 = vpack.c.b16 %v3485, %v3481
      %v3690 = vpack.c.b16 %v3490, %v3486
      %v3691 = vpack.c.b16 %v3491, %v3487
      %v3692 = vpack.c.b16 %v3492, %v3488
      %v3693 = vpack.c.b16 %v3493, %v3489
      %v3694 = vpack.c.b16 %v3498, %v3494
      %v3695 = vpack.c.b16 %v3499, %v3495
      %v3696 = vpack.c.b16 %v3500, %v3496
      %v3697 = vpack.c.b16 %v3501, %v3497
      %v3698 = vpack.c.b16 %v3506, %v3502
      %v3699 = vpack.c.b16 %v3507, %v3503
      %v3700 = vpack.c.b16 %v3508, %v3504
      %v3701 = vpack.c.b16 %v3509, %v3505
      %v3702 = vpack.c.b16 %v3514, %v3510
      %v3703 = vpack.c.b16 %v3515, %v3511
      %v3704 = vpack.c.b16 %v3516, %v3512
      %v3705 = vpack.c.b16 %v3517, %v3513
      %v3706 = vpack.c.b16 %v3522, %v3518
      %v3707 = vpack.c.b16 %v3523, %v3519
      %v3708 = vpack.c.b16 %v3524, %v3520
      %v3709 = vpack.c.b16 %v3525, %v3521
      %v3710 = vpack.c.b16 %v3530, %v3526
      %v3711 = vpack.c.b16 %v3531, %v3527
      %v3712 = vpack.c.b16 %v3532, %v3528
      %v3713 = vpack.c.b16 %v3533, %v3529
      %v3714 = vpack.c.b16 %v3538, %v3534
      %v3715 = vpack.c.b16 %v3539, %v3535
      %v3716 = vpack.c.b16 %v3540, %v3536
      %v3717 = vpack.c.b16 %v3541, %v3537
      %v3718 = vpack.c.b16 %v3546, %v3542
      %v3719 = vpack.c.b16 %v3547, %v3543
      %v3720 = vpack.c.b16 %v3548, %v3544
      %v3721 = vpack.c.b16 %v3549, %v3545
      %v3722 = vpack.c.b16 %v3554, %v3550
      %v3723 = vpack.c.b16 %v3555, %v3551
      %v3724 = vpack.c.b16 %v3556, %v3552
      %v3725 = vpack.c.b16 %v3557, %v3553
      %v3726 = vpack.c.b16 %v3562, %v3558
      %v3727 = vpack.c.b16 %v3563, %v3559
      %v3728 = vpack.c.b16 %v3564, %v3560
      %v3729 = vpack.c.b16 %v3565, %v3561
      %v3730 = vpack.c.b16 %v3570, %v3566
      %v3731 = vpack.c.b16 %v3571, %v3567
      %v3732 = vpack.c.b16 %v3572, %v3568
      %v3733 = vpack.c.b16 %v3573, %v3569
      %v3734 = vpack.c.b16 %v3578, %v3574
      %v3735 = vpack.c.b16 %v3579, %v3575
      %v3736 = vpack.c.b16 %v3580, %v3576
      %v3737 = vpack.c.b16 %v3581, %v3577
      %v3738 = vpack.c.b16 %v3586, %v3582
      %v3739 = vpack.c.b16 %v3587, %v3583
      %v3740 = vpack.c.b16 %v3588, %v3584
      %v3741 = vpack.c.b16 %v3589, %v3585
      %v3742 = vpack.c.b16 %v3594, %v3590
      %v3743 = vpack.c.b16 %v3595, %v3591
      %v3744 = vpack.c.b16 %v3596, %v3592
      %v3745 = vpack.c.b16 %v3597, %v3593
      %v3746 = vpack.c.b16 %v3602, %v3598
      %v3747 = vpack.c.b16 %v3603, %v3599
      %v3748 = vpack.c.b16 %v3604, %v3600
      %v3749 = vpack.c.b16 %v3605, %v3601
      %v3750 = vpack.c.b16 %v3610, %v3606
      %v3751 = vpack.c.b16 %v3611, %v3607
      %v3752 = vpack.c.b16 %v3612, %v3608
      %v3753 = vpack.c.b16 %v3613, %v3609
      %v3754 = vpack.c.b16 %v3618, %v3614
      %v3755 = vpack.c.b16 %v3619, %v3615
      %v3756 = vpack.c.b16 %v3620, %v3616
      %v3757 = vpack.c.b16 %v3621, %v3617
      %v3758 = vpack.c.b16 %v3626, %v3622
      %v3759 = vpack.c.b16 %v3627, %v3623
      %v3760 = vpack.c.b16 %v3628, %v3624
      %v3761 = vpack.c.b16 %v3629, %v3625
      %v3762 = vpack.c.b16 %v3634, %v3630
      %v3763 = vpack.c.b16 %v3635, %v3631
      %v3764 = vpack.c.b16 %v3636, %v3632
      %v3765 = vpack.c.b16 %v3637, %v3633
      %3894 = vmatprep.subr.bf16.mxu0 %v3667
      %3895 = vmatpush1.bf16.msra.mxu0 %v3666
      %3896 = vmatprep.subr.bf16.mxu0 %v3663
      %3897 = vmatpush1.bf16.msra.mxu0 %v3662
      %3898 = vmatprep.subr.bf16.mxu0 %v3659
      %3899 = vmatpush1.bf16.msra.mxu0 %v3658
      %3900 = vmatprep.subr.bf16.mxu0 %v3655
      %3901 = vmatpush1.bf16.msra.mxu0 %v3654
      %3902 = vmatprep.subr.bf16.mxu0 %v3651
      %3903 = vmatpush1.bf16.msra.mxu0 %v3650
      %3904 = vmatprep.subr.bf16.mxu0 %v3647
      %3905 = vmatpush1.bf16.msra.mxu0 %v3646
      %3906 = vmatprep.subr.bf16.mxu0 %v3643
      %3907 = vmatpush1.bf16.msra.mxu0 %v3642
      %3908 = vmatprep.subr.bf16.mxu0 %v3639
      %3909 = vmatpush1.bf16.msra.mxu0 %v3638
      %3910 = vmatprep.subr.bf16.mxu0 %v3699
      %3911 = vmatpush2.bf16.msra.mxu0 %v3698
      %3912 = vmatprep.subr.bf16.mxu0 %v3695
      %3913 = vmatpush2.bf16.msra.mxu0 %v3694
      %3914 = vmatprep.subr.bf16.mxu0 %v3691
      %3915 = vmatpush2.bf16.msra.mxu0 %v3690
      %3916 = vmatprep.subr.bf16.mxu0 %v3687
      %3917 = vmatpush2.bf16.msra.mxu0 %v3686
      %3918 = vmatprep.subr.bf16.mxu0 %v3683
      %3919 = vmatpush2.bf16.msra.mxu0 %v3682
      %3920 = vmatprep.subr.bf16.mxu0 %v3679
      %3921 = vmatpush2.bf16.msra.mxu0 %v3678
      %3922 = vmatprep.subr.bf16.mxu0 %v3675
      %3923 = vmatpush2.bf16.msra.mxu0 %v3674
      %3924 = vmatprep.subr.bf16.mxu0 %v3671
      %3925 = vmatpush2.bf16.msra.mxu0 %v3670
      %3926 = vmatprep.mubr.bf16.mxu0 %v3101
      %3927 = vmatmul.mubr.bf16.gmra.mxu0 %v3100
      %v3928 = vpop.f32.mrf.mxu0
      %v3929 = vadd.f32 %v3237, %v3928
      %v3930 = vpop.f32.mrf.mxu0
      %v3931 = vadd.f32 %v3241, %v3930
      %v3932 = vpop.f32.mrf.mxu0
      %v3933 = vpop.f32.mrf.mxu0
      %3934 = vdwg.mxu0
      %3935 = vmatprep.subr.bf16.mxu0 %v3731
      %3936 = vmatpush1.bf16.msra.mxu0 %v3730
      %3937 = vmatprep.subr.bf16.mxu0 %v3727
      %3938 = vmatpush1.bf16.msra.mxu0 %v3726
      %3939 = vmatprep.subr.bf16.mxu0 %v3723
      %3940 = vmatpush1.bf16.msra.mxu0 %v3722
      %3941 = vmatprep.subr.bf16.mxu0 %v3719
      %3942 = vmatpush1.bf16.msra.mxu0 %v3718
      %3943 = vmatprep.subr.bf16.mxu0 %v3715
      %3944 = vmatpush1.bf16.msra.mxu0 %v3714
      %3945 = vmatprep.subr.bf16.mxu0 %v3711
      %3946 = vmatpush1.bf16.msra.mxu0 %v3710
      %3947 = vmatprep.subr.bf16.mxu0 %v3707
      %3948 = vmatpush1.bf16.msra.mxu0 %v3706
      %3949 = vmatprep.subr.bf16.mxu0 %v3703
      %3950 = vmatpush1.bf16.msra.mxu0 %v3702
      %3951 = vmatprep.subr.bf16.mxu0 %v3763
      %3952 = vmatpush2.bf16.msra.mxu0 %v3762
      %3953 = vmatprep.subr.bf16.mxu0 %v3759
      %3954 = vmatpush2.bf16.msra.mxu0 %v3758
      %3955 = vmatprep.subr.bf16.mxu0 %v3755
      %3956 = vmatpush2.bf16.msra.mxu0 %v3754
      %3957 = vmatprep.subr.bf16.mxu0 %v3751
      %3958 = vmatpush2.bf16.msra.mxu0 %v3750
      %3959 = vmatprep.subr.bf16.mxu0 %v3747
      %3960 = vmatpush2.bf16.msra.mxu0 %v3746
      %3961 = vmatprep.subr.bf16.mxu0 %v3743
      %3962 = vmatpush2.bf16.msra.mxu0 %v3742
      %3963 = vmatprep.subr.bf16.mxu0 %v3739
      %3964 = vmatpush2.bf16.msra.mxu0 %v3738
      %3965 = vmatprep.subr.bf16.mxu0 %v3735
      %3966 = vmatpush2.bf16.msra.mxu0 %v3734
      %3967 = vmatprep.mubr.bf16.mxu0 %v3103
      %3968 = vmatmul.mubr.bf16.gmra.mxu0 %v3102
      %v3969 = vpop.f32.mrf.mxu0
      %v3970 = vadd.f32 %v3929, %v3969
      %v3971 = vpop.f32.mrf.mxu0
      %v3972 = vadd.f32 %v3931, %v3971
      %v3973 = vpop.f32.mrf.mxu0
      %v3974 = vpop.f32.mrf.mxu0
      %3975 = vdwg.mxu0
      %3976 = vmatprep.subr.bf16.mxu0 %v3669
      %3977 = vmatpush1.bf16.msra.mxu0 %v3668
      %3978 = vmatprep.subr.bf16.mxu0 %v3665
      %3979 = vmatpush1.bf16.msra.mxu0 %v3664
      %3980 = vmatprep.subr.bf16.mxu0 %v3661
      %3981 = vmatpush1.bf16.msra.mxu0 %v3660
      %3982 = vmatprep.subr.bf16.mxu0 %v3657
      %3983 = vmatpush1.bf16.msra.mxu0 %v3656
      %3984 = vmatprep.subr.bf16.mxu0 %v3653
      %3985 = vmatpush1.bf16.msra.mxu0 %v3652
      %3986 = vmatprep.subr.bf16.mxu0 %v3649
      %3987 = vmatpush1.bf16.msra.mxu0 %v3648
      %3988 = vmatprep.subr.bf16.mxu0 %v3645
      %3989 = vmatpush1.bf16.msra.mxu0 %v3644
      %3990 = vmatprep.subr.bf16.mxu0 %v3641
      %3991 = vmatpush1.bf16.msra.mxu0 %v3640
      %3992 = vmatprep.subr.bf16.mxu0 %v3701
      %3993 = vmatpush2.bf16.msra.mxu0 %v3700
      %3994 = vmatprep.subr.bf16.mxu0 %v3697
      %3995 = vmatpush2.bf16.msra.mxu0 %v3696
      %3996 = vmatprep.subr.bf16.mxu0 %v3693
      %3997 = vmatpush2.bf16.msra.mxu0 %v3692
      %3998 = vmatprep.subr.bf16.mxu0 %v3689
      %3999 = vmatpush2.bf16.msra.mxu0 %v3688
      %4000 = vmatprep.subr.bf16.mxu0 %v3685
      %4001 = vmatpush2.bf16.msra.mxu0 %v3684
      %4002 = vmatprep.subr.bf16.mxu0 %v3681
      %4003 = vmatpush2.bf16.msra.mxu0 %v3680
      %4004 = vmatprep.subr.bf16.mxu0 %v3677
      %4005 = vmatpush2.bf16.msra.mxu0 %v3676
      %4006 = vmatprep.subr.bf16.mxu0 %v3673
      %4007 = vmatpush2.bf16.msra.mxu0 %v3672
      %4008 = vmatprep.mubr.bf16.mxu0 %v3101
      %4009 = vmatmul.mubr.bf16.gmra.mxu0 %v3100
      %v4010 = vpop.f32.mrf.mxu0
      %v4011 = vadd.f32 %v3245, %v4010
      %v4012 = vpop.f32.mrf.mxu0
      %v4013 = vadd.f32 %v3249, %v4012
      %v4014 = vpop.f32.mrf.mxu0
      %v4015 = vpop.f32.mrf.mxu0
      %4016 = vdwg.mxu0
      %4017 = vmatprep.subr.bf16.mxu0 %v3733
      %4018 = vmatpush1.bf16.msra.mxu0 %v3732
      %4019 = vmatprep.subr.bf16.mxu0 %v3729
      %4020 = vmatpush1.bf16.msra.mxu0 %v3728
      %4021 = vmatprep.subr.bf16.mxu0 %v3725
      %4022 = vmatpush1.bf16.msra.mxu0 %v3724
      %4023 = vmatprep.subr.bf16.mxu0 %v3721
      %4024 = vmatpush1.bf16.msra.mxu0 %v3720
      %4025 = vmatprep.subr.bf16.mxu0 %v3717
      %4026 = vmatpush1.bf16.msra.mxu0 %v3716
      %4027 = vmatprep.subr.bf16.mxu0 %v3713
      %4028 = vmatpush1.bf16.msra.mxu0 %v3712
      %4029 = vmatprep.subr.bf16.mxu0 %v3709
      %4030 = vmatpush1.bf16.msra.mxu0 %v3708
      %4031 = vmatprep.subr.bf16.mxu0 %v3705
      %4032 = vmatpush1.bf16.msra.mxu0 %v3704
      %4033 = vmatprep.subr.bf16.mxu0 %v3765
      %4034 = vmatpush2.bf16.msra.mxu0 %v3764
      %4035 = vmatprep.subr.bf16.mxu0 %v3761
      %4036 = vmatpush2.bf16.msra.mxu0 %v3760
      %4037 = vmatprep.subr.bf16.mxu0 %v3757
      %4038 = vmatpush2.bf16.msra.mxu0 %v3756
      %4039 = vmatprep.subr.bf16.mxu0 %v3753
      %4040 = vmatpush2.bf16.msra.mxu0 %v3752
      %4041 = vmatprep.subr.bf16.mxu0 %v3749
      %4042 = vmatpush2.bf16.msra.mxu0 %v3748
      %4043 = vmatprep.subr.bf16.mxu0 %v3745
      %4044 = vmatpush2.bf16.msra.mxu0 %v3744
      %4045 = vmatprep.subr.bf16.mxu0 %v3741
      %4046 = vmatpush2.bf16.msra.mxu0 %v3740
      %4047 = vmatprep.subr.bf16.mxu0 %v3737
      %4048 = vmatpush2.bf16.msra.mxu0 %v3736
      %4049 = vmatprep.mubr.bf16.mxu0 %v3103
      %4050 = vmatmul.mubr.bf16.gmra.mxu0 %v3102
      %v4051 = vpop.f32.mrf.mxu0
      %v4052 = vadd.f32 %v4011, %v4051
      %v4053 = vpop.f32.mrf.mxu0
      %v4054 = vadd.f32 %v4013, %v4053
      %v4055 = vpop.f32.mrf.mxu0
      %v4056 = vpop.f32.mrf.mxu0
      %4057 = vdwg.mxu0
      %v4062 = vcombine.low %v3970, %v3972
      %v4063 = vcombine.low %v4052, %v4054
      %4066 = vst [vmem:[#allocation15] sm:$0xff] %v4062
      %4067 = vst [vmem:[#allocation15 + $0x8] sm:$0xff] %v4063
    $region73: #{tpu_custom_call.1} parent=1 // pred_fallthru
      _
    // Predicated region
    $region74: #{tpu_custom_call.1} parent=1 // pred_check
      _
    $region75: #{tpu_custom_call.1} parent=1 // pred_check_branch
      %4069 = sbr.rel (0) target = $region77
    $region76: #{tpu_custom_call.1} parent=1 // pred_region
      %s4071 = ssub.s32 256, 256
      %4072 = vsyncadd [#allocation5], %s4071
      %s4074 = sshll.u32 [#allocation15], 4
      %s4075 = int_to_ptr.vmem [resolvable:$true] %s4074
      %4077 = dma.vmem_to_hbm [thread:$0]  %s4075, 256, %s10, [#allocation5]
    $region77: #{tpu_custom_call.1} parent=1 // pred_fallthru
      _
    // Predicated region
    $region78: #{tpu_custom_call.1} parent=1 // pred_check
      _
    $region79: #{tpu_custom_call.1} parent=1 // pred_check_branch
      %4079 = sbr.rel (0) target = $region81
    $region80: #{tpu_custom_call.1} parent=1 // pred_region
      %4080 = dma.done [#allocation5], 256
    $region81: #{tpu_custom_call.1} parent=1 // pred_fallthru
      _
    %4081 = vsyncpa [#allocation4], 1
    %4082 = vsyncpa [#allocation7], 1
    %4083 = vsyncpa [#allocation10], 1
    %4084 = vsyncpa [#allocation13], 1
    %4085 = vsyncpa [#allocation5], 1

</llo_original>
